<compile_context>
chip_gen: v7x
topology: tpu7x:2x2x1
jax: 0.10.0
libtpu: 0.0.40
codegen_flags: <defaults>
</compile_context>

<pallas_src>
import functools

import jax
import jax.numpy as jnp
from jax import lax
from jax.experimental import pallas as pl
from jax.experimental.pallas import tpu as pltpu


def _sigmoid(x):
    # Exact rewrite: sigmoid(x) = 0.5 * (tanh(x/2) + 1)  — one EUP push instead of exp+divide.
    return 0.5 * jnp.tanh(0.5 * x) + 0.5


def _bilstm_kernel(nvb_ref, g_ref, len_ref, w_hh_ref, out_ref,
                   hf_sc, cf_sc, hr_sc, cr_sc, *, hidden, tt):
    """One time-block of the fused bidirectional LSTM recurrence.

    nvb_ref:  (1,)         int32  SMEM  number of time blocks containing any valid step
    g_ref:    (tt, Bp, 8H) bf16   VMEM  [x @ W_ih_f + b_f | x_rev @ W_ih_r + b_r]
    len_ref:  (Bp, 1)      int32  VMEM  per-row valid length
    w_hh_ref: (2, H, 4H)   f32    VMEM  recurrent weights (forward, reverse)
    out_ref:  (2, Bp, H)   f32          final hidden state per direction
    *_sc:     (Bp, H)      f32    VMEM  h/c state, resident across the time grid
    """
    H = hidden
    tb = pl.program_id(0)

    @pl.when(tb == 0)
    def _init():
        for ref in (hf_sc, cf_sc, hr_sc, cr_sc):
            ref[...] = jnp.zeros_like(ref)

    @pl.when(tb < nvb_ref[0])
    def _compute():
        w_f = w_hh_ref[0]                                    # (H, 4H) f32
        w_r = w_hh_ref[1]
        lens = len_ref[...]                                  # (Bp, 1) int32
        t0 = tb * tt

        def one_dir(g, h, c, w, m):
            gates = g + jnp.dot(h, w, preferred_element_type=jnp.float32)
            # PyTorch gate order: i, f, g, o.  i/f share one transcendental call.
            sif = _sigmoid(gates[:, 0 * H:2 * H])
            i = sif[:, :H]
            f = sif[:, H:]
            gg = jnp.tanh(gates[:, 2 * H:3 * H])
            o = _sigmoid(gates[:, 3 * H:4 * H])
            c_new = f * c + i * gg
            h_new = o * jnp.tanh(c_new)
            # Masked update (packed-sequence semantics): keep old state on padded steps.
            h = h + m * (h_new - h)
            c = c + m * (c_new - c)
            return h, c

        def step(s, carry):
            hf, cf, hr, cr = carry                           # (Bp, H) f32 each
            g = g_ref[s].astype(jnp.float32)                 # (Bp, 8H)
            m = (t0 + s < lens).astype(jnp.float32)          # (Bp, 1)
            # Two independent chains interleaved in one step -> latency hiding on 1 TC.
            hf, cf = one_dir(g[:, :4 * H], hf, cf, w_f, m)
            hr, cr = one_dir(g[:, 4 * H:], hr, cr, w_r, m)
            return hf, cf, hr, cr

        hf, cf, hr, cr = lax.fori_loop(
            0, tt, step,
            (hf_sc[...], cf_sc[...], hr_sc[...], cr_sc[...]),
            unroll=min(tt, 8))
        hf_sc[...] = hf
        cf_sc[...] = cf
        hr_sc[...] = hr
        cr_sc[...] = cr

    @pl.when(tb == pl.num_programs(0) - 1)
    def _finalize():
        out_ref[0] = hf_sc[...]
        out_ref[1] = hr_sc[...]


@functools.partial(jax.jit, static_argnames=("hidden", "tt"))
def lstm_forward(text, text_len, params, hidden=128, tt=32):
    """Equivalent of LSTM.forward(text, text_len); returns sigmoid logits (B,)."""
    H = hidden
    emb = params["embedding"][text]                          # (B, T, E) f32 gather (glue)
    B, T, E = emb.shape

    tt = max(1, min(tt, T))                                  # static block of time steps
    b_pad = max(8, -(-B // 8) * 8)                           # batch to sublane multiple
    t_pad = -(-T // tt) * tt
    n_tb = t_pad // tt

    emb = jnp.pad(emb, ((0, b_pad - B), (0, t_pad - T), (0, 0)))
    lens = jnp.pad(text_len.astype(jnp.int32), (0, b_pad - B))      # padded rows -> len 0

    # Per-sequence time reversal for the backward direction (j -> len-1-j); junk past len
    # is masked in-kernel.  Both directions then share the valid prefix [0, len).
    j = jnp.arange(t_pad, dtype=jnp.int32)
    rev_idx = jnp.clip(lens[:, None] - 1 - j[None, :], 0, t_pad - 1)  # (Bp, Tp)
    emb_rev = jnp.take_along_axis(emb, rev_idx[:, :, None], axis=1)   # (Bp, Tp, E)

    # Hoisted input projection (no sequential dependency): f32 matmuls (bf16xbf16->f32
    # dots are what broke the sandbox), bias folded in, stored time-major; bf16 storage
    # to halve the DMA bytes into the serial kernel.
    g_f = jnp.einsum("bte,eg->tbg", emb, params["w_ih_f"]) + params["b_f"]
    g_r = jnp.einsum("bte,eg->tbg", emb_rev, params["w_ih_r"]) + params["b_r"]
    gates = jnp.concatenate([g_f, g_r], axis=-1).astype(jnp.bfloat16)  # (Tp, Bp, 8H)

    lens2d = lens[:, None]                                    # (Bp, 1) int32
    w_hh = jnp.stack([params["w_hh_f"], params["w_hh_r"]])    # (2, H, 4H) f32

    # Number of time blocks with at least one valid step (scalar-prefetched to SMEM).
    max_len = jnp.max(lens)
    nvb = jnp.maximum((max_len + tt - 1) // tt, 1).astype(jnp.int32).reshape(1)

    kernel = functools.partial(_bilstm_kernel, hidden=H, tt=tt)

    h_last = pl.pallas_call(
        kernel,
        out_shape=jax.ShapeDtypeStruct((2, b_pad, H), jnp.float32),
        grid_spec=pltpu.PrefetchScalarGridSpec(
            num_scalar_prefetch=1,
            grid=(n_tb,),
            in_specs=[
                # Gate pre-activations: clamp block index so trailing padded blocks re-use
                # the last valid block (block index unchanged -> no fresh DMA).
                pl.BlockSpec((tt, b_pad, 8 * H),
                             lambda t, nb: (jnp.minimum(t, nb[0] - 1), 0, 0)),
                pl.BlockSpec((b_pad, 1), lambda t, nb: (0, 0)),              # lengths
                pl.BlockSpec((2, H, 4 * H), lambda t, nb: (0, 0, 0)),        # W_hh both dirs
            ],
            out_specs=pl.BlockSpec((2, b_pad, H), lambda t, nb: (0, 0, 0)),
            scratch_shapes=[pltpu.VMEM((b_pad, H), jnp.float32)] * 4,        # h_f,c_f,h_r,c_r
        ),
        compiler_params=pltpu.CompilerParams(
            dimension_semantics=("arbitrary",),              # time carries the recurrence
            vmem_limit_bytes=32 * 1024 * 1024,
        ),
    )(nvb, gates, lens2d, w_hh)

    # TODO(synk): nn.Dropout(p=0.5) is eval-mode identity here (training dropout is stochastic).
    feat = jnp.concatenate([h_last[0, :B], h_last[1, :B]], axis=1)   # (B, 2H)
    logit = feat @ params["fc_w"] + params["fc_b"]                   # (B, 1)
    return jax.nn.sigmoid(logit)[:, 0]                               # torch.squeeze(., 1)


def init_params(key, vocab_size=50, emb_dim=300, hidden=128):
    ks = jax.random.split(key, 9)
    s = 1.0 / jnp.sqrt(jnp.float32(hidden))

    def u(k, shape):
        return jax.random.uniform(k, shape, jnp.float32, -s, s)

    return {
        "embedding": jax.random.normal(ks[0], (vocab_size, emb_dim), jnp.float32),
        # stored transposed vs PyTorch ((4H,E) -> (E,4H)); b = b_ih + b_hh folded; gate order i,f,g,o
        "w_ih_f": u(ks[1], (emb_dim, 4 * hidden)),
        "w_hh_f": u(ks[2], (hidden, 4 * hidden)),
        "b_f":    u(ks[3], (1, 4 * hidden)),
        "w_ih_r": u(ks[4], (emb_dim, 4 * hidden)),
        "w_hh_r": u(ks[5], (hidden, 4 * hidden)),
        "b_r":    u(ks[6], (1, 4 * hidden)),
        "fc_w":   u(ks[7], (2 * hidden, 1)),
        "fc_b":   u(ks[8], (1, 1)),
    }


if __name__ == "__main__":
    key = jax.random.PRNGKey(0)
    pkey, tkey = jax.random.split(key)

    B, T, vocab, hidden = 2, 8, 50, 128
    params = init_params(pkey, vocab_size=vocab, emb_dim=300, hidden=hidden)
    text = jax.random.randint(tkey, (B, T), 0, vocab, dtype=jnp.int32)
    text_len = jnp.array([8, 5], dtype=jnp.int32)   # variable lengths (packed-seq semantics)

    out = lstm_forward(text, text_len, params, hidden=hidden)
    jax.block_until_ready(out)
    assert out.shape == (B,) and out.dtype == jnp.float32
    assert bool(jnp.all(jnp.isfinite(out)))
    print("KERNEL_OK")
</pallas_src>

<mosaic_0001>
module attributes {stable_mosaic.version = 11 : i64} {
  func.func @_bilstm_kernel(%arg0: i32, %arg1: memref<1xi32, #tpu.memory_space<smem>>, %arg2: memref<8x8x1024xbf16, #tpu.memory_space<vmem>>, %arg3: memref<8x1xi32, #tpu.memory_space<vmem>>, %arg4: memref<2x128x512xf32, #tpu.memory_space<vmem>>, %arg5: memref<2x8x128xf32, #tpu.memory_space<vmem>>, %arg6: memref<8x128xf32, #tpu.memory_space<vmem>>, %arg7: memref<8x128xf32, #tpu.memory_space<vmem>>, %arg8: memref<8x128xf32, #tpu.memory_space<vmem>>, %arg9: memref<8x128xf32, #tpu.memory_space<vmem>>) attributes {dimension_semantics = [#tpu.dimension_semantics<arbitrary>], iteration_bounds = array<i64: 1>, scalar_prefetch = 1 : i64, scratch_operands = 4 : i64, tpu.core_type = #tpu.core_type<tc>, window_params = [{transform_indices = @transform_0, window_bounds = array<i64: 8, 8, 1024>}, {pipeline_mode = #tpu.pipeline_mode<synchronous>, transform_indices = @transform_1, window_bounds = array<i64: 8, 1>}, {pipeline_mode = #tpu.pipeline_mode<synchronous>, transform_indices = @transform_2, window_bounds = array<i64: 2, 128, 512>}, {pipeline_mode = #tpu.pipeline_mode<synchronous>, transform_indices = @transform_3, window_bounds = array<i64: 2, 8, 128>}]} {
    %c0_i32 = arith.constant 0 : i32
    %0 = arith.cmpi eq, %arg0, %c0_i32 : i32
    %1 = arith.extui %0 : i1 to i32
    %c0_i32_0 = arith.constant 0 : i32
    %2 = arith.cmpi ne, %1, %c0_i32_0 : i32
    scf.if %2 {
      %cst = arith.constant 0.000000e+00 : f32
      %10 = vector.broadcast %cst : f32 to vector<8x128xf32>
      %c0_4 = arith.constant 0 : index
      %c0_5 = arith.constant 0 : index
      %11 = vector.load %arg6[%c0_4, %c0_5] : memref<8x128xf32, #tpu.memory_space<vmem>>, vector<8x128xf32>
      tpu.vector_store %arg6[%c0_4, %c0_5], %10 {strides = array<i32>} : memref<8x128xf32, #tpu.memory_space<vmem>>, vector<8x128xf32>,
      %cst_6 = arith.constant 0.000000e+00 : f32
      %12 = vector.broadcast %cst_6 : f32 to vector<8x128xf32>
      %c0_7 = arith.constant 0 : index
      %c0_8 = arith.constant 0 : index
      %13 = vector.load %arg7[%c0_7, %c0_8] : memref<8x128xf32, #tpu.memory_space<vmem>>, vector<8x128xf32>
      tpu.vector_store %arg7[%c0_7, %c0_8], %12 {strides = array<i32>} : memref<8x128xf32, #tpu.memory_space<vmem>>, vector<8x128xf32>,
      %cst_9 = arith.constant 0.000000e+00 : f32
      %14 = vector.broadcast %cst_9 : f32 to vector<8x128xf32>
      %c0_10 = arith.constant 0 : index
      %c0_11 = arith.constant 0 : index
      %15 = vector.load %arg8[%c0_10, %c0_11] : memref<8x128xf32, #tpu.memory_space<vmem>>, vector<8x128xf32>
      tpu.vector_store %arg8[%c0_10, %c0_11], %14 {strides = array<i32>} : memref<8x128xf32, #tpu.memory_space<vmem>>, vector<8x128xf32>,
      %cst_12 = arith.constant 0.000000e+00 : f32
      %16 = vector.broadcast %cst_12 : f32 to vector<8x128xf32>
      %c0_13 = arith.constant 0 : index
      %c0_14 = arith.constant 0 : index
      %17 = vector.load %arg9[%c0_13, %c0_14] : memref<8x128xf32, #tpu.memory_space<vmem>>, vector<8x128xf32>
      tpu.vector_store %arg9[%c0_13, %c0_14], %16 {strides = array<i32>} : memref<8x128xf32, #tpu.memory_space<vmem>>, vector<8x128xf32>,
    } else {
    }
    %c0 = arith.constant 0 : index
    %3 = memref.load %arg1[%c0] : memref<1xi32, #tpu.memory_space<smem>>
    %4 = arith.cmpi slt, %arg0, %3 : i32
    %5 = arith.extui %4 : i1 to i32
    %c0_i32_1 = arith.constant 0 : i32
    %6 = arith.cmpi ne, %5, %c0_i32_1 : i32
    scf.if %6 {
      %c0_4 = arith.constant 0 : index
      %c0_5 = arith.constant 0 : index
      %c0_6 = arith.constant 0 : index
      %10 = vector.load %arg4[%c0_4, %c0_5, %c0_6] : memref<2x128x512xf32, #tpu.memory_space<vmem>>, vector<1x128x512xf32>
      %11 = vector.shape_cast %10 : vector<1x128x512xf32> to vector<128x512xf32>
      %c1 = arith.constant 1 : index
      %c0_7 = arith.constant 0 : index
      %c0_8 = arith.constant 0 : index
      %12 = vector.load %arg4[%c1, %c0_7, %c0_8] : memref<2x128x512xf32, #tpu.memory_space<vmem>>, vector<1x128x512xf32>
      %13 = vector.shape_cast %12 : vector<1x128x512xf32> to vector<128x512xf32>
      %c0_9 = arith.constant 0 : index
      %c0_10 = arith.constant 0 : index
      %14 = vector.load %arg3[%c0_9, %c0_10] : memref<8x1xi32, #tpu.memory_space<vmem>>, vector<8x1xi32>
      %c8_i32 = arith.constant 8 : i32
      %15 = arith.muli %arg0, %c8_i32 : i32
      %c0_11 = arith.constant 0 : index
      %c0_12 = arith.constant 0 : index
      %16 = vector.load %arg6[%c0_11, %c0_12] : memref<8x128xf32, #tpu.memory_space<vmem>>, vector<8x128xf32>
      %c0_13 = arith.constant 0 : index
      %c0_14 = arith.constant 0 : index
      %17 = vector.load %arg7[%c0_13, %c0_14] : memref<8x128xf32, #tpu.memory_space<vmem>>, vector<8x128xf32>
      %c0_15 = arith.constant 0 : index
      %c0_16 = arith.constant 0 : index
      %18 = vector.load %arg8[%c0_15, %c0_16] : memref<8x128xf32, #tpu.memory_space<vmem>>, vector<8x128xf32>
      %c0_17 = arith.constant 0 : index
      %c0_18 = arith.constant 0 : index
      %19 = vector.load %arg9[%c0_17, %c0_18] : memref<8x128xf32, #tpu.memory_space<vmem>>, vector<8x128xf32>
      %c0_i32_19 = arith.constant 0 : i32
      %20 = arith.index_cast %c0_i32_19 : i32 to index
      %c0_20 = arith.constant 0 : index
      %c0_21 = arith.constant 0 : index
      %21 = vector.load %arg2[%20, %c0_20, %c0_21] : memref<8x8x1024xbf16, #tpu.memory_space<vmem>>, vector<1x8x1024xbf16>
      %22 = vector.shape_cast %21 : vector<1x8x1024xbf16> to vector<8x1024xbf16>
      %23 = arith.extf %22 : vector<8x1024xbf16> to vector<8x1024xf32>
      %24 = arith.addi %15, %c0_i32_19 : i32
      %25 = vector.broadcast %24 : i32 to vector<8x1xi32>
      %26 = arith.cmpi slt, %25, %14 : vector<8x1xi32>
      %27 = arith.extui %26 : vector<8x1xi1> to vector<8x1xi32>
      %28 = arith.sitofp %27 : vector<8x1xi32> to vector<8x1xf32>
      %29 = vector.extract_strided_slice %23 {offsets = [0, 0], sizes = [8, 512], strides = [1, 1]} : vector<8x1024xf32> to vector<8x512xf32>
      %cst = arith.constant dense<0.000000e+00> : vector<8x512xf32>
      %30 = tpu.matmul %16, %11, %cst {dimension_numbers = #tpu.dot_dimension_numbers<[1], [0], [0], [1], [0, 0, 1, 1], [], []>} : vector<8x128xf32>, vector<128x512xf32>, vector<8x512xf32> -> vector<8x512xf32>
      %31 = arith.addf %29, %30 : vector<8x512xf32>
      %32 = vector.extract_strided_slice %31 {offsets = [0, 0], sizes = [8, 256], strides = [1, 1]} : vector<8x512xf32> to vector<8x256xf32>
      %cst_22 = arith.constant 5.000000e-01 : f32
      %33 = vector.broadcast %cst_22 : f32 to vector<8x256xf32>
      %34 = arith.mulf %33, %32 : vector<8x256xf32>
      %35 = math.tanh %34 : vector<8x256xf32>
      %cst_23 = arith.constant 5.000000e-01 : f32
      %36 = vector.broadcast %cst_23 : f32 to vector<8x256xf32>
      %37 = arith.mulf %36, %35 : vector<8x256xf32>
      %cst_24 = arith.constant 5.000000e-01 : f32
      %38 = vector.broadcast %cst_24 : f32 to vector<8x256xf32>
      %39 = arith.addf %37, %38 : vector<8x256xf32>
      %40 = vector.extract_strided_slice %39 {offsets = [0, 0], sizes = [8, 128], strides = [1, 1]} : vector<8x256xf32> to vector<8x128xf32>
      %41 = vector.extract_strided_slice %39 {offsets = [0, 128], sizes = [8, 128], strides = [1, 1]} : vector<8x256xf32> to vector<8x128xf32>
      %42 = vector.extract_strided_slice %31 {offsets = [0, 256], sizes = [8, 128], strides = [1, 1]} : vector<8x512xf32> to vector<8x128xf32>
      %43 = math.tanh %42 : vector<8x128xf32>
      %44 = vector.extract_strided_slice %31 {offsets = [0, 384], sizes = [8, 128], strides = [1, 1]} : vector<8x512xf32> to vector<8x128xf32>
      %cst_25 = arith.constant 5.000000e-01 : f32
      %45 = vector.broadcast %cst_25 : f32 to vector<8x128xf32>
      %46 = arith.mulf %45, %44 : vector<8x128xf32>
      %47 = math.tanh %46 : vector<8x128xf32>
      %cst_26 = arith.constant 5.000000e-01 : f32
      %48 = vector.broadcast %cst_26 : f32 to vector<8x128xf32>
      %49 = arith.mulf %48, %47 : vector<8x128xf32>
      %cst_27 = arith.constant 5.000000e-01 : f32
      %50 = vector.broadcast %cst_27 : f32 to vector<8x128xf32>
      %51 = arith.addf %49, %50 : vector<8x128xf32>
      %52 = arith.mulf %41, %17 : vector<8x128xf32>
      %53 = arith.mulf %40, %43 : vector<8x128xf32>
      %54 = arith.addf %52, %53 : vector<8x128xf32>
      %55 = math.tanh %54 : vector<8x128xf32>
      %56 = arith.mulf %51, %55 : vector<8x128xf32>
      %57 = arith.subf %56, %16 : vector<8x128xf32>
      %58 = vector.broadcast %28 : vector<8x1xf32> to vector<8x128xf32>
      %59 = arith.mulf %58, %57 : vector<8x128xf32>
      %60 = arith.addf %16, %59 : vector<8x128xf32>
      %61 = arith.subf %54, %17 : vector<8x128xf32>
      %62 = vector.broadcast %28 : vector<8x1xf32> to vector<8x128xf32>
      %63 = arith.mulf %62, %61 : vector<8x128xf32>
      %64 = arith.addf %17, %63 : vector<8x128xf32>
      %65 = vector.extract_strided_slice %23 {offsets = [0, 512], sizes = [8, 512], strides = [1, 1]} : vector<8x1024xf32> to vector<8x512xf32>
      %cst_28 = arith.constant dense<0.000000e+00> : vector<8x512xf32>
      %66 = tpu.matmul %18, %13, %cst_28 {dimension_numbers = #tpu.dot_dimension_numbers<[1], [0], [0], [1], [0, 0, 1, 1], [], []>} : vector<8x128xf32>, vector<128x512xf32>, vector<8x512xf32> -> vector<8x512xf32>
      %67 = arith.addf %65, %66 : vector<8x512xf32>
      %68 = vector.extract_strided_slice %67 {offsets = [0, 0], sizes = [8, 256], strides = [1, 1]} : vector<8x512xf32> to vector<8x256xf32>
      %cst_29 = arith.constant 5.000000e-01 : f32
      %69 = vector.broadcast %cst_29 : f32 to vector<8x256xf32>
      %70 = arith.mulf %69, %68 : vector<8x256xf32>
      %71 = math.tanh %70 : vector<8x256xf32>
      %cst_30 = arith.constant 5.000000e-01 : f32
      %72 = vector.broadcast %cst_30 : f32 to vector<8x256xf32>
      %73 = arith.mulf %72, %71 : vector<8x256xf32>
      %cst_31 = arith.constant 5.000000e-01 : f32
      %74 = vector.broadcast %cst_31 : f32 to vector<8x256xf32>
      %75 = arith.addf %73, %74 : vector<8x256xf32>
      %76 = vector.extract_strided_slice %75 {offsets = [0, 0], sizes = [8, 128], strides = [1, 1]} : vector<8x256xf32> to vector<8x128xf32>
      %77 = vector.extract_strided_slice %75 {offsets = [0, 128], sizes = [8, 128], strides = [1, 1]} : vector<8x256xf32> to vector<8x128xf32>
      %78 = vector.extract_strided_slice %67 {offsets = [0, 256], sizes = [8, 128], strides = [1, 1]} : vector<8x512xf32> to vector<8x128xf32>
      %79 = math.tanh %78 : vector<8x128xf32>
      %80 = vector.extract_strided_slice %67 {offsets = [0, 384], sizes = [8, 128], strides = [1, 1]} : vector<8x512xf32> to vector<8x128xf32>
      %cst_32 = arith.constant 5.000000e-01 : f32
      %81 = vector.broadcast %cst_32 : f32 to vector<8x128xf32>
      %82 = arith.mulf %81, %80 : vector<8x128xf32>
      %83 = math.tanh %82 : vector<8x128xf32>
      %cst_33 = arith.constant 5.000000e-01 : f32
      %84 = vector.broadcast %cst_33 : f32 to vector<8x128xf32>
      %85 = arith.mulf %84, %83 : vector<8x128xf32>
      %cst_34 = arith.constant 5.000000e-01 : f32
      %86 = vector.broadcast %cst_34 : f32 to vector<8x128xf32>
      %87 = arith.addf %85, %86 : vector<8x128xf32>
      %88 = arith.mulf %77, %19 : vector<8x128xf32>
      %89 = arith.mulf %76, %79 : vector<8x128xf32>
      %90 = arith.addf %88, %89 : vector<8x128xf32>
      %91 = math.tanh %90 : vector<8x128xf32>
      %92 = arith.mulf %87, %91 : vector<8x128xf32>
      %93 = arith.subf %92, %18 : vector<8x128xf32>
      %94 = vector.broadcast %28 : vector<8x1xf32> to vector<8x128xf32>
      %95 = arith.mulf %94, %93 : vector<8x128xf32>
      %96 = arith.addf %18, %95 : vector<8x128xf32>
      %97 = arith.subf %90, %19 : vector<8x128xf32>
      %98 = vector.broadcast %28 : vector<8x1xf32> to vector<8x128xf32>
      %99 = arith.mulf %98, %97 : vector<8x128xf32>
      %100 = arith.addf %19, %99 : vector<8x128xf32>
      %c1_i32 = arith.constant 1 : i32
      %101 = arith.index_cast %c1_i32 : i32 to index
      %c0_35 = arith.constant 0 : index
      %c0_36 = arith.constant 0 : index
      %102 = vector.load %arg2[%101, %c0_35, %c0_36] : memref<8x8x1024xbf16, #tpu.memory_space<vmem>>, vector<1x8x1024xbf16>
      %103 = vector.shape_cast %102 : vector<1x8x1024xbf16> to vector<8x1024xbf16>
      %104 = arith.extf %103 : vector<8x1024xbf16> to vector<8x1024xf32>
      %105 = arith.addi %15, %c1_i32 : i32
      %106 = vector.broadcast %105 : i32 to vector<8x1xi32>
      %107 = arith.cmpi slt, %106, %14 : vector<8x1xi32>
      %108 = arith.extui %107 : vector<8x1xi1> to vector<8x1xi32>
      %109 = arith.sitofp %108 : vector<8x1xi32> to vector<8x1xf32>
      %110 = vector.extract_strided_slice %104 {offsets = [0, 0], sizes = [8, 512], strides = [1, 1]} : vector<8x1024xf32> to vector<8x512xf32>
      %cst_37 = arith.constant dense<0.000000e+00> : vector<8x512xf32>
      %111 = tpu.matmul %60, %11, %cst_37 {dimension_numbers = #tpu.dot_dimension_numbers<[1], [0], [0], [1], [0, 0, 1, 1], [], []>} : vector<8x128xf32>, vector<128x512xf32>, vector<8x512xf32> -> vector<8x512xf32>
      %112 = arith.addf %110, %111 : vector<8x512xf32>
      %113 = vector.extract_strided_slice %112 {offsets = [0, 0], sizes = [8, 256], strides = [1, 1]} : vector<8x512xf32> to vector<8x256xf32>
      %cst_38 = arith.constant 5.000000e-01 : f32
      %114 = vector.broadcast %cst_38 : f32 to vector<8x256xf32>
      %115 = arith.mulf %114, %113 : vector<8x256xf32>
      %116 = math.tanh %115 : vector<8x256xf32>
      %cst_39 = arith.constant 5.000000e-01 : f32
      %117 = vector.broadcast %cst_39 : f32 to vector<8x256xf32>
      %118 = arith.mulf %117, %116 : vector<8x256xf32>
      %cst_40 = arith.constant 5.000000e-01 : f32
      %119 = vector.broadcast %cst_40 : f32 to vector<8x256xf32>
      %120 = arith.addf %118, %119 : vector<8x256xf32>
      %121 = vector.extract_strided_slice %120 {offsets = [0, 0], sizes = [8, 128], strides = [1, 1]} : vector<8x256xf32> to vector<8x128xf32>
      %122 = vector.extract_strided_slice %120 {offsets = [0, 128], sizes = [8, 128], strides = [1, 1]} : vector<8x256xf32> to vector<8x128xf32>
      %123 = vector.extract_strided_slice %112 {offsets = [0, 256], sizes = [8, 128], strides = [1, 1]} : vector<8x512xf32> to vector<8x128xf32>
      %124 = math.tanh %123 : vector<8x128xf32>
      %125 = vector.extract_strided_slice %112 {offsets = [0, 384], sizes = [8, 128], strides = [1, 1]} : vector<8x512xf32> to vector<8x128xf32>
      %cst_41 = arith.constant 5.000000e-01 : f32
      %126 = vector.broadcast %cst_41 : f32 to vector<8x128xf32>
      %127 = arith.mulf %126, %125 : vector<8x128xf32>
      %128 = math.tanh %127 : vector<8x128xf32>
      %cst_42 = arith.constant 5.000000e-01 : f32
      %129 = vector.broadcast %cst_42 : f32 to vector<8x128xf32>
      %130 = arith.mulf %129, %128 : vector<8x128xf32>
      %cst_43 = arith.constant 5.000000e-01 : f32
      %131 = vector.broadcast %cst_43 : f32 to vector<8x128xf32>
      %132 = arith.addf %130, %131 : vector<8x128xf32>
      %133 = arith.mulf %122, %64 : vector<8x128xf32>
      %134 = arith.mulf %121, %124 : vector<8x128xf32>
      %135 = arith.addf %133, %134 : vector<8x128xf32>
      %136 = math.tanh %135 : vector<8x128xf32>
      %137 = arith.mulf %132, %136 : vector<8x128xf32>
      %138 = arith.subf %137, %60 : vector<8x128xf32>
      %139 = vector.broadcast %109 : vector<8x1xf32> to vector<8x128xf32>
      %140 = arith.mulf %139, %138 : vector<8x128xf32>
      %141 = arith.addf %60, %140 : vector<8x128xf32>
      %142 = arith.subf %135, %64 : vector<8x128xf32>
      %143 = vector.broadcast %109 : vector<8x1xf32> to vector<8x128xf32>
      %144 = arith.mulf %143, %142 : vector<8x128xf32>
      %145 = arith.addf %64, %144 : vector<8x128xf32>
      %146 = vector.extract_strided_slice %104 {offsets = [0, 512], sizes = [8, 512], strides = [1, 1]} : vector<8x1024xf32> to vector<8x512xf32>
      %cst_44 = arith.constant dense<0.000000e+00> : vector<8x512xf32>
      %147 = tpu.matmul %96, %13, %cst_44 {dimension_numbers = #tpu.dot_dimension_numbers<[1], [0], [0], [1], [0, 0, 1, 1], [], []>} : vector<8x128xf32>, vector<128x512xf32>, vector<8x512xf32> -> vector<8x512xf32>
      %148 = arith.addf %146, %147 : vector<8x512xf32>
      %149 = vector.extract_strided_slice %148 {offsets = [0, 0], sizes = [8, 256], strides = [1, 1]} : vector<8x512xf32> to vector<8x256xf32>
      %cst_45 = arith.constant 5.000000e-01 : f32
      %150 = vector.broadcast %cst_45 : f32 to vector<8x256xf32>
      %151 = arith.mulf %150, %149 : vector<8x256xf32>
      %152 = math.tanh %151 : vector<8x256xf32>
      %cst_46 = arith.constant 5.000000e-01 : f32
      %153 = vector.broadcast %cst_46 : f32 to vector<8x256xf32>
      %154 = arith.mulf %153, %152 : vector<8x256xf32>
      %cst_47 = arith.constant 5.000000e-01 : f32
      %155 = vector.broadcast %cst_47 : f32 to vector<8x256xf32>
      %156 = arith.addf %154, %155 : vector<8x256xf32>
      %157 = vector.extract_strided_slice %156 {offsets = [0, 0], sizes = [8, 128], strides = [1, 1]} : vector<8x256xf32> to vector<8x128xf32>
      %158 = vector.extract_strided_slice %156 {offsets = [0, 128], sizes = [8, 128], strides = [1, 1]} : vector<8x256xf32> to vector<8x128xf32>
      %159 = vector.extract_strided_slice %148 {offsets = [0, 256], sizes = [8, 128], strides = [1, 1]} : vector<8x512xf32> to vector<8x128xf32>
      %160 = math.tanh %159 : vector<8x128xf32>
      %161 = vector.extract_strided_slice %148 {offsets = [0, 384], sizes = [8, 128], strides = [1, 1]} : vector<8x512xf32> to vector<8x128xf32>
      %cst_48 = arith.constant 5.000000e-01 : f32
      %162 = vector.broadcast %cst_48 : f32 to vector<8x128xf32>
      %163 = arith.mulf %162, %161 : vector<8x128xf32>
      %164 = math.tanh %163 : vector<8x128xf32>
      %cst_49 = arith.constant 5.000000e-01 : f32
      %165 = vector.broadcast %cst_49 : f32 to vector<8x128xf32>
      %166 = arith.mulf %165, %164 : vector<8x128xf32>
      %cst_50 = arith.constant 5.000000e-01 : f32
      %167 = vector.broadcast %cst_50 : f32 to vector<8x128xf32>
      %168 = arith.addf %166, %167 : vector<8x128xf32>
      %169 = arith.mulf %158, %100 : vector<8x128xf32>
      %170 = arith.mulf %157, %160 : vector<8x128xf32>
      %171 = arith.addf %169, %170 : vector<8x128xf32>
      %172 = math.tanh %171 : vector<8x128xf32>
      %173 = arith.mulf %168, %172 : vector<8x128xf32>
      %174 = arith.subf %173, %96 : vector<8x128xf32>
      %175 = vector.broadcast %109 : vector<8x1xf32> to vector<8x128xf32>
      %176 = arith.mulf %175, %174 : vector<8x128xf32>
      %177 = arith.addf %96, %176 : vector<8x128xf32>
      %178 = arith.subf %171, %100 : vector<8x128xf32>
      %179 = vector.broadcast %109 : vector<8x1xf32> to vector<8x128xf32>
      %180 = arith.mulf %179, %178 : vector<8x128xf32>
      %181 = arith.addf %100, %180 : vector<8x128xf32>
      %c2_i32 = arith.constant 2 : i32
      %182 = arith.index_cast %c2_i32 : i32 to index
      %c0_51 = arith.constant 0 : index
      %c0_52 = arith.constant 0 : index
      %183 = vector.load %arg2[%182, %c0_51, %c0_52] : memref<8x8x1024xbf16, #tpu.memory_space<vmem>>, vector<1x8x1024xbf16>
      %184 = vector.shape_cast %183 : vector<1x8x1024xbf16> to vector<8x1024xbf16>
      %185 = arith.extf %184 : vector<8x1024xbf16> to vector<8x1024xf32>
      %186 = arith.addi %15, %c2_i32 : i32
      %187 = vector.broadcast %186 : i32 to vector<8x1xi32>
      %188 = arith.cmpi slt, %187, %14 : vector<8x1xi32>
      %189 = arith.extui %188 : vector<8x1xi1> to vector<8x1xi32>
      %190 = arith.sitofp %189 : vector<8x1xi32> to vector<8x1xf32>
      %191 = vector.extract_strided_slice %185 {offsets = [0, 0], sizes = [8, 512], strides = [1, 1]} : vector<8x1024xf32> to vector<8x512xf32>
      %cst_53 = arith.constant dense<0.000000e+00> : vector<8x512xf32>
      %192 = tpu.matmul %141, %11, %cst_53 {dimension_numbers = #tpu.dot_dimension_numbers<[1], [0], [0], [1], [0, 0, 1, 1], [], []>} : vector<8x128xf32>, vector<128x512xf32>, vector<8x512xf32> -> vector<8x512xf32>
      %193 = arith.addf %191, %192 : vector<8x512xf32>
      %194 = vector.extract_strided_slice %193 {offsets = [0, 0], sizes = [8, 256], strides = [1, 1]} : vector<8x512xf32> to vector<8x256xf32>
      %cst_54 = arith.constant 5.000000e-01 : f32
      %195 = vector.broadcast %cst_54 : f32 to vector<8x256xf32>
      %196 = arith.mulf %195, %194 : vector<8x256xf32>
      %197 = math.tanh %196 : vector<8x256xf32>
      %cst_55 = arith.constant 5.000000e-01 : f32
      %198 = vector.broadcast %cst_55 : f32 to vector<8x256xf32>
      %199 = arith.mulf %198, %197 : vector<8x256xf32>
      %cst_56 = arith.constant 5.000000e-01 : f32
      %200 = vector.broadcast %cst_56 : f32 to vector<8x256xf32>
      %201 = arith.addf %199, %200 : vector<8x256xf32>
      %202 = vector.extract_strided_slice %201 {offsets = [0, 0], sizes = [8, 128], strides = [1, 1]} : vector<8x256xf32> to vector<8x128xf32>
      %203 = vector.extract_strided_slice %201 {offsets = [0, 128], sizes = [8, 128], strides = [1, 1]} : vector<8x256xf32> to vector<8x128xf32>
      %204 = vector.extract_strided_slice %193 {offsets = [0, 256], sizes = [8, 128], strides = [1, 1]} : vector<8x512xf32> to vector<8x128xf32>
      %205 = math.tanh %204 : vector<8x128xf32>
      %206 = vector.extract_strided_slice %193 {offsets = [0, 384], sizes = [8, 128], strides = [1, 1]} : vector<8x512xf32> to vector<8x128xf32>
      %cst_57 = arith.constant 5.000000e-01 : f32
      %207 = vector.broadcast %cst_57 : f32 to vector<8x128xf32>
      %208 = arith.mulf %207, %206 : vector<8x128xf32>
      %209 = math.tanh %208 : vector<8x128xf32>
      %cst_58 = arith.constant 5.000000e-01 : f32
      %210 = vector.broadcast %cst_58 : f32 to vector<8x128xf32>
      %211 = arith.mulf %210, %209 : vector<8x128xf32>
      %cst_59 = arith.constant 5.000000e-01 : f32
      %212 = vector.broadcast %cst_59 : f32 to vector<8x128xf32>
      %213 = arith.addf %211, %212 : vector<8x128xf32>
      %214 = arith.mulf %203, %145 : vector<8x128xf32>
      %215 = arith.mulf %202, %205 : vector<8x128xf32>
      %216 = arith.addf %214, %215 : vector<8x128xf32>
      %217 = math.tanh %216 : vector<8x128xf32>
      %218 = arith.mulf %213, %217 : vector<8x128xf32>
      %219 = arith.subf %218, %141 : vector<8x128xf32>
      %220 = vector.broadcast %190 : vector<8x1xf32> to vector<8x128xf32>
      %221 = arith.mulf %220, %219 : vector<8x128xf32>
      %222 = arith.addf %141, %221 : vector<8x128xf32>
      %223 = arith.subf %216, %145 : vector<8x128xf32>
      %224 = vector.broadcast %190 : vector<8x1xf32> to vector<8x128xf32>
      %225 = arith.mulf %224, %223 : vector<8x128xf32>
      %226 = arith.addf %145, %225 : vector<8x128xf32>
      %227 = vector.extract_strided_slice %185 {offsets = [0, 512], sizes = [8, 512], strides = [1, 1]} : vector<8x1024xf32> to vector<8x512xf32>
      %cst_60 = arith.constant dense<0.000000e+00> : vector<8x512xf32>
      %228 = tpu.matmul %177, %13, %cst_60 {dimension_numbers = #tpu.dot_dimension_numbers<[1], [0], [0], [1], [0, 0, 1, 1], [], []>} : vector<8x128xf32>, vector<128x512xf32>, vector<8x512xf32> -> vector<8x512xf32>
      %229 = arith.addf %227, %228 : vector<8x512xf32>
      %230 = vector.extract_strided_slice %229 {offsets = [0, 0], sizes = [8, 256], strides = [1, 1]} : vector<8x512xf32> to vector<8x256xf32>
      %cst_61 = arith.constant 5.000000e-01 : f32
      %231 = vector.broadcast %cst_61 : f32 to vector<8x256xf32>
      %232 = arith.mulf %231, %230 : vector<8x256xf32>
      %233 = math.tanh %232 : vector<8x256xf32>
      %cst_62 = arith.constant 5.000000e-01 : f32
      %234 = vector.broadcast %cst_62 : f32 to vector<8x256xf32>
      %235 = arith.mulf %234, %233 : vector<8x256xf32>
      %cst_63 = arith.constant 5.000000e-01 : f32
      %236 = vector.broadcast %cst_63 : f32 to vector<8x256xf32>
      %237 = arith.addf %235, %236 : vector<8x256xf32>
      %238 = vector.extract_strided_slice %237 {offsets = [0, 0], sizes = [8, 128], strides = [1, 1]} : vector<8x256xf32> to vector<8x128xf32>
      %239 = vector.extract_strided_slice %237 {offsets = [0, 128], sizes = [8, 128], strides = [1, 1]} : vector<8x256xf32> to vector<8x128xf32>
      %240 = vector.extract_strided_slice %229 {offsets = [0, 256], sizes = [8, 128], strides = [1, 1]} : vector<8x512xf32> to vector<8x128xf32>
      %241 = math.tanh %240 : vector<8x128xf32>
      %242 = vector.extract_strided_slice %229 {offsets = [0, 384], sizes = [8, 128], strides = [1, 1]} : vector<8x512xf32> to vector<8x128xf32>
      %cst_64 = arith.constant 5.000000e-01 : f32
      %243 = vector.broadcast %cst_64 : f32 to vector<8x128xf32>
      %244 = arith.mulf %243, %242 : vector<8x128xf32>
      %245 = math.tanh %244 : vector<8x128xf32>
      %cst_65 = arith.constant 5.000000e-01 : f32
      %246 = vector.broadcast %cst_65 : f32 to vector<8x128xf32>
      %247 = arith.mulf %246, %245 : vector<8x128xf32>
      %cst_66 = arith.constant 5.000000e-01 : f32
      %248 = vector.broadcast %cst_66 : f32 to vector<8x128xf32>
      %249 = arith.addf %247, %248 : vector<8x128xf32>
      %250 = arith.mulf %239, %181 : vector<8x128xf32>
      %251 = arith.mulf %238, %241 : vector<8x128xf32>
      %252 = arith.addf %250, %251 : vector<8x128xf32>
      %253 = math.tanh %252 : vector<8x128xf32>
      %254 = arith.mulf %249, %253 : vector<8x128xf32>
      %255 = arith.subf %254, %177 : vector<8x128xf32>
      %256 = vector.broadcast %190 : vector<8x1xf32> to vector<8x128xf32>
      %257 = arith.mulf %256, %255 : vector<8x128xf32>
      %258 = arith.addf %177, %257 : vector<8x128xf32>
      %259 = arith.subf %252, %181 : vector<8x128xf32>
      %260 = vector.broadcast %190 : vector<8x1xf32> to vector<8x128xf32>
      %261 = arith.mulf %260, %259 : vector<8x128xf32>
      %262 = arith.addf %181, %261 : vector<8x128xf32>
      %c3_i32 = arith.constant 3 : i32
      %263 = arith.index_cast %c3_i32 : i32 to index
      %c0_67 = arith.constant 0 : index
      %c0_68 = arith.constant 0 : index
      %264 = vector.load %arg2[%263, %c0_67, %c0_68] : memref<8x8x1024xbf16, #tpu.memory_space<vmem>>, vector<1x8x1024xbf16>
      %265 = vector.shape_cast %264 : vector<1x8x1024xbf16> to vector<8x1024xbf16>
      %266 = arith.extf %265 : vector<8x1024xbf16> to vector<8x1024xf32>
      %267 = arith.addi %15, %c3_i32 : i32
      %268 = vector.broadcast %267 : i32 to vector<8x1xi32>
      %269 = arith.cmpi slt, %268, %14 : vector<8x1xi32>
      %270 = arith.extui %269 : vector<8x1xi1> to vector<8x1xi32>
      %271 = arith.sitofp %270 : vector<8x1xi32> to vector<8x1xf32>
      %272 = vector.extract_strided_slice %266 {offsets = [0, 0], sizes = [8, 512], strides = [1, 1]} : vector<8x1024xf32> to vector<8x512xf32>
      %cst_69 = arith.constant dense<0.000000e+00> : vector<8x512xf32>
      %273 = tpu.matmul %222, %11, %cst_69 {dimension_numbers = #tpu.dot_dimension_numbers<[1], [0], [0], [1], [0, 0, 1, 1], [], []>} : vector<8x128xf32>, vector<128x512xf32>, vector<8x512xf32> -> vector<8x512xf32>
      %274 = arith.addf %272, %273 : vector<8x512xf32>
      %275 = vector.extract_strided_slice %274 {offsets = [0, 0], sizes = [8, 256], strides = [1, 1]} : vector<8x512xf32> to vector<8x256xf32>
      %cst_70 = arith.constant 5.000000e-01 : f32
      %276 = vector.broadcast %cst_70 : f32 to vector<8x256xf32>
      %277 = arith.mulf %276, %275 : vector<8x256xf32>
      %278 = math.tanh %277 : vector<8x256xf32>
      %cst_71 = arith.constant 5.000000e-01 : f32
      %279 = vector.broadcast %cst_71 : f32 to vector<8x256xf32>
      %280 = arith.mulf %279, %278 : vector<8x256xf32>
      %cst_72 = arith.constant 5.000000e-01 : f32
      %281 = vector.broadcast %cst_72 : f32 to vector<8x256xf32>
      %282 = arith.addf %280, %281 : vector<8x256xf32>
      %283 = vector.extract_strided_slice %282 {offsets = [0, 0], sizes = [8, 128], strides = [1, 1]} : vector<8x256xf32> to vector<8x128xf32>
      %284 = vector.extract_strided_slice %282 {offsets = [0, 128], sizes = [8, 128], strides = [1, 1]} : vector<8x256xf32> to vector<8x128xf32>
      %285 = vector.extract_strided_slice %274 {offsets = [0, 256], sizes = [8, 128], strides = [1, 1]} : vector<8x512xf32> to vector<8x128xf32>
      %286 = math.tanh %285 : vector<8x128xf32>
      %287 = vector.extract_strided_slice %274 {offsets = [0, 384], sizes = [8, 128], strides = [1, 1]} : vector<8x512xf32> to vector<8x128xf32>
      %cst_73 = arith.constant 5.000000e-01 : f32
      %288 = vector.broadcast %cst_73 : f32 to vector<8x128xf32>
      %289 = arith.mulf %288, %287 : vector<8x128xf32>
      %290 = math.tanh %289 : vector<8x128xf32>
      %cst_74 = arith.constant 5.000000e-01 : f32
      %291 = vector.broadcast %cst_74 : f32 to vector<8x128xf32>
      %292 = arith.mulf %291, %290 : vector<8x128xf32>
      %cst_75 = arith.constant 5.000000e-01 : f32
      %293 = vector.broadcast %cst_75 : f32 to vector<8x128xf32>
      %294 = arith.addf %292, %293 : vector<8x128xf32>
      %295 = arith.mulf %284, %226 : vector<8x128xf32>
      %296 = arith.mulf %283, %286 : vector<8x128xf32>
      %297 = arith.addf %295, %296 : vector<8x128xf32>
      %298 = math.tanh %297 : vector<8x128xf32>
      %299 = arith.mulf %294, %298 : vector<8x128xf32>
      %300 = arith.subf %299, %222 : vector<8x128xf32>
      %301 = vector.broadcast %271 : vector<8x1xf32> to vector<8x128xf32>
      %302 = arith.mulf %301, %300 : vector<8x128xf32>
      %303 = arith.addf %222, %302 : vector<8x128xf32>
      %304 = arith.subf %297, %226 : vector<8x128xf32>
      %305 = vector.broadcast %271 : vector<8x1xf32> to vector<8x128xf32>
      %306 = arith.mulf %305, %304 : vector<8x128xf32>
      %307 = arith.addf %226, %306 : vector<8x128xf32>
      %308 = vector.extract_strided_slice %266 {offsets = [0, 512], sizes = [8, 512], strides = [1, 1]} : vector<8x1024xf32> to vector<8x512xf32>
      %cst_76 = arith.constant dense<0.000000e+00> : vector<8x512xf32>
      %309 = tpu.matmul %258, %13, %cst_76 {dimension_numbers = #tpu.dot_dimension_numbers<[1], [0], [0], [1], [0, 0, 1, 1], [], []>} : vector<8x128xf32>, vector<128x512xf32>, vector<8x512xf32> -> vector<8x512xf32>
      %310 = arith.addf %308, %309 : vector<8x512xf32>
      %311 = vector.extract_strided_slice %310 {offsets = [0, 0], sizes = [8, 256], strides = [1, 1]} : vector<8x512xf32> to vector<8x256xf32>
      %cst_77 = arith.constant 5.000000e-01 : f32
      %312 = vector.broadcast %cst_77 : f32 to vector<8x256xf32>
      %313 = arith.mulf %312, %311 : vector<8x256xf32>
      %314 = math.tanh %313 : vector<8x256xf32>
      %cst_78 = arith.constant 5.000000e-01 : f32
      %315 = vector.broadcast %cst_78 : f32 to vector<8x256xf32>
      %316 = arith.mulf %315, %314 : vector<8x256xf32>
      %cst_79 = arith.constant 5.000000e-01 : f32
      %317 = vector.broadcast %cst_79 : f32 to vector<8x256xf32>
      %318 = arith.addf %316, %317 : vector<8x256xf32>
      %319 = vector.extract_strided_slice %318 {offsets = [0, 0], sizes = [8, 128], strides = [1, 1]} : vector<8x256xf32> to vector<8x128xf32>
      %320 = vector.extract_strided_slice %318 {offsets = [0, 128], sizes = [8, 128], strides = [1, 1]} : vector<8x256xf32> to vector<8x128xf32>
      %321 = vector.extract_strided_slice %310 {offsets = [0, 256], sizes = [8, 128], strides = [1, 1]} : vector<8x512xf32> to vector<8x128xf32>
      %322 = math.tanh %321 : vector<8x128xf32>
      %323 = vector.extract_strided_slice %310 {offsets = [0, 384], sizes = [8, 128], strides = [1, 1]} : vector<8x512xf32> to vector<8x128xf32>
      %cst_80 = arith.constant 5.000000e-01 : f32
      %324 = vector.broadcast %cst_80 : f32 to vector<8x128xf32>
      %325 = arith.mulf %324, %323 : vector<8x128xf32>
      %326 = math.tanh %325 : vector<8x128xf32>
      %cst_81 = arith.constant 5.000000e-01 : f32
      %327 = vector.broadcast %cst_81 : f32 to vector<8x128xf32>
      %328 = arith.mulf %327, %326 : vector<8x128xf32>
      %cst_82 = arith.constant 5.000000e-01 : f32
      %329 = vector.broadcast %cst_82 : f32 to vector<8x128xf32>
      %330 = arith.addf %328, %329 : vector<8x128xf32>
      %331 = arith.mulf %320, %262 : vector<8x128xf32>
      %332 = arith.mulf %319, %322 : vector<8x128xf32>
      %333 = arith.addf %331, %332 : vector<8x128xf32>
      %334 = math.tanh %333 : vector<8x128xf32>
      %335 = arith.mulf %330, %334 : vector<8x128xf32>
      %336 = arith.subf %335, %258 : vector<8x128xf32>
      %337 = vector.broadcast %271 : vector<8x1xf32> to vector<8x128xf32>
      %338 = arith.mulf %337, %336 : vector<8x128xf32>
      %339 = arith.addf %258, %338 : vector<8x128xf32>
      %340 = arith.subf %333, %262 : vector<8x128xf32>
      %341 = vector.broadcast %271 : vector<8x1xf32> to vector<8x128xf32>
      %342 = arith.mulf %341, %340 : vector<8x128xf32>
      %343 = arith.addf %262, %342 : vector<8x128xf32>
      %c4_i32 = arith.constant 4 : i32
      %344 = arith.index_cast %c4_i32 : i32 to index
      %c0_83 = arith.constant 0 : index
      %c0_84 = arith.constant 0 : index
      %345 = vector.load %arg2[%344, %c0_83, %c0_84] : memref<8x8x1024xbf16, #tpu.memory_space<vmem>>, vector<1x8x1024xbf16>
      %346 = vector.shape_cast %345 : vector<1x8x1024xbf16> to vector<8x1024xbf16>
      %347 = arith.extf %346 : vector<8x1024xbf16> to vector<8x1024xf32>
      %348 = arith.addi %15, %c4_i32 : i32
      %349 = vector.broadcast %348 : i32 to vector<8x1xi32>
      %350 = arith.cmpi slt, %349, %14 : vector<8x1xi32>
      %351 = arith.extui %350 : vector<8x1xi1> to vector<8x1xi32>
      %352 = arith.sitofp %351 : vector<8x1xi32> to vector<8x1xf32>
      %353 = vector.extract_strided_slice %347 {offsets = [0, 0], sizes = [8, 512], strides = [1, 1]} : vector<8x1024xf32> to vector<8x512xf32>
      %cst_85 = arith.constant dense<0.000000e+00> : vector<8x512xf32>
      %354 = tpu.matmul %303, %11, %cst_85 {dimension_numbers = #tpu.dot_dimension_numbers<[1], [0], [0], [1], [0, 0, 1, 1], [], []>} : vector<8x128xf32>, vector<128x512xf32>, vector<8x512xf32> -> vector<8x512xf32>
      %355 = arith.addf %353, %354 : vector<8x512xf32>
      %356 = vector.extract_strided_slice %355 {offsets = [0, 0], sizes = [8, 256], strides = [1, 1]} : vector<8x512xf32> to vector<8x256xf32>
      %cst_86 = arith.constant 5.000000e-01 : f32
      %357 = vector.broadcast %cst_86 : f32 to vector<8x256xf32>
      %358 = arith.mulf %357, %356 : vector<8x256xf32>
      %359 = math.tanh %358 : vector<8x256xf32>
      %cst_87 = arith.constant 5.000000e-01 : f32
      %360 = vector.broadcast %cst_87 : f32 to vector<8x256xf32>
      %361 = arith.mulf %360, %359 : vector<8x256xf32>
      %cst_88 = arith.constant 5.000000e-01 : f32
      %362 = vector.broadcast %cst_88 : f32 to vector<8x256xf32>
      %363 = arith.addf %361, %362 : vector<8x256xf32>
      %364 = vector.extract_strided_slice %363 {offsets = [0, 0], sizes = [8, 128], strides = [1, 1]} : vector<8x256xf32> to vector<8x128xf32>
      %365 = vector.extract_strided_slice %363 {offsets = [0, 128], sizes = [8, 128], strides = [1, 1]} : vector<8x256xf32> to vector<8x128xf32>
      %366 = vector.extract_strided_slice %355 {offsets = [0, 256], sizes = [8, 128], strides = [1, 1]} : vector<8x512xf32> to vector<8x128xf32>
      %367 = math.tanh %366 : vector<8x128xf32>
      %368 = vector.extract_strided_slice %355 {offsets = [0, 384], sizes = [8, 128], strides = [1, 1]} : vector<8x512xf32> to vector<8x128xf32>
      %cst_89 = arith.constant 5.000000e-01 : f32
      %369 = vector.broadcast %cst_89 : f32 to vector<8x128xf32>
      %370 = arith.mulf %369, %368 : vector<8x128xf32>
      %371 = math.tanh %370 : vector<8x128xf32>
      %cst_90 = arith.constant 5.000000e-01 : f32
      %372 = vector.broadcast %cst_90 : f32 to vector<8x128xf32>
      %373 = arith.mulf %372, %371 : vector<8x128xf32>
      %cst_91 = arith.constant 5.000000e-01 : f32
      %374 = vector.broadcast %cst_91 : f32 to vector<8x128xf32>
      %375 = arith.addf %373, %374 : vector<8x128xf32>
      %376 = arith.mulf %365, %307 : vector<8x128xf32>
      %377 = arith.mulf %364, %367 : vector<8x128xf32>
      %378 = arith.addf %376, %377 : vector<8x128xf32>
      %379 = math.tanh %378 : vector<8x128xf32>
      %380 = arith.mulf %375, %379 : vector<8x128xf32>
      %381 = arith.subf %380, %303 : vector<8x128xf32>
      %382 = vector.broadcast %352 : vector<8x1xf32> to vector<8x128xf32>
      %383 = arith.mulf %382, %381 : vector<8x128xf32>
      %384 = arith.addf %303, %383 : vector<8x128xf32>
      %385 = arith.subf %378, %307 : vector<8x128xf32>
      %386 = vector.broadcast %352 : vector<8x1xf32> to vector<8x128xf32>
      %387 = arith.mulf %386, %385 : vector<8x128xf32>
      %388 = arith.addf %307, %387 : vector<8x128xf32>
      %389 = vector.extract_strided_slice %347 {offsets = [0, 512], sizes = [8, 512], strides = [1, 1]} : vector<8x1024xf32> to vector<8x512xf32>
      %cst_92 = arith.constant dense<0.000000e+00> : vector<8x512xf32>
      %390 = tpu.matmul %339, %13, %cst_92 {dimension_numbers = #tpu.dot_dimension_numbers<[1], [0], [0], [1], [0, 0, 1, 1], [], []>} : vector<8x128xf32>, vector<128x512xf32>, vector<8x512xf32> -> vector<8x512xf32>
      %391 = arith.addf %389, %390 : vector<8x512xf32>
      %392 = vector.extract_strided_slice %391 {offsets = [0, 0], sizes = [8, 256], strides = [1, 1]} : vector<8x512xf32> to vector<8x256xf32>
      %cst_93 = arith.constant 5.000000e-01 : f32
      %393 = vector.broadcast %cst_93 : f32 to vector<8x256xf32>
      %394 = arith.mulf %393, %392 : vector<8x256xf32>
      %395 = math.tanh %394 : vector<8x256xf32>
      %cst_94 = arith.constant 5.000000e-01 : f32
      %396 = vector.broadcast %cst_94 : f32 to vector<8x256xf32>
      %397 = arith.mulf %396, %395 : vector<8x256xf32>
      %cst_95 = arith.constant 5.000000e-01 : f32
      %398 = vector.broadcast %cst_95 : f32 to vector<8x256xf32>
      %399 = arith.addf %397, %398 : vector<8x256xf32>
      %400 = vector.extract_strided_slice %399 {offsets = [0, 0], sizes = [8, 128], strides = [1, 1]} : vector<8x256xf32> to vector<8x128xf32>
      %401 = vector.extract_strided_slice %399 {offsets = [0, 128], sizes = [8, 128], strides = [1, 1]} : vector<8x256xf32> to vector<8x128xf32>
      %402 = vector.extract_strided_slice %391 {offsets = [0, 256], sizes = [8, 128], strides = [1, 1]} : vector<8x512xf32> to vector<8x128xf32>
      %403 = math.tanh %402 : vector<8x128xf32>
      %404 = vector.extract_strided_slice %391 {offsets = [0, 384], sizes = [8, 128], strides = [1, 1]} : vector<8x512xf32> to vector<8x128xf32>
      %cst_96 = arith.constant 5.000000e-01 : f32
      %405 = vector.broadcast %cst_96 : f32 to vector<8x128xf32>
      %406 = arith.mulf %405, %404 : vector<8x128xf32>
      %407 = math.tanh %406 : vector<8x128xf32>
      %cst_97 = arith.constant 5.000000e-01 : f32
      %408 = vector.broadcast %cst_97 : f32 to vector<8x128xf32>
      %409 = arith.mulf %408, %407 : vector<8x128xf32>
      %cst_98 = arith.constant 5.000000e-01 : f32
      %410 = vector.broadcast %cst_98 : f32 to vector<8x128xf32>
      %411 = arith.addf %409, %410 : vector<8x128xf32>
      %412 = arith.mulf %401, %343 : vector<8x128xf32>
      %413 = arith.mulf %400, %403 : vector<8x128xf32>
      %414 = arith.addf %412, %413 : vector<8x128xf32>
      %415 = math.tanh %414 : vector<8x128xf32>
      %416 = arith.mulf %411, %415 : vector<8x128xf32>
      %417 = arith.subf %416, %339 : vector<8x128xf32>
      %418 = vector.broadcast %352 : vector<8x1xf32> to vector<8x128xf32>
      %419 = arith.mulf %418, %417 : vector<8x128xf32>
      %420 = arith.addf %339, %419 : vector<8x128xf32>
      %421 = arith.subf %414, %343 : vector<8x128xf32>
      %422 = vector.broadcast %352 : vector<8x1xf32> to vector<8x128xf32>
      %423 = arith.mulf %422, %421 : vector<8x128xf32>
      %424 = arith.addf %343, %423 : vector<8x128xf32>
      %c5_i32 = arith.constant 5 : i32
      %425 = arith.index_cast %c5_i32 : i32 to index
      %c0_99 = arith.constant 0 : index
      %c0_100 = arith.constant 0 : index
      %426 = vector.load %arg2[%425, %c0_99, %c0_100] : memref<8x8x1024xbf16, #tpu.memory_space<vmem>>, vector<1x8x1024xbf16>
      %427 = vector.shape_cast %426 : vector<1x8x1024xbf16> to vector<8x1024xbf16>
      %428 = arith.extf %427 : vector<8x1024xbf16> to vector<8x1024xf32>
      %429 = arith.addi %15, %c5_i32 : i32
      %430 = vector.broadcast %429 : i32 to vector<8x1xi32>
      %431 = arith.cmpi slt, %430, %14 : vector<8x1xi32>
      %432 = arith.extui %431 : vector<8x1xi1> to vector<8x1xi32>
      %433 = arith.sitofp %432 : vector<8x1xi32> to vector<8x1xf32>
      %434 = vector.extract_strided_slice %428 {offsets = [0, 0], sizes = [8, 512], strides = [1, 1]} : vector<8x1024xf32> to vector<8x512xf32>
      %cst_101 = arith.constant dense<0.000000e+00> : vector<8x512xf32>
      %435 = tpu.matmul %384, %11, %cst_101 {dimension_numbers = #tpu.dot_dimension_numbers<[1], [0], [0], [1], [0, 0, 1, 1], [], []>} : vector<8x128xf32>, vector<128x512xf32>, vector<8x512xf32> -> vector<8x512xf32>
      %436 = arith.addf %434, %435 : vector<8x512xf32>
      %437 = vector.extract_strided_slice %436 {offsets = [0, 0], sizes = [8, 256], strides = [1, 1]} : vector<8x512xf32> to vector<8x256xf32>
      %cst_102 = arith.constant 5.000000e-01 : f32
      %438 = vector.broadcast %cst_102 : f32 to vector<8x256xf32>
      %439 = arith.mulf %438, %437 : vector<8x256xf32>
      %440 = math.tanh %439 : vector<8x256xf32>
      %cst_103 = arith.constant 5.000000e-01 : f32
      %441 = vector.broadcast %cst_103 : f32 to vector<8x256xf32>
      %442 = arith.mulf %441, %440 : vector<8x256xf32>
      %cst_104 = arith.constant 5.000000e-01 : f32
      %443 = vector.broadcast %cst_104 : f32 to vector<8x256xf32>
      %444 = arith.addf %442, %443 : vector<8x256xf32>
      %445 = vector.extract_strided_slice %444 {offsets = [0, 0], sizes = [8, 128], strides = [1, 1]} : vector<8x256xf32> to vector<8x128xf32>
      %446 = vector.extract_strided_slice %444 {offsets = [0, 128], sizes = [8, 128], strides = [1, 1]} : vector<8x256xf32> to vector<8x128xf32>
      %447 = vector.extract_strided_slice %436 {offsets = [0, 256], sizes = [8, 128], strides = [1, 1]} : vector<8x512xf32> to vector<8x128xf32>
      %448 = math.tanh %447 : vector<8x128xf32>
      %449 = vector.extract_strided_slice %436 {offsets = [0, 384], sizes = [8, 128], strides = [1, 1]} : vector<8x512xf32> to vector<8x128xf32>
      %cst_105 = arith.constant 5.000000e-01 : f32
      %450 = vector.broadcast %cst_105 : f32 to vector<8x128xf32>
      %451 = arith.mulf %450, %449 : vector<8x128xf32>
      %452 = math.tanh %451 : vector<8x128xf32>
      %cst_106 = arith.constant 5.000000e-01 : f32
      %453 = vector.broadcast %cst_106 : f32 to vector<8x128xf32>
      %454 = arith.mulf %453, %452 : vector<8x128xf32>
      %cst_107 = arith.constant 5.000000e-01 : f32
      %455 = vector.broadcast %cst_107 : f32 to vector<8x128xf32>
      %456 = arith.addf %454, %455 : vector<8x128xf32>
      %457 = arith.mulf %446, %388 : vector<8x128xf32>
      %458 = arith.mulf %445, %448 : vector<8x128xf32>
      %459 = arith.addf %457, %458 : vector<8x128xf32>
      %460 = math.tanh %459 : vector<8x128xf32>
      %461 = arith.mulf %456, %460 : vector<8x128xf32>
      %462 = arith.subf %461, %384 : vector<8x128xf32>
      %463 = vector.broadcast %433 : vector<8x1xf32> to vector<8x128xf32>
      %464 = arith.mulf %463, %462 : vector<8x128xf32>
      %465 = arith.addf %384, %464 : vector<8x128xf32>
      %466 = arith.subf %459, %388 : vector<8x128xf32>
      %467 = vector.broadcast %433 : vector<8x1xf32> to vector<8x128xf32>
      %468 = arith.mulf %467, %466 : vector<8x128xf32>
      %469 = arith.addf %388, %468 : vector<8x128xf32>
      %470 = vector.extract_strided_slice %428 {offsets = [0, 512], sizes = [8, 512], strides = [1, 1]} : vector<8x1024xf32> to vector<8x512xf32>
      %cst_108 = arith.constant dense<0.000000e+00> : vector<8x512xf32>
      %471 = tpu.matmul %420, %13, %cst_108 {dimension_numbers = #tpu.dot_dimension_numbers<[1], [0], [0], [1], [0, 0, 1, 1], [], []>} : vector<8x128xf32>, vector<128x512xf32>, vector<8x512xf32> -> vector<8x512xf32>
      %472 = arith.addf %470, %471 : vector<8x512xf32>
      %473 = vector.extract_strided_slice %472 {offsets = [0, 0], sizes = [8, 256], strides = [1, 1]} : vector<8x512xf32> to vector<8x256xf32>
      %cst_109 = arith.constant 5.000000e-01 : f32
      %474 = vector.broadcast %cst_109 : f32 to vector<8x256xf32>
      %475 = arith.mulf %474, %473 : vector<8x256xf32>
      %476 = math.tanh %475 : vector<8x256xf32>
      %cst_110 = arith.constant 5.000000e-01 : f32
      %477 = vector.broadcast %cst_110 : f32 to vector<8x256xf32>
      %478 = arith.mulf %477, %476 : vector<8x256xf32>
      %cst_111 = arith.constant 5.000000e-01 : f32
      %479 = vector.broadcast %cst_111 : f32 to vector<8x256xf32>
      %480 = arith.addf %478, %479 : vector<8x256xf32>
      %481 = vector.extract_strided_slice %480 {offsets = [0, 0], sizes = [8, 128], strides = [1, 1]} : vector<8x256xf32> to vector<8x128xf32>
      %482 = vector.extract_strided_slice %480 {offsets = [0, 128], sizes = [8, 128], strides = [1, 1]} : vector<8x256xf32> to vector<8x128xf32>
      %483 = vector.extract_strided_slice %472 {offsets = [0, 256], sizes = [8, 128], strides = [1, 1]} : vector<8x512xf32> to vector<8x128xf32>
      %484 = math.tanh %483 : vector<8x128xf32>
      %485 = vector.extract_strided_slice %472 {offsets = [0, 384], sizes = [8, 128], strides = [1, 1]} : vector<8x512xf32> to vector<8x128xf32>
      %cst_112 = arith.constant 5.000000e-01 : f32
      %486 = vector.broadcast %cst_112 : f32 to vector<8x128xf32>
      %487 = arith.mulf %486, %485 : vector<8x128xf32>
      %488 = math.tanh %487 : vector<8x128xf32>
      %cst_113 = arith.constant 5.000000e-01 : f32
      %489 = vector.broadcast %cst_113 : f32 to vector<8x128xf32>
      %490 = arith.mulf %489, %488 : vector<8x128xf32>
      %cst_114 = arith.constant 5.000000e-01 : f32
      %491 = vector.broadcast %cst_114 : f32 to vector<8x128xf32>
      %492 = arith.addf %490, %491 : vector<8x128xf32>
      %493 = arith.mulf %482, %424 : vector<8x128xf32>
      %494 = arith.mulf %481, %484 : vector<8x128xf32>
      %495 = arith.addf %493, %494 : vector<8x128xf32>
      %496 = math.tanh %495 : vector<8x128xf32>
      %497 = arith.mulf %492, %496 : vector<8x128xf32>
      %498 = arith.subf %497, %420 : vector<8x128xf32>
      %499 = vector.broadcast %433 : vector<8x1xf32> to vector<8x128xf32>
      %500 = arith.mulf %499, %498 : vector<8x128xf32>
      %501 = arith.addf %420, %500 : vector<8x128xf32>
      %502 = arith.subf %495, %424 : vector<8x128xf32>
      %503 = vector.broadcast %433 : vector<8x1xf32> to vector<8x128xf32>
      %504 = arith.mulf %503, %502 : vector<8x128xf32>
      %505 = arith.addf %424, %504 : vector<8x128xf32>
      %c6_i32 = arith.constant 6 : i32
      %506 = arith.index_cast %c6_i32 : i32 to index
      %c0_115 = arith.constant 0 : index
      %c0_116 = arith.constant 0 : index
      %507 = vector.load %arg2[%506, %c0_115, %c0_116] : memref<8x8x1024xbf16, #tpu.memory_space<vmem>>, vector<1x8x1024xbf16>
      %508 = vector.shape_cast %507 : vector<1x8x1024xbf16> to vector<8x1024xbf16>
      %509 = arith.extf %508 : vector<8x1024xbf16> to vector<8x1024xf32>
      %510 = arith.addi %15, %c6_i32 : i32
      %511 = vector.broadcast %510 : i32 to vector<8x1xi32>
      %512 = arith.cmpi slt, %511, %14 : vector<8x1xi32>
      %513 = arith.extui %512 : vector<8x1xi1> to vector<8x1xi32>
      %514 = arith.sitofp %513 : vector<8x1xi32> to vector<8x1xf32>
      %515 = vector.extract_strided_slice %509 {offsets = [0, 0], sizes = [8, 512], strides = [1, 1]} : vector<8x1024xf32> to vector<8x512xf32>
      %cst_117 = arith.constant dense<0.000000e+00> : vector<8x512xf32>
      %516 = tpu.matmul %465, %11, %cst_117 {dimension_numbers = #tpu.dot_dimension_numbers<[1], [0], [0], [1], [0, 0, 1, 1], [], []>} : vector<8x128xf32>, vector<128x512xf32>, vector<8x512xf32> -> vector<8x512xf32>
      %517 = arith.addf %515, %516 : vector<8x512xf32>
      %518 = vector.extract_strided_slice %517 {offsets = [0, 0], sizes = [8, 256], strides = [1, 1]} : vector<8x512xf32> to vector<8x256xf32>
      %cst_118 = arith.constant 5.000000e-01 : f32
      %519 = vector.broadcast %cst_118 : f32 to vector<8x256xf32>
      %520 = arith.mulf %519, %518 : vector<8x256xf32>
      %521 = math.tanh %520 : vector<8x256xf32>
      %cst_119 = arith.constant 5.000000e-01 : f32
      %522 = vector.broadcast %cst_119 : f32 to vector<8x256xf32>
      %523 = arith.mulf %522, %521 : vector<8x256xf32>
      %cst_120 = arith.constant 5.000000e-01 : f32
      %524 = vector.broadcast %cst_120 : f32 to vector<8x256xf32>
      %525 = arith.addf %523, %524 : vector<8x256xf32>
      %526 = vector.extract_strided_slice %525 {offsets = [0, 0], sizes = [8, 128], strides = [1, 1]} : vector<8x256xf32> to vector<8x128xf32>
      %527 = vector.extract_strided_slice %525 {offsets = [0, 128], sizes = [8, 128], strides = [1, 1]} : vector<8x256xf32> to vector<8x128xf32>
      %528 = vector.extract_strided_slice %517 {offsets = [0, 256], sizes = [8, 128], strides = [1, 1]} : vector<8x512xf32> to vector<8x128xf32>
      %529 = math.tanh %528 : vector<8x128xf32>
      %530 = vector.extract_strided_slice %517 {offsets = [0, 384], sizes = [8, 128], strides = [1, 1]} : vector<8x512xf32> to vector<8x128xf32>
      %cst_121 = arith.constant 5.000000e-01 : f32
      %531 = vector.broadcast %cst_121 : f32 to vector<8x128xf32>
      %532 = arith.mulf %531, %530 : vector<8x128xf32>
      %533 = math.tanh %532 : vector<8x128xf32>
      %cst_122 = arith.constant 5.000000e-01 : f32
      %534 = vector.broadcast %cst_122 : f32 to vector<8x128xf32>
      %535 = arith.mulf %534, %533 : vector<8x128xf32>
      %cst_123 = arith.constant 5.000000e-01 : f32
      %536 = vector.broadcast %cst_123 : f32 to vector<8x128xf32>
      %537 = arith.addf %535, %536 : vector<8x128xf32>
      %538 = arith.mulf %527, %469 : vector<8x128xf32>
      %539 = arith.mulf %526, %529 : vector<8x128xf32>
      %540 = arith.addf %538, %539 : vector<8x128xf32>
      %541 = math.tanh %540 : vector<8x128xf32>
      %542 = arith.mulf %537, %541 : vector<8x128xf32>
      %543 = arith.subf %542, %465 : vector<8x128xf32>
      %544 = vector.broadcast %514 : vector<8x1xf32> to vector<8x128xf32>
      %545 = arith.mulf %544, %543 : vector<8x128xf32>
      %546 = arith.addf %465, %545 : vector<8x128xf32>
      %547 = arith.subf %540, %469 : vector<8x128xf32>
      %548 = vector.broadcast %514 : vector<8x1xf32> to vector<8x128xf32>
      %549 = arith.mulf %548, %547 : vector<8x128xf32>
      %550 = arith.addf %469, %549 : vector<8x128xf32>
      %551 = vector.extract_strided_slice %509 {offsets = [0, 512], sizes = [8, 512], strides = [1, 1]} : vector<8x1024xf32> to vector<8x512xf32>
      %cst_124 = arith.constant dense<0.000000e+00> : vector<8x512xf32>
      %552 = tpu.matmul %501, %13, %cst_124 {dimension_numbers = #tpu.dot_dimension_numbers<[1], [0], [0], [1], [0, 0, 1, 1], [], []>} : vector<8x128xf32>, vector<128x512xf32>, vector<8x512xf32> -> vector<8x512xf32>
      %553 = arith.addf %551, %552 : vector<8x512xf32>
      %554 = vector.extract_strided_slice %553 {offsets = [0, 0], sizes = [8, 256], strides = [1, 1]} : vector<8x512xf32> to vector<8x256xf32>
      %cst_125 = arith.constant 5.000000e-01 : f32
      %555 = vector.broadcast %cst_125 : f32 to vector<8x256xf32>
      %556 = arith.mulf %555, %554 : vector<8x256xf32>
      %557 = math.tanh %556 : vector<8x256xf32>
      %cst_126 = arith.constant 5.000000e-01 : f32
      %558 = vector.broadcast %cst_126 : f32 to vector<8x256xf32>
      %559 = arith.mulf %558, %557 : vector<8x256xf32>
      %cst_127 = arith.constant 5.000000e-01 : f32
      %560 = vector.broadcast %cst_127 : f32 to vector<8x256xf32>
      %561 = arith.addf %559, %560 : vector<8x256xf32>
      %562 = vector.extract_strided_slice %561 {offsets = [0, 0], sizes = [8, 128], strides = [1, 1]} : vector<8x256xf32> to vector<8x128xf32>
      %563 = vector.extract_strided_slice %561 {offsets = [0, 128], sizes = [8, 128], strides = [1, 1]} : vector<8x256xf32> to vector<8x128xf32>
      %564 = vector.extract_strided_slice %553 {offsets = [0, 256], sizes = [8, 128], strides = [1, 1]} : vector<8x512xf32> to vector<8x128xf32>
      %565 = math.tanh %564 : vector<8x128xf32>
      %566 = vector.extract_strided_slice %553 {offsets = [0, 384], sizes = [8, 128], strides = [1, 1]} : vector<8x512xf32> to vector<8x128xf32>
      %cst_128 = arith.constant 5.000000e-01 : f32
      %567 = vector.broadcast %cst_128 : f32 to vector<8x128xf32>
      %568 = arith.mulf %567, %566 : vector<8x128xf32>
      %569 = math.tanh %568 : vector<8x128xf32>
      %cst_129 = arith.constant 5.000000e-01 : f32
      %570 = vector.broadcast %cst_129 : f32 to vector<8x128xf32>
      %571 = arith.mulf %570, %569 : vector<8x128xf32>
      %cst_130 = arith.constant 5.000000e-01 : f32
      %572 = vector.broadcast %cst_130 : f32 to vector<8x128xf32>
      %573 = arith.addf %571, %572 : vector<8x128xf32>
      %574 = arith.mulf %563, %505 : vector<8x128xf32>
      %575 = arith.mulf %562, %565 : vector<8x128xf32>
      %576 = arith.addf %574, %575 : vector<8x128xf32>
      %577 = math.tanh %576 : vector<8x128xf32>
      %578 = arith.mulf %573, %577 : vector<8x128xf32>
      %579 = arith.subf %578, %501 : vector<8x128xf32>
      %580 = vector.broadcast %514 : vector<8x1xf32> to vector<8x128xf32>
      %581 = arith.mulf %580, %579 : vector<8x128xf32>
      %582 = arith.addf %501, %581 : vector<8x128xf32>
      %583 = arith.subf %576, %505 : vector<8x128xf32>
      %584 = vector.broadcast %514 : vector<8x1xf32> to vector<8x128xf32>
      %585 = arith.mulf %584, %583 : vector<8x128xf32>
      %586 = arith.addf %505, %585 : vector<8x128xf32>
      %c7_i32 = arith.constant 7 : i32
      %587 = arith.index_cast %c7_i32 : i32 to index
      %c0_131 = arith.constant 0 : index
      %c0_132 = arith.constant 0 : index
      %588 = vector.load %arg2[%587, %c0_131, %c0_132] : memref<8x8x1024xbf16, #tpu.memory_space<vmem>>, vector<1x8x1024xbf16>
      %589 = vector.shape_cast %588 : vector<1x8x1024xbf16> to vector<8x1024xbf16>
      %590 = arith.extf %589 : vector<8x1024xbf16> to vector<8x1024xf32>
      %591 = arith.addi %15, %c7_i32 : i32
      %592 = vector.broadcast %591 : i32 to vector<8x1xi32>
      %593 = arith.cmpi slt, %592, %14 : vector<8x1xi32>
      %594 = arith.extui %593 : vector<8x1xi1> to vector<8x1xi32>
      %595 = arith.sitofp %594 : vector<8x1xi32> to vector<8x1xf32>
      %596 = vector.extract_strided_slice %590 {offsets = [0, 0], sizes = [8, 512], strides = [1, 1]} : vector<8x1024xf32> to vector<8x512xf32>
      %cst_133 = arith.constant dense<0.000000e+00> : vector<8x512xf32>
      %597 = tpu.matmul %546, %11, %cst_133 {dimension_numbers = #tpu.dot_dimension_numbers<[1], [0], [0], [1], [0, 0, 1, 1], [], []>} : vector<8x128xf32>, vector<128x512xf32>, vector<8x512xf32> -> vector<8x512xf32>
      %598 = arith.addf %596, %597 : vector<8x512xf32>
      %599 = vector.extract_strided_slice %598 {offsets = [0, 0], sizes = [8, 256], strides = [1, 1]} : vector<8x512xf32> to vector<8x256xf32>
      %cst_134 = arith.constant 5.000000e-01 : f32
      %600 = vector.broadcast %cst_134 : f32 to vector<8x256xf32>
      %601 = arith.mulf %600, %599 : vector<8x256xf32>
      %602 = math.tanh %601 : vector<8x256xf32>
      %cst_135 = arith.constant 5.000000e-01 : f32
      %603 = vector.broadcast %cst_135 : f32 to vector<8x256xf32>
      %604 = arith.mulf %603, %602 : vector<8x256xf32>
      %cst_136 = arith.constant 5.000000e-01 : f32
      %605 = vector.broadcast %cst_136 : f32 to vector<8x256xf32>
      %606 = arith.addf %604, %605 : vector<8x256xf32>
      %607 = vector.extract_strided_slice %606 {offsets = [0, 0], sizes = [8, 128], strides = [1, 1]} : vector<8x256xf32> to vector<8x128xf32>
      %608 = vector.extract_strided_slice %606 {offsets = [0, 128], sizes = [8, 128], strides = [1, 1]} : vector<8x256xf32> to vector<8x128xf32>
      %609 = vector.extract_strided_slice %598 {offsets = [0, 256], sizes = [8, 128], strides = [1, 1]} : vector<8x512xf32> to vector<8x128xf32>
      %610 = math.tanh %609 : vector<8x128xf32>
      %611 = vector.extract_strided_slice %598 {offsets = [0, 384], sizes = [8, 128], strides = [1, 1]} : vector<8x512xf32> to vector<8x128xf32>
      %cst_137 = arith.constant 5.000000e-01 : f32
      %612 = vector.broadcast %cst_137 : f32 to vector<8x128xf32>
      %613 = arith.mulf %612, %611 : vector<8x128xf32>
      %614 = math.tanh %613 : vector<8x128xf32>
      %cst_138 = arith.constant 5.000000e-01 : f32
      %615 = vector.broadcast %cst_138 : f32 to vector<8x128xf32>
      %616 = arith.mulf %615, %614 : vector<8x128xf32>
      %cst_139 = arith.constant 5.000000e-01 : f32
      %617 = vector.broadcast %cst_139 : f32 to vector<8x128xf32>
      %618 = arith.addf %616, %617 : vector<8x128xf32>
      %619 = arith.mulf %608, %550 : vector<8x128xf32>
      %620 = arith.mulf %607, %610 : vector<8x128xf32>
      %621 = arith.addf %619, %620 : vector<8x128xf32>
      %622 = math.tanh %621 : vector<8x128xf32>
      %623 = arith.mulf %618, %622 : vector<8x128xf32>
      %624 = arith.subf %623, %546 : vector<8x128xf32>
      %625 = vector.broadcast %595 : vector<8x1xf32> to vector<8x128xf32>
      %626 = arith.mulf %625, %624 : vector<8x128xf32>
      %627 = arith.addf %546, %626 : vector<8x128xf32>
      %628 = arith.subf %621, %550 : vector<8x128xf32>
      %629 = vector.broadcast %595 : vector<8x1xf32> to vector<8x128xf32>
      %630 = arith.mulf %629, %628 : vector<8x128xf32>
      %631 = arith.addf %550, %630 : vector<8x128xf32>
      %632 = vector.extract_strided_slice %590 {offsets = [0, 512], sizes = [8, 512], strides = [1, 1]} : vector<8x1024xf32> to vector<8x512xf32>
      %cst_140 = arith.constant dense<0.000000e+00> : vector<8x512xf32>
      %633 = tpu.matmul %582, %13, %cst_140 {dimension_numbers = #tpu.dot_dimension_numbers<[1], [0], [0], [1], [0, 0, 1, 1], [], []>} : vector<8x128xf32>, vector<128x512xf32>, vector<8x512xf32> -> vector<8x512xf32>
      %634 = arith.addf %632, %633 : vector<8x512xf32>
      %635 = vector.extract_strided_slice %634 {offsets = [0, 0], sizes = [8, 256], strides = [1, 1]} : vector<8x512xf32> to vector<8x256xf32>
      %cst_141 = arith.constant 5.000000e-01 : f32
      %636 = vector.broadcast %cst_141 : f32 to vector<8x256xf32>
      %637 = arith.mulf %636, %635 : vector<8x256xf32>
      %638 = math.tanh %637 : vector<8x256xf32>
      %cst_142 = arith.constant 5.000000e-01 : f32
      %639 = vector.broadcast %cst_142 : f32 to vector<8x256xf32>
      %640 = arith.mulf %639, %638 : vector<8x256xf32>
      %cst_143 = arith.constant 5.000000e-01 : f32
      %641 = vector.broadcast %cst_143 : f32 to vector<8x256xf32>
      %642 = arith.addf %640, %641 : vector<8x256xf32>
      %643 = vector.extract_strided_slice %642 {offsets = [0, 0], sizes = [8, 128], strides = [1, 1]} : vector<8x256xf32> to vector<8x128xf32>
      %644 = vector.extract_strided_slice %642 {offsets = [0, 128], sizes = [8, 128], strides = [1, 1]} : vector<8x256xf32> to vector<8x128xf32>
      %645 = vector.extract_strided_slice %634 {offsets = [0, 256], sizes = [8, 128], strides = [1, 1]} : vector<8x512xf32> to vector<8x128xf32>
      %646 = math.tanh %645 : vector<8x128xf32>
      %647 = vector.extract_strided_slice %634 {offsets = [0, 384], sizes = [8, 128], strides = [1, 1]} : vector<8x512xf32> to vector<8x128xf32>
      %cst_144 = arith.constant 5.000000e-01 : f32
      %648 = vector.broadcast %cst_144 : f32 to vector<8x128xf32>
      %649 = arith.mulf %648, %647 : vector<8x128xf32>
      %650 = math.tanh %649 : vector<8x128xf32>
      %cst_145 = arith.constant 5.000000e-01 : f32
      %651 = vector.broadcast %cst_145 : f32 to vector<8x128xf32>
      %652 = arith.mulf %651, %650 : vector<8x128xf32>
      %cst_146 = arith.constant 5.000000e-01 : f32
      %653 = vector.broadcast %cst_146 : f32 to vector<8x128xf32>
      %654 = arith.addf %652, %653 : vector<8x128xf32>
      %655 = arith.mulf %644, %586 : vector<8x128xf32>
      %656 = arith.mulf %643, %646 : vector<8x128xf32>
      %657 = arith.addf %655, %656 : vector<8x128xf32>
      %658 = math.tanh %657 : vector<8x128xf32>
      %659 = arith.mulf %654, %658 : vector<8x128xf32>
      %660 = arith.subf %659, %582 : vector<8x128xf32>
      %661 = vector.broadcast %595 : vector<8x1xf32> to vector<8x128xf32>
      %662 = arith.mulf %661, %660 : vector<8x128xf32>
      %663 = arith.addf %582, %662 : vector<8x128xf32>
      %664 = arith.subf %657, %586 : vector<8x128xf32>
      %665 = vector.broadcast %595 : vector<8x1xf32> to vector<8x128xf32>
      %666 = arith.mulf %665, %664 : vector<8x128xf32>
      %667 = arith.addf %586, %666 : vector<8x128xf32>
      %c8_i32_147 = arith.constant 8 : i32
      %c0_148 = arith.constant 0 : index
      %c0_149 = arith.constant 0 : index
      %668 = vector.load %arg6[%c0_148, %c0_149] : memref<8x128xf32, #tpu.memory_space<vmem>>, vector<8x128xf32>
      tpu.vector_store %arg6[%c0_148, %c0_149], %627 {strides = array<i32>} : memref<8x128xf32, #tpu.memory_space<vmem>>, vector<8x128xf32>,
      %c0_150 = arith.constant 0 : index
      %c0_151 = arith.constant 0 : index
      %669 = vector.load %arg7[%c0_150, %c0_151] : memref<8x128xf32, #tpu.memory_space<vmem>>, vector<8x128xf32>
      tpu.vector_store %arg7[%c0_150, %c0_151], %631 {strides = array<i32>} : memref<8x128xf32, #tpu.memory_space<vmem>>, vector<8x128xf32>,
      %c0_152 = arith.constant 0 : index
      %c0_153 = arith.constant 0 : index
      %670 = vector.load %arg8[%c0_152, %c0_153] : memref<8x128xf32, #tpu.memory_space<vmem>>, vector<8x128xf32>
      tpu.vector_store %arg8[%c0_152, %c0_153], %663 {strides = array<i32>} : memref<8x128xf32, #tpu.memory_space<vmem>>, vector<8x128xf32>,
      %c0_154 = arith.constant 0 : index
      %c0_155 = arith.constant 0 : index
      %671 = vector.load %arg9[%c0_154, %c0_155] : memref<8x128xf32, #tpu.memory_space<vmem>>, vector<8x128xf32>
      tpu.vector_store %arg9[%c0_154, %c0_155], %667 {strides = array<i32>} : memref<8x128xf32, #tpu.memory_space<vmem>>, vector<8x128xf32>,
    } else {
    }
    %c0_i32_2 = arith.constant 0 : i32
    %7 = arith.cmpi eq, %arg0, %c0_i32_2 : i32
    %8 = arith.extui %7 : i1 to i32
    %c0_i32_3 = arith.constant 0 : i32
    %9 = arith.cmpi ne, %8, %c0_i32_3 : i32
    scf.if %9 {
      %c0_4 = arith.constant 0 : index
      %c0_5 = arith.constant 0 : index
      %10 = vector.load %arg6[%c0_4, %c0_5] : memref<8x128xf32, #tpu.memory_space<vmem>>, vector<8x128xf32>
      %c0_6 = arith.constant 0 : index
      %c0_7 = arith.constant 0 : index
      %c0_8 = arith.constant 0 : index
      %11 = vector.load %arg5[%c0_6, %c0_7, %c0_8] : memref<2x8x128xf32, #tpu.memory_space<vmem>>, vector<1x8x128xf32>
      %12 = vector.shape_cast %11 : vector<1x8x128xf32> to vector<8x128xf32>
      %13 = vector.shape_cast %10 : vector<8x128xf32> to vector<1x8x128xf32>
      tpu.vector_store %arg5[%c0_6, %c0_7, %c0_8], %13 {strides = array<i32>} : memref<2x8x128xf32, #tpu.memory_space<vmem>>, vector<1x8x128xf32>,
      %c0_9 = arith.constant 0 : index
      %c0_10 = arith.constant 0 : index
      %14 = vector.load %arg8[%c0_9, %c0_10] : memref<8x128xf32, #tpu.memory_space<vmem>>, vector<8x128xf32>
      %c1 = arith.constant 1 : index
      %c0_11 = arith.constant 0 : index
      %c0_12 = arith.constant 0 : index
      %15 = vector.load %arg5[%c1, %c0_11, %c0_12] : memref<2x8x128xf32, #tpu.memory_space<vmem>>, vector<1x8x128xf32>
      %16 = vector.shape_cast %15 : vector<1x8x128xf32> to vector<8x128xf32>
      %17 = vector.shape_cast %14 : vector<8x128xf32> to vector<1x8x128xf32>
      tpu.vector_store %arg5[%c1, %c0_11, %c0_12], %17 {strides = array<i32>} : memref<2x8x128xf32, #tpu.memory_space<vmem>>, vector<1x8x128xf32>,
    } else {
    }
    return
  }
  func.func @transform_0(%arg0: i32, %arg1: memref<1xi32, #tpu.memory_space<smem>>) -> (i32, i32, i32) {
    %c0 = arith.constant 0 : index
    %0 = memref.load %arg1[%c0] : memref<1xi32, #tpu.memory_space<smem>>
    %c1_i32 = arith.constant 1 : i32
    %1 = arith.subi %0, %c1_i32 : i32
    %2 = arith.minsi %arg0, %1 : i32
    %c0_i32 = arith.constant 0 : i32
    %c0_i32_0 = arith.constant 0 : i32
    %c0_i32_1 = arith.constant 0 : i32
    return %2, %c0_i32, %c0_i32_0 : i32, i32, i32
  }
  func.func @transform_1(%arg0: i32, %arg1: memref<1xi32, #tpu.memory_space<smem>>) -> (i32, i32) {
    %c0_i32 = arith.constant 0 : i32
    %c0_i32_0 = arith.constant 0 : i32
    %c0_i32_1 = arith.constant 0 : i32
    return %c0_i32, %c0_i32_0 : i32, i32
  }
  func.func @transform_2(%arg0: i32, %arg1: memref<1xi32, #tpu.memory_space<smem>>) -> (i32, i32, i32) {
    %c0_i32 = arith.constant 0 : i32
    %c0_i32_0 = arith.constant 0 : i32
    %c0_i32_1 = arith.constant 0 : i32
    %c0_i32_2 = arith.constant 0 : i32
    return %c0_i32, %c0_i32_0, %c0_i32_1 : i32, i32, i32
  }
  func.func @transform_3(%arg0: i32, %arg1: memref<1xi32, #tpu.memory_space<smem>>) -> (i32, i32, i32) {
    %c0_i32 = arith.constant 0 : i32
    %c0_i32_0 = arith.constant 0 : i32
    %c0_i32_1 = arith.constant 0 : i32
    %c0_i32_2 = arith.constant 0 : i32
    return %c0_i32, %c0_i32_0, %c0_i32_1 : i32, i32, i32
  }
}

</mosaic_0001>

<llo_original>
// kernel: lstm_forward.1
$region0: #{lstm_forward.1}
  #allocation0 [shape = 'u32[]', space=smem, size = 0x4, offset = 0x4, fixed_abs, tag = 'smem constant byte address 0x4 - core index']
  #allocation1 [shape = 'u32[144,128]{1,0:T(1,128)}', space=vmem, size = 0x12000, scoped, tag = 'internal scratch']
  #allocation2 [shape = 'f32[8,128]{1,0:T(8,128)}', space=vmem, size = 0x1000, scoped, tag = 'scratch operand']
  #allocation3 [shape = 'f32[8,128]{1,0:T(8,128)}', space=vmem, size = 0x1000, scoped, tag = 'scratch operand']
  #allocation4 [shape = 'f32[8,128]{1,0:T(8,128)}', space=vmem, size = 0x1000, scoped, tag = 'scratch operand']
  #allocation5 [shape = 'f32[8,128]{1,0:T(8,128)}', space=vmem, size = 0x1000, scoped, tag = 'scratch operand']
  #allocation6 [shape = 's32[1]{0}', space=sflag, size = 0x4, scoped, tag = 'scoped memory for lstm_forward.1']
  #allocation7 [shape = 's32[1]{0:T(128)S(6)}', space=smem, size = 0x200, scoped, tag = 'prefetched SMEM operand 0']
  %s0 = inlined_call_operand.<no memory space> [shape: s32[1], index: 0, kind: input, shape index: {}]
  %s1 = inlined_call_operand.vmem [shape: bf16[8,8,1024], index: 1, kind: input, shape index: {}]
  %s2 = inlined_call_operand.vmem [shape: s32[8,1], index: 2, kind: input, shape index: {}]
  %s3 = inlined_call_operand.vmem [shape: f32[2,128,512], index: 3, kind: input, shape index: {}]
  %s4 = inlined_call_operand.vmem [shape: f32[2,8,128], index: 4, kind: output, shape index: {}]
  %s5 = sld [smem:[#allocation0]]
  $region34: #{lstm_forward.1} parent=0
    _
  %s7 = ssub.s32 1, %s5
  %s8 = scalar_select 0, %s7, %s5
  %9 = sst [smem:[#allocation7]] %s0
  // Predicated region
  $region2: #{lstm_forward.1} parent=0 // pred_check
    _
  $region3: #{lstm_forward.1} parent=0 // pred_check_branch
    %11 = sbr.rel (0) target = $region5
  $region4: #{lstm_forward.1} parent=0 // pred_region
    %s12 = sld [smem:[#allocation7]]
    %s13 = ssub.s32 %s12, 1
    %p14 = scmp.lt.s32.totalorder 0, %s13
    %s15 = scalar_select %p14, 0, %s13
    %s16 = smul.u32 8, %s15
    %p17 = scmp.lt.s32.totalorder %s16, 7
    %s18 = scalar_select %p17, %s16, 7
    %s19 = smul.addr %s18, 8
    %s20 = smul.addr %s19, 4
    %s21 = scalar_lea.vmem %s1, %s20
    %s22 = sld [smem:[#allocation7]]
    %s23 = ssub.s32 %s22, 1
    %p24 = scmp.lt.s32.totalorder 0, %s23
    %s25 = scalar_select %p24, 0, %s23
    %s26 = smul.u32 8, %s25
  $region5: #{lstm_forward.1} parent=0 // pred_fallthru
    _
  // Predicated region
  $region6: #{lstm_forward.1} parent=0 // pred_check
    _
  $region7: #{lstm_forward.1} parent=0 // pred_check_branch
    %28 = sbr.rel (0) target = $region9
  $region8: #{lstm_forward.1} parent=0 // pred_region
    _
  $region9: #{lstm_forward.1} parent=0 // pred_fallthru
    _
  // Predicated region
  $region10: #{lstm_forward.1} parent=0 // pred_check
    _
  $region11: #{lstm_forward.1} parent=0 // pred_check_branch
    %30 = sbr.rel (0) target = $region13
  $region12: #{lstm_forward.1} parent=0 // pred_region
    _
  $region13: #{lstm_forward.1} parent=0 // pred_fallthru
    _
  %s31 = sld [smem:[#allocation7]]
  %s32 = ssub.s32 %s31, 1
  %p33 = scmp.lt.s32.totalorder 0, %s32
  %s34 = scalar_select %p33, 0, %s32
  %s35 = smul.u32 8, %s34
  %p36 = scmp.lt.s32.totalorder %s35, 7
  %s37 = scalar_select %p36, %s35, 7
  %s38 = smul.addr %s37, 8
  %s39 = smul.addr %s38, 4
  %s40 = scalar_lea.vmem %s1, %s39
  %s41 = sld [smem:[#allocation7]]
  %s42 = ssub.s32 %s41, 1
  %p43 = scmp.lt.s32.totalorder 0, %s42
  %s44 = scalar_select %p43, 0, %s42
  %s45 = smul.u32 8, %s44
  %p46 = scmp.lt.s32.totalorder %s45, 7
  %s47 = scalar_select %p46, %s45, 7
  %s48 = smul.addr %s47, 8
  %s49 = smul.addr %s48, 4
  %s50 = scalar_lea.vmem %s1, %s49
  %s51 = sld [smem:[#allocation7]]
  %s52 = ssub.s32 %s51, 1
  %p53 = scmp.lt.s32.totalorder 0, %s52
  %s54 = scalar_select %p53, 0, %s52
  %s55 = smul.u32 8, %s54
  %p56 = scmp.eq.s32.totalorder 0, 0
  // Predicated region
  $region14: #{lstm_forward.1} parent=0 // pred_check
    %p57 = pneg %p56
  $region15: #{lstm_forward.1} parent=0 // pred_check_branch
    %59 = sbr.rel (%p57) target = $region17
  $region16: #{lstm_forward.1} parent=0 // pred_region
    %60 = vst [vmem:[#allocation2] sm:$0xff] 0.0
    %61 = vst [vmem:[#allocation3] sm:$0xff] 0.0
    %62 = vst [vmem:[#allocation4] sm:$0xff] 0.0
    %63 = vst [vmem:[#allocation5] sm:$0xff] 0.0
  $region17: #{lstm_forward.1} parent=0 // pred_fallthru
    _
  %s64 = sld [smem:[#allocation7]]
  %p65 = scmp.lt.s32.totalorder 0, %s64
  // Predicated region
  $region18: #{lstm_forward.1} parent=0 // pred_check
    %p66 = pneg %p65
  $region19: #{lstm_forward.1} parent=0 // pred_check_branch
    %68 = sbr.rel (%p66) target = $region21
  $region20: #{lstm_forward.1} parent=0 // pred_region
    %v69 = vld [vmem:[%s3] sm:$0xff]
    %v70 = vld [vmem:[%s3 + $0x8] sm:$0xff]
    %v71 = vld [vmem:[%s3 + $0x10] sm:$0xff]
    %v72 = vld [vmem:[%s3 + $0x18] sm:$0xff]
    %v73 = vld [vmem:[%s3 + $0x20] sm:$0xff]
    %v74 = vld [vmem:[%s3 + $0x28] sm:$0xff]
    %v75 = vld [vmem:[%s3 + $0x30] sm:$0xff]
    %v76 = vld [vmem:[%s3 + $0x38] sm:$0xff]
    %v77 = vld [vmem:[%s3 + $0x40] sm:$0xff]
    %v78 = vld [vmem:[%s3 + $0x48] sm:$0xff]
    %v79 = vld [vmem:[%s3 + $0x50] sm:$0xff]
    %v80 = vld [vmem:[%s3 + $0x58] sm:$0xff]
    %v81 = vld [vmem:[%s3 + $0x60] sm:$0xff]
    %v82 = vld [vmem:[%s3 + $0x68] sm:$0xff]
    %v83 = vld [vmem:[%s3 + $0x70] sm:$0xff]
    %v84 = vld [vmem:[%s3 + $0x78] sm:$0xff]
    %v85 = vld [vmem:[%s3 + $0x80] sm:$0xff]
    %v86 = vld [vmem:[%s3 + $0x88] sm:$0xff]
    %v87 = vld [vmem:[%s3 + $0x90] sm:$0xff]
    %v88 = vld [vmem:[%s3 + $0x98] sm:$0xff]
    %v89 = vld [vmem:[%s3 + $0xa0] sm:$0xff]
    %v90 = vld [vmem:[%s3 + $0xa8] sm:$0xff]
    %v91 = vld [vmem:[%s3 + $0xb0] sm:$0xff]
    %v92 = vld [vmem:[%s3 + $0xb8] sm:$0xff]
    %v93 = vld [vmem:[%s3 + $0xc0] sm:$0xff]
    %v94 = vld [vmem:[%s3 + $0xc8] sm:$0xff]
    %v95 = vld [vmem:[%s3 + $0xd0] sm:$0xff]
    %v96 = vld [vmem:[%s3 + $0xd8] sm:$0xff]
    %v97 = vld [vmem:[%s3 + $0xe0] sm:$0xff]
    %v98 = vld [vmem:[%s3 + $0xe8] sm:$0xff]
    %v99 = vld [vmem:[%s3 + $0xf0] sm:$0xff]
    %v100 = vld [vmem:[%s3 + $0xf8] sm:$0xff]
    %v101 = vld [vmem:[%s3 + $0x100] sm:$0xff]
    %v102 = vld [vmem:[%s3 + $0x108] sm:$0xff]
    %v103 = vld [vmem:[%s3 + $0x110] sm:$0xff]
    %v104 = vld [vmem:[%s3 + $0x118] sm:$0xff]
    %v105 = vld [vmem:[%s3 + $0x120] sm:$0xff]
    %v106 = vld [vmem:[%s3 + $0x128] sm:$0xff]
    %v107 = vld [vmem:[%s3 + $0x130] sm:$0xff]
    %v108 = vld [vmem:[%s3 + $0x138] sm:$0xff]
    %v109 = vld [vmem:[%s3 + $0x140] sm:$0xff]
    %v110 = vld [vmem:[%s3 + $0x148] sm:$0xff]
    %v111 = vld [vmem:[%s3 + $0x150] sm:$0xff]
    %v112 = vld [vmem:[%s3 + $0x158] sm:$0xff]
    %v113 = vld [vmem:[%s3 + $0x160] sm:$0xff]
    %v114 = vld [vmem:[%s3 + $0x168] sm:$0xff]
    %v115 = vld [vmem:[%s3 + $0x170] sm:$0xff]
    %v116 = vld [vmem:[%s3 + $0x178] sm:$0xff]
    %v117 = vld [vmem:[%s3 + $0x180] sm:$0xff]
    %v118 = vld [vmem:[%s3 + $0x188] sm:$0xff]
    %v119 = vld [vmem:[%s3 + $0x190] sm:$0xff]
    %v120 = vld [vmem:[%s3 + $0x198] sm:$0xff]
    %v121 = vld [vmem:[%s3 + $0x1a0] sm:$0xff]
    %v122 = vld [vmem:[%s3 + $0x1a8] sm:$0xff]
    %v123 = vld [vmem:[%s3 + $0x1b0] sm:$0xff]
    %v124 = vld [vmem:[%s3 + $0x1b8] sm:$0xff]
    %v125 = vld [vmem:[%s3 + $0x1c0] sm:$0xff]
    %v126 = vld [vmem:[%s3 + $0x1c8] sm:$0xff]
    %v127 = vld [vmem:[%s3 + $0x1d0] sm:$0xff]
    %v128 = vld [vmem:[%s3 + $0x1d8] sm:$0xff]
    %v129 = vld [vmem:[%s3 + $0x1e0] sm:$0xff]
    %v130 = vld [vmem:[%s3 + $0x1e8] sm:$0xff]
    %v131 = vld [vmem:[%s3 + $0x1f0] sm:$0xff]
    %v132 = vld [vmem:[%s3 + $0x1f8] sm:$0xff]
    %s133 = scalar_lea.vmem %s3, 512
    %v134 = vld [vmem:[%s133] sm:$0xff]
    %v135 = vld [vmem:[%s133 + $0x8] sm:$0xff]
    %v136 = vld [vmem:[%s133 + $0x10] sm:$0xff]
    %v137 = vld [vmem:[%s133 + $0x18] sm:$0xff]
    %v138 = vld [vmem:[%s133 + $0x20] sm:$0xff]
    %v139 = vld [vmem:[%s133 + $0x28] sm:$0xff]
    %v140 = vld [vmem:[%s133 + $0x30] sm:$0xff]
    %v141 = vld [vmem:[%s133 + $0x38] sm:$0xff]
    %v142 = vld [vmem:[%s133 + $0x40] sm:$0xff]
    %v143 = vld [vmem:[%s133 + $0x48] sm:$0xff]
    %v144 = vld [vmem:[%s133 + $0x50] sm:$0xff]
    %v145 = vld [vmem:[%s133 + $0x58] sm:$0xff]
    %v146 = vld [vmem:[%s133 + $0x60] sm:$0xff]
    %v147 = vld [vmem:[%s133 + $0x68] sm:$0xff]
    %v148 = vld [vmem:[%s133 + $0x70] sm:$0xff]
    %v149 = vld [vmem:[%s133 + $0x78] sm:$0xff]
    %v150 = vld [vmem:[%s133 + $0x80] sm:$0xff]
    %v151 = vld [vmem:[%s133 + $0x88] sm:$0xff]
    %v152 = vld [vmem:[%s133 + $0x90] sm:$0xff]
    %v153 = vld [vmem:[%s133 + $0x98] sm:$0xff]
    %v154 = vld [vmem:[%s133 + $0xa0] sm:$0xff]
    %v155 = vld [vmem:[%s133 + $0xa8] sm:$0xff]
    %v156 = vld [vmem:[%s133 + $0xb0] sm:$0xff]
    %v157 = vld [vmem:[%s133 + $0xb8] sm:$0xff]
    %v158 = vld [vmem:[%s133 + $0xc0] sm:$0xff]
    %v159 = vld [vmem:[%s133 + $0xc8] sm:$0xff]
    %v160 = vld [vmem:[%s133 + $0xd0] sm:$0xff]
    %v161 = vld [vmem:[%s133 + $0xd8] sm:$0xff]
    %v162 = vld [vmem:[%s133 + $0xe0] sm:$0xff]
    %v163 = vld [vmem:[%s133 + $0xe8] sm:$0xff]
    %v164 = vld [vmem:[%s133 + $0xf0] sm:$0xff]
    %v165 = vld [vmem:[%s133 + $0xf8] sm:$0xff]
    %v166 = vld [vmem:[%s133 + $0x100] sm:$0xff]
    %v167 = vld [vmem:[%s133 + $0x108] sm:$0xff]
    %v168 = vld [vmem:[%s133 + $0x110] sm:$0xff]
    %v169 = vld [vmem:[%s133 + $0x118] sm:$0xff]
    %v170 = vld [vmem:[%s133 + $0x120] sm:$0xff]
    %v171 = vld [vmem:[%s133 + $0x128] sm:$0xff]
    %v172 = vld [vmem:[%s133 + $0x130] sm:$0xff]
    %v173 = vld [vmem:[%s133 + $0x138] sm:$0xff]
    %v174 = vld [vmem:[%s133 + $0x140] sm:$0xff]
    %v175 = vld [vmem:[%s133 + $0x148] sm:$0xff]
    %v176 = vld [vmem:[%s133 + $0x150] sm:$0xff]
    %v177 = vld [vmem:[%s133 + $0x158] sm:$0xff]
    %v178 = vld [vmem:[%s133 + $0x160] sm:$0xff]
    %v179 = vld [vmem:[%s133 + $0x168] sm:$0xff]
    %v180 = vld [vmem:[%s133 + $0x170] sm:$0xff]
    %v181 = vld [vmem:[%s133 + $0x178] sm:$0xff]
    %v182 = vld [vmem:[%s133 + $0x180] sm:$0xff]
    %v183 = vld [vmem:[%s133 + $0x188] sm:$0xff]
    %v184 = vld [vmem:[%s133 + $0x190] sm:$0xff]
    %v185 = vld [vmem:[%s133 + $0x198] sm:$0xff]
    %v186 = vld [vmem:[%s133 + $0x1a0] sm:$0xff]
    %v187 = vld [vmem:[%s133 + $0x1a8] sm:$0xff]
    %v188 = vld [vmem:[%s133 + $0x1b0] sm:$0xff]
    %v189 = vld [vmem:[%s133 + $0x1b8] sm:$0xff]
    %v190 = vld [vmem:[%s133 + $0x1c0] sm:$0xff]
    %v191 = vld [vmem:[%s133 + $0x1c8] sm:$0xff]
    %v192 = vld [vmem:[%s133 + $0x1d0] sm:$0xff]
    %v193 = vld [vmem:[%s133 + $0x1d8] sm:$0xff]
    %v194 = vld [vmem:[%s133 + $0x1e0] sm:$0xff]
    %v195 = vld [vmem:[%s133 + $0x1e8] sm:$0xff]
    %v196 = vld [vmem:[%s133 + $0x1f0] sm:$0xff]
    %v197 = vld [vmem:[%s133 + $0x1f8] sm:$0xff]
    %v198 = vld [vmem:[%s2] sm:$0xff]
    %s199 = smul.u32 0, 8
    %v200 = vld [vmem:[#allocation2] sm:$0xff]
    %v201 = vld [vmem:[#allocation3] sm:$0xff]
    %v202 = vld [vmem:[#allocation4] sm:$0xff]
    %v203 = vld [vmem:[#allocation5] sm:$0xff]
    %v204 = vld [vmem:[%s50] sm:$0xff]
    %v205 = vld [vmem:[%s50 + $0x8] sm:$0xff]
    %v206 = vld [vmem:[%s50 + $0x10] sm:$0xff]
    %v207 = vld [vmem:[%s50 + $0x18] sm:$0xff]
    %v208 = vunpack.c.l.bf16 %v204
    %v209 = vunpack.c.h.bf16 %v204
    %v210 = vunpack.c.l.bf16 %v205
    %v211 = vunpack.c.h.bf16 %v205
    %v212 = vunpack.c.l.bf16 %v206
    %v213 = vunpack.c.h.bf16 %v206
    %v214 = vunpack.c.l.bf16 %v207
    %v215 = vunpack.c.h.bf16 %v207
    %v216 = vstv %s199
    %vm217 = vcmp.lt.s32.totalorder %v216, %v198
    %v218 = vsel %vm217, 1, 0
    %v219 = vcvt.s32.f32 %v218
    %220 = vmatprep.subr.mxu0 %v70
    %221 = vmatpush1.msra.mxu0 %v69
    %222 = vmatprep.subr.mxu0 %v74
    %223 = vmatpush1.msra.mxu0 %v73
    %224 = vmatprep.subr.mxu0 %v78
    %225 = vmatpush1.msra.mxu0 %v77
    %226 = vmatprep.subr.mxu0 %v82
    %227 = vmatpush1.msra.mxu0 %v81
    %228 = vmatprep.subr.mxu0 %v86
    %229 = vmatpush1.msra.mxu0 %v85
    %230 = vmatprep.subr.mxu0 %v90
    %231 = vmatpush1.msra.mxu0 %v89
    %232 = vmatprep.subr.mxu0 %v94
    %233 = vmatpush1.msra.mxu0 %v93
    %234 = vmatprep.subr.mxu0 %v98
    %235 = vmatpush1.msra.mxu0 %v97
    %236 = vmatprep.subr.mxu0 %v102
    %237 = vmatpush1.msra.mxu0 %v101
    %238 = vmatprep.subr.mxu0 %v106
    %239 = vmatpush1.msra.mxu0 %v105
    %240 = vmatprep.subr.mxu0 %v110
    %241 = vmatpush1.msra.mxu0 %v109
    %242 = vmatprep.subr.mxu0 %v114
    %243 = vmatpush1.msra.mxu0 %v113
    %244 = vmatprep.subr.mxu0 %v118
    %245 = vmatpush1.msra.mxu0 %v117
    %246 = vmatprep.subr.mxu0 %v122
    %247 = vmatpush1.msra.mxu0 %v121
    %248 = vmatprep.subr.mxu0 %v126
    %249 = vmatpush1.msra.mxu0 %v125
    %250 = vmatprep.subr.mxu0 %v130
    %251 = vmatpush1.msra.mxu0 %v129
    %252 = vmatprep.subr.mxu0 0.0
    %253 = vmatpush1.msra.mxu0 0.0
    %254 = vmatprep.subr.mxu0 0.0
    %255 = vmatpush1.msra.mxu0 0.0
    %256 = vmatprep.subr.mxu0 0.0
    %257 = vmatpush1.msra.mxu0 0.0
    %258 = vmatprep.subr.mxu0 0.0
    %259 = vmatpush1.msra.mxu0 0.0
    %260 = vmatprep.subr.mxu0 0.0
    %261 = vmatpush1.msra.mxu0 0.0
    %262 = vmatprep.subr.mxu0 0.0
    %263 = vmatpush1.msra.mxu0 0.0
    %264 = vmatprep.subr.mxu0 0.0
    %265 = vmatpush1.msra.mxu0 0.0
    %266 = vmatprep.subr.mxu0 0.0
    %267 = vmatpush1.msra.mxu0 0.0
    %268 = vmatprep.subr.mxu0 0.0
    %269 = vmatpush1.msra.mxu0 0.0
    %270 = vmatprep.subr.mxu0 0.0
    %271 = vmatpush1.msra.mxu0 0.0
    %272 = vmatprep.subr.mxu0 0.0
    %273 = vmatpush1.msra.mxu0 0.0
    %274 = vmatprep.subr.mxu0 0.0
    %275 = vmatpush1.msra.mxu0 0.0
    %276 = vmatprep.subr.mxu0 0.0
    %277 = vmatpush1.msra.mxu0 0.0
    %278 = vmatprep.subr.mxu0 0.0
    %279 = vmatpush1.msra.mxu0 0.0
    %280 = vmatprep.subr.mxu0 0.0
    %281 = vmatpush1.msra.mxu0 0.0
    %282 = vmatprep.subr.mxu0 0.0
    %283 = vmatpush1.msra.mxu0 0.0
    %284 = vmatprep.mubr.f32.mxu0 0.0
    %285 = vmatmul.mubr.f32.gmra.mrb[0].mxu0 %v200
    %v286 = vpop.f32.mrb[0].mxu0
    %v287 = vadd.f32 0.0, %v286
    %v288 = vpop.f32.mrb[0].mxu0
    %v289 = vadd.f32 0.0, %v288
    %290 = vdwg.mxu0
    %291 = vmatprep.subr.mxu0 %v72
    %292 = vmatpush1.msra.mxu0 %v71
    %293 = vmatprep.subr.mxu0 %v76
    %294 = vmatpush1.msra.mxu0 %v75
    %295 = vmatprep.subr.mxu0 %v80
    %296 = vmatpush1.msra.mxu0 %v79
    %297 = vmatprep.subr.mxu0 %v84
    %298 = vmatpush1.msra.mxu0 %v83
    %299 = vmatprep.subr.mxu0 %v88
    %300 = vmatpush1.msra.mxu0 %v87
    %301 = vmatprep.subr.mxu0 %v92
    %302 = vmatpush1.msra.mxu0 %v91
    %303 = vmatprep.subr.mxu0 %v96
    %304 = vmatpush1.msra.mxu0 %v95
    %305 = vmatprep.subr.mxu0 %v100
    %306 = vmatpush1.msra.mxu0 %v99
    %307 = vmatprep.subr.mxu0 %v104
    %308 = vmatpush1.msra.mxu0 %v103
    %309 = vmatprep.subr.mxu0 %v108
    %310 = vmatpush1.msra.mxu0 %v107
    %311 = vmatprep.subr.mxu0 %v112
    %312 = vmatpush1.msra.mxu0 %v111
    %313 = vmatprep.subr.mxu0 %v116
    %314 = vmatpush1.msra.mxu0 %v115
    %315 = vmatprep.subr.mxu0 %v120
    %316 = vmatpush1.msra.mxu0 %v119
    %317 = vmatprep.subr.mxu0 %v124
    %318 = vmatpush1.msra.mxu0 %v123
    %319 = vmatprep.subr.mxu0 %v128
    %320 = vmatpush1.msra.mxu0 %v127
    %321 = vmatprep.subr.mxu0 %v132
    %322 = vmatpush1.msra.mxu0 %v131
    %323 = vmatprep.subr.mxu0 0.0
    %324 = vmatpush1.msra.mxu0 0.0
    %325 = vmatprep.subr.mxu0 0.0
    %326 = vmatpush1.msra.mxu0 0.0
    %327 = vmatprep.subr.mxu0 0.0
    %328 = vmatpush1.msra.mxu0 0.0
    %329 = vmatprep.subr.mxu0 0.0
    %330 = vmatpush1.msra.mxu0 0.0
    %331 = vmatprep.subr.mxu0 0.0
    %332 = vmatpush1.msra.mxu0 0.0
    %333 = vmatprep.subr.mxu0 0.0
    %334 = vmatpush1.msra.mxu0 0.0
    %335 = vmatprep.subr.mxu0 0.0
    %336 = vmatpush1.msra.mxu0 0.0
    %337 = vmatprep.subr.mxu0 0.0
    %338 = vmatpush1.msra.mxu0 0.0
    %339 = vmatprep.subr.mxu0 0.0
    %340 = vmatpush1.msra.mxu0 0.0
    %341 = vmatprep.subr.mxu0 0.0
    %342 = vmatpush1.msra.mxu0 0.0
    %343 = vmatprep.subr.mxu0 0.0
    %344 = vmatpush1.msra.mxu0 0.0
    %345 = vmatprep.subr.mxu0 0.0
    %346 = vmatpush1.msra.mxu0 0.0
    %347 = vmatprep.subr.mxu0 0.0
    %348 = vmatpush1.msra.mxu0 0.0
    %349 = vmatprep.subr.mxu0 0.0
    %350 = vmatpush1.msra.mxu0 0.0
    %351 = vmatprep.subr.mxu0 0.0
    %352 = vmatpush1.msra.mxu0 0.0
    %353 = vmatprep.subr.mxu0 0.0
    %354 = vmatpush1.msra.mxu0 0.0
    %355 = vmatprep.mubr.f32.mxu0 0.0
    %356 = vmatmul.mubr.f32.gmra.mrb[0].mxu0 %v200
    %v357 = vpop.f32.mrb[0].mxu0
    %v358 = vadd.f32 0.0, %v357
    %v359 = vpop.f32.mrb[0].mxu0
    %v360 = vadd.f32 0.0, %v359
    %361 = vdwg.mxu0
    %v362 = vadd.f32 %v208, %v287
    %v363 = vadd.f32 %v209, %v289
    %v364 = vadd.f32 %v210, %v358
    %v365 = vadd.f32 %v211, %v360
    %v366 = vmul.f32 %v362, 0.5
    %v367 = vmul.f32 %v363, 0.5
    %v368 = vtanh.pop %v366
    %v369 = vtanh.pop %v367
    %v370 = vmul.f32 %v368, 0.5
    %v371 = vmul.f32 %v369, 0.5
    %v372 = vadd.f32 %v370, 0.5
    %v373 = vadd.f32 %v371, 0.5
    %v374 = vtanh.pop %v364
    %v375 = vmul.f32 %v365, 0.5
    %v376 = vtanh.pop %v375
    %v377 = vmul.f32 %v376, 0.5
    %v378 = vadd.f32 %v377, 0.5
    %v379 = vmul.f32 %v373, %v201
    %v380 = vmul.f32 %v372, %v374
    %v381 = vadd.f32 %v379, %v380
    %v382 = vtanh.pop %v381
    %v383 = vmul.f32 %v378, %v382
    %v384 = vsub.f32 %v383, %v200
    %386 = vset.pattern.permute.xlu0 0
    %387 = vperm.xlu0 %386, %v219
    %v388 = vpop.permute.xlu0 %387
    %v390 = vmul.f32 %v388, %v384
    %v391 = vadd.f32 %v200, %v390
    %v392 = vsub.f32 %v381, %v201
    %v393 = vmul.f32 %v388, %v392
    %v394 = vadd.f32 %v201, %v393
    %395 = vmatprep.subr.mxu0 %v135
    %396 = vmatpush1.msra.mxu0 %v134
    %397 = vmatprep.subr.mxu0 %v139
    %398 = vmatpush1.msra.mxu0 %v138
    %399 = vmatprep.subr.mxu0 %v143
    %400 = vmatpush1.msra.mxu0 %v142
    %401 = vmatprep.subr.mxu0 %v147
    %402 = vmatpush1.msra.mxu0 %v146
    %403 = vmatprep.subr.mxu0 %v151
    %404 = vmatpush1.msra.mxu0 %v150
    %405 = vmatprep.subr.mxu0 %v155
    %406 = vmatpush1.msra.mxu0 %v154
    %407 = vmatprep.subr.mxu0 %v159
    %408 = vmatpush1.msra.mxu0 %v158
    %409 = vmatprep.subr.mxu0 %v163
    %410 = vmatpush1.msra.mxu0 %v162
    %411 = vmatprep.subr.mxu0 %v167
    %412 = vmatpush1.msra.mxu0 %v166
    %413 = vmatprep.subr.mxu0 %v171
    %414 = vmatpush1.msra.mxu0 %v170
    %415 = vmatprep.subr.mxu0 %v175
    %416 = vmatpush1.msra.mxu0 %v174
    %417 = vmatprep.subr.mxu0 %v179
    %418 = vmatpush1.msra.mxu0 %v178
    %419 = vmatprep.subr.mxu0 %v183
    %420 = vmatpush1.msra.mxu0 %v182
    %421 = vmatprep.subr.mxu0 %v187
    %422 = vmatpush1.msra.mxu0 %v186
    %423 = vmatprep.subr.mxu0 %v191
    %424 = vmatpush1.msra.mxu0 %v190
    %425 = vmatprep.subr.mxu0 %v195
    %426 = vmatpush1.msra.mxu0 %v194
    %427 = vmatprep.subr.mxu0 0.0
    %428 = vmatpush1.msra.mxu0 0.0
    %429 = vmatprep.subr.mxu0 0.0
    %430 = vmatpush1.msra.mxu0 0.0
    %431 = vmatprep.subr.mxu0 0.0
    %432 = vmatpush1.msra.mxu0 0.0
    %433 = vmatprep.subr.mxu0 0.0
    %434 = vmatpush1.msra.mxu0 0.0
    %435 = vmatprep.subr.mxu0 0.0
    %436 = vmatpush1.msra.mxu0 0.0
    %437 = vmatprep.subr.mxu0 0.0
    %438 = vmatpush1.msra.mxu0 0.0
    %439 = vmatprep.subr.mxu0 0.0
    %440 = vmatpush1.msra.mxu0 0.0
    %441 = vmatprep.subr.mxu0 0.0
    %442 = vmatpush1.msra.mxu0 0.0
    %443 = vmatprep.subr.mxu0 0.0
    %444 = vmatpush1.msra.mxu0 0.0
    %445 = vmatprep.subr.mxu0 0.0
    %446 = vmatpush1.msra.mxu0 0.0
    %447 = vmatprep.subr.mxu0 0.0
    %448 = vmatpush1.msra.mxu0 0.0
    %449 = vmatprep.subr.mxu0 0.0
    %450 = vmatpush1.msra.mxu0 0.0
    %451 = vmatprep.subr.mxu0 0.0
    %452 = vmatpush1.msra.mxu0 0.0
    %453 = vmatprep.subr.mxu0 0.0
    %454 = vmatpush1.msra.mxu0 0.0
    %455 = vmatprep.subr.mxu0 0.0
    %456 = vmatpush1.msra.mxu0 0.0
    %457 = vmatprep.subr.mxu0 0.0
    %458 = vmatpush1.msra.mxu0 0.0
    %459 = vmatprep.mubr.f32.mxu0 0.0
    %460 = vmatmul.mubr.f32.gmra.mrb[0].mxu0 %v202
    %v461 = vpop.f32.mrb[0].mxu0
    %v462 = vadd.f32 0.0, %v461
    %v463 = vpop.f32.mrb[0].mxu0
    %v464 = vadd.f32 0.0, %v463
    %465 = vdwg.mxu0
    %466 = vmatprep.subr.mxu0 %v137
    %467 = vmatpush1.msra.mxu0 %v136
    %468 = vmatprep.subr.mxu0 %v141
    %469 = vmatpush1.msra.mxu0 %v140
    %470 = vmatprep.subr.mxu0 %v145
    %471 = vmatpush1.msra.mxu0 %v144
    %472 = vmatprep.subr.mxu0 %v149
    %473 = vmatpush1.msra.mxu0 %v148
    %474 = vmatprep.subr.mxu0 %v153
    %475 = vmatpush1.msra.mxu0 %v152
    %476 = vmatprep.subr.mxu0 %v157
    %477 = vmatpush1.msra.mxu0 %v156
    %478 = vmatprep.subr.mxu0 %v161
    %479 = vmatpush1.msra.mxu0 %v160
    %480 = vmatprep.subr.mxu0 %v165
    %481 = vmatpush1.msra.mxu0 %v164
    %482 = vmatprep.subr.mxu0 %v169
    %483 = vmatpush1.msra.mxu0 %v168
    %484 = vmatprep.subr.mxu0 %v173
    %485 = vmatpush1.msra.mxu0 %v172
    %486 = vmatprep.subr.mxu0 %v177
    %487 = vmatpush1.msra.mxu0 %v176
    %488 = vmatprep.subr.mxu0 %v181
    %489 = vmatpush1.msra.mxu0 %v180
    %490 = vmatprep.subr.mxu0 %v185
    %491 = vmatpush1.msra.mxu0 %v184
    %492 = vmatprep.subr.mxu0 %v189
    %493 = vmatpush1.msra.mxu0 %v188
    %494 = vmatprep.subr.mxu0 %v193
    %495 = vmatpush1.msra.mxu0 %v192
    %496 = vmatprep.subr.mxu0 %v197
    %497 = vmatpush1.msra.mxu0 %v196
    %498 = vmatprep.subr.mxu0 0.0
    %499 = vmatpush1.msra.mxu0 0.0
    %500 = vmatprep.subr.mxu0 0.0
    %501 = vmatpush1.msra.mxu0 0.0
    %502 = vmatprep.subr.mxu0 0.0
    %503 = vmatpush1.msra.mxu0 0.0
    %504 = vmatprep.subr.mxu0 0.0
    %505 = vmatpush1.msra.mxu0 0.0
    %506 = vmatprep.subr.mxu0 0.0
    %507 = vmatpush1.msra.mxu0 0.0
    %508 = vmatprep.subr.mxu0 0.0
    %509 = vmatpush1.msra.mxu0 0.0
    %510 = vmatprep.subr.mxu0 0.0
    %511 = vmatpush1.msra.mxu0 0.0
    %512 = vmatprep.subr.mxu0 0.0
    %513 = vmatpush1.msra.mxu0 0.0
    %514 = vmatprep.subr.mxu0 0.0
    %515 = vmatpush1.msra.mxu0 0.0
    %516 = vmatprep.subr.mxu0 0.0
    %517 = vmatpush1.msra.mxu0 0.0
    %518 = vmatprep.subr.mxu0 0.0
    %519 = vmatpush1.msra.mxu0 0.0
    %520 = vmatprep.subr.mxu0 0.0
    %521 = vmatpush1.msra.mxu0 0.0
    %522 = vmatprep.subr.mxu0 0.0
    %523 = vmatpush1.msra.mxu0 0.0
    %524 = vmatprep.subr.mxu0 0.0
    %525 = vmatpush1.msra.mxu0 0.0
    %526 = vmatprep.subr.mxu0 0.0
    %527 = vmatpush1.msra.mxu0 0.0
    %528 = vmatprep.subr.mxu0 0.0
    %529 = vmatpush1.msra.mxu0 0.0
    %530 = vmatprep.mubr.f32.mxu0 0.0
    %531 = vmatmul.mubr.f32.gmra.mrb[0].mxu0 %v202
    %v532 = vpop.f32.mrb[0].mxu0
    %v533 = vadd.f32 0.0, %v532
    %v534 = vpop.f32.mrb[0].mxu0
    %v535 = vadd.f32 0.0, %v534
    %536 = vdwg.mxu0
    %v537 = vadd.f32 %v212, %v462
    %v538 = vadd.f32 %v213, %v464
    %v539 = vadd.f32 %v214, %v533
    %v540 = vadd.f32 %v215, %v535
    %v541 = vmul.f32 %v537, 0.5
    %v542 = vmul.f32 %v538, 0.5
    %v543 = vtanh.pop %v541
    %v544 = vtanh.pop %v542
    %v545 = vmul.f32 %v543, 0.5
    %v546 = vmul.f32 %v544, 0.5
    %v547 = vadd.f32 %v545, 0.5
    %v548 = vadd.f32 %v546, 0.5
    %v549 = vtanh.pop %v539
    %v550 = vmul.f32 %v540, 0.5
    %v551 = vtanh.pop %v550
    %v552 = vmul.f32 %v551, 0.5
    %v553 = vadd.f32 %v552, 0.5
    %v554 = vmul.f32 %v548, %v203
    %v555 = vmul.f32 %v547, %v549
    %v556 = vadd.f32 %v554, %v555
    %v557 = vtanh.pop %v556
    %v558 = vmul.f32 %v553, %v557
    %v559 = vsub.f32 %v558, %v202
    %v560 = vmul.f32 %v388, %v559
    %v561 = vadd.f32 %v202, %v560
    %v562 = vsub.f32 %v556, %v203
    %v563 = vmul.f32 %v388, %v562
    %v564 = vadd.f32 %v203, %v563
    %s565 = scalar_lea.vmem %s50, 32
    %v566 = vld [vmem:[%s565] sm:$0xff]
    %v567 = vld [vmem:[%s565 + $0x8] sm:$0xff]
    %v568 = vld [vmem:[%s565 + $0x10] sm:$0xff]
    %v569 = vld [vmem:[%s565 + $0x18] sm:$0xff]
    %v570 = vunpack.c.l.bf16 %v566
    %v571 = vunpack.c.h.bf16 %v566
    %v572 = vunpack.c.l.bf16 %v567
    %v573 = vunpack.c.h.bf16 %v567
    %v574 = vunpack.c.l.bf16 %v568
    %v575 = vunpack.c.h.bf16 %v568
    %v576 = vunpack.c.l.bf16 %v569
    %v577 = vunpack.c.h.bf16 %v569
    %s578 = sadd.s32 %s199, 1
    %v579 = vstv %s578
    %vm580 = vcmp.lt.s32.totalorder %v579, %v198
    %v581 = vsel %vm580, 1, 0
    %v582 = vcvt.s32.f32 %v581
    %583 = vmatprep.subr.mxu0 %v70
    %584 = vmatpush1.msra.mxu0 %v69
    %585 = vmatprep.subr.mxu0 %v74
    %586 = vmatpush1.msra.mxu0 %v73
    %587 = vmatprep.subr.mxu0 %v78
    %588 = vmatpush1.msra.mxu0 %v77
    %589 = vmatprep.subr.mxu0 %v82
    %590 = vmatpush1.msra.mxu0 %v81
    %591 = vmatprep.subr.mxu0 %v86
    %592 = vmatpush1.msra.mxu0 %v85
    %593 = vmatprep.subr.mxu0 %v90
    %594 = vmatpush1.msra.mxu0 %v89
    %595 = vmatprep.subr.mxu0 %v94
    %596 = vmatpush1.msra.mxu0 %v93
    %597 = vmatprep.subr.mxu0 %v98
    %598 = vmatpush1.msra.mxu0 %v97
    %599 = vmatprep.subr.mxu0 %v102
    %600 = vmatpush1.msra.mxu0 %v101
    %601 = vmatprep.subr.mxu0 %v106
    %602 = vmatpush1.msra.mxu0 %v105
    %603 = vmatprep.subr.mxu0 %v110
    %604 = vmatpush1.msra.mxu0 %v109
    %605 = vmatprep.subr.mxu0 %v114
    %606 = vmatpush1.msra.mxu0 %v113
    %607 = vmatprep.subr.mxu0 %v118
    %608 = vmatpush1.msra.mxu0 %v117
    %609 = vmatprep.subr.mxu0 %v122
    %610 = vmatpush1.msra.mxu0 %v121
    %611 = vmatprep.subr.mxu0 %v126
    %612 = vmatpush1.msra.mxu0 %v125
    %613 = vmatprep.subr.mxu0 %v130
    %614 = vmatpush1.msra.mxu0 %v129
    %615 = vmatprep.subr.mxu0 0.0
    %616 = vmatpush1.msra.mxu0 0.0
    %617 = vmatprep.subr.mxu0 0.0
    %618 = vmatpush1.msra.mxu0 0.0
    %619 = vmatprep.subr.mxu0 0.0
    %620 = vmatpush1.msra.mxu0 0.0
    %621 = vmatprep.subr.mxu0 0.0
    %622 = vmatpush1.msra.mxu0 0.0
    %623 = vmatprep.subr.mxu0 0.0
    %624 = vmatpush1.msra.mxu0 0.0
    %625 = vmatprep.subr.mxu0 0.0
    %626 = vmatpush1.msra.mxu0 0.0
    %627 = vmatprep.subr.mxu0 0.0
    %628 = vmatpush1.msra.mxu0 0.0
    %629 = vmatprep.subr.mxu0 0.0
    %630 = vmatpush1.msra.mxu0 0.0
    %631 = vmatprep.subr.mxu0 0.0
    %632 = vmatpush1.msra.mxu0 0.0
    %633 = vmatprep.subr.mxu0 0.0
    %634 = vmatpush1.msra.mxu0 0.0
    %635 = vmatprep.subr.mxu0 0.0
    %636 = vmatpush1.msra.mxu0 0.0
    %637 = vmatprep.subr.mxu0 0.0
    %638 = vmatpush1.msra.mxu0 0.0
    %639 = vmatprep.subr.mxu0 0.0
    %640 = vmatpush1.msra.mxu0 0.0
    %641 = vmatprep.subr.mxu0 0.0
    %642 = vmatpush1.msra.mxu0 0.0
    %643 = vmatprep.subr.mxu0 0.0
    %644 = vmatpush1.msra.mxu0 0.0
    %645 = vmatprep.subr.mxu0 0.0
    %646 = vmatpush1.msra.mxu0 0.0
    %647 = vmatprep.mubr.f32.mxu0 0.0
    %648 = vmatmul.mubr.f32.gmra.mrb[0].mxu0 %v391
    %v649 = vpop.f32.mrb[0].mxu0
    %v650 = vadd.f32 0.0, %v649
    %v651 = vpop.f32.mrb[0].mxu0
    %v652 = vadd.f32 0.0, %v651
    %653 = vdwg.mxu0
    %654 = vmatprep.subr.mxu0 %v72
    %655 = vmatpush1.msra.mxu0 %v71
    %656 = vmatprep.subr.mxu0 %v76
    %657 = vmatpush1.msra.mxu0 %v75
    %658 = vmatprep.subr.mxu0 %v80
    %659 = vmatpush1.msra.mxu0 %v79
    %660 = vmatprep.subr.mxu0 %v84
    %661 = vmatpush1.msra.mxu0 %v83
    %662 = vmatprep.subr.mxu0 %v88
    %663 = vmatpush1.msra.mxu0 %v87
    %664 = vmatprep.subr.mxu0 %v92
    %665 = vmatpush1.msra.mxu0 %v91
    %666 = vmatprep.subr.mxu0 %v96
    %667 = vmatpush1.msra.mxu0 %v95
    %668 = vmatprep.subr.mxu0 %v100
    %669 = vmatpush1.msra.mxu0 %v99
    %670 = vmatprep.subr.mxu0 %v104
    %671 = vmatpush1.msra.mxu0 %v103
    %672 = vmatprep.subr.mxu0 %v108
    %673 = vmatpush1.msra.mxu0 %v107
    %674 = vmatprep.subr.mxu0 %v112
    %675 = vmatpush1.msra.mxu0 %v111
    %676 = vmatprep.subr.mxu0 %v116
    %677 = vmatpush1.msra.mxu0 %v115
    %678 = vmatprep.subr.mxu0 %v120
    %679 = vmatpush1.msra.mxu0 %v119
    %680 = vmatprep.subr.mxu0 %v124
    %681 = vmatpush1.msra.mxu0 %v123
    %682 = vmatprep.subr.mxu0 %v128
    %683 = vmatpush1.msra.mxu0 %v127
    %684 = vmatprep.subr.mxu0 %v132
    %685 = vmatpush1.msra.mxu0 %v131
    %686 = vmatprep.subr.mxu0 0.0
    %687 = vmatpush1.msra.mxu0 0.0
    %688 = vmatprep.subr.mxu0 0.0
    %689 = vmatpush1.msra.mxu0 0.0
    %690 = vmatprep.subr.mxu0 0.0
    %691 = vmatpush1.msra.mxu0 0.0
    %692 = vmatprep.subr.mxu0 0.0
    %693 = vmatpush1.msra.mxu0 0.0
    %694 = vmatprep.subr.mxu0 0.0
    %695 = vmatpush1.msra.mxu0 0.0
    %696 = vmatprep.subr.mxu0 0.0
    %697 = vmatpush1.msra.mxu0 0.0
    %698 = vmatprep.subr.mxu0 0.0
    %699 = vmatpush1.msra.mxu0 0.0
    %700 = vmatprep.subr.mxu0 0.0
    %701 = vmatpush1.msra.mxu0 0.0
    %702 = vmatprep.subr.mxu0 0.0
    %703 = vmatpush1.msra.mxu0 0.0
    %704 = vmatprep.subr.mxu0 0.0
    %705 = vmatpush1.msra.mxu0 0.0
    %706 = vmatprep.subr.mxu0 0.0
    %707 = vmatpush1.msra.mxu0 0.0
    %708 = vmatprep.subr.mxu0 0.0
    %709 = vmatpush1.msra.mxu0 0.0
    %710 = vmatprep.subr.mxu0 0.0
    %711 = vmatpush1.msra.mxu0 0.0
    %712 = vmatprep.subr.mxu0 0.0
    %713 = vmatpush1.msra.mxu0 0.0
    %714 = vmatprep.subr.mxu0 0.0
    %715 = vmatpush1.msra.mxu0 0.0
    %716 = vmatprep.subr.mxu0 0.0
    %717 = vmatpush1.msra.mxu0 0.0
    %718 = vmatprep.mubr.f32.mxu0 0.0
    %719 = vmatmul.mubr.f32.gmra.mrb[0].mxu0 %v391
    %v720 = vpop.f32.mrb[0].mxu0
    %v721 = vadd.f32 0.0, %v720
    %v722 = vpop.f32.mrb[0].mxu0
    %v723 = vadd.f32 0.0, %v722
    %724 = vdwg.mxu0
    %v725 = vadd.f32 %v570, %v650
    %v726 = vadd.f32 %v571, %v652
    %v727 = vadd.f32 %v572, %v721
    %v728 = vadd.f32 %v573, %v723
    %v729 = vmul.f32 %v725, 0.5
    %v730 = vmul.f32 %v726, 0.5
    %v731 = vtanh.pop %v729
    %v732 = vtanh.pop %v730
    %v733 = vmul.f32 %v731, 0.5
    %v734 = vmul.f32 %v732, 0.5
    %v735 = vadd.f32 %v733, 0.5
    %v736 = vadd.f32 %v734, 0.5
    %v737 = vtanh.pop %v727
    %v738 = vmul.f32 %v728, 0.5
    %v739 = vtanh.pop %v738
    %v740 = vmul.f32 %v739, 0.5
    %v741 = vadd.f32 %v740, 0.5
    %v742 = vmul.f32 %v736, %v394
    %v743 = vmul.f32 %v735, %v737
    %v744 = vadd.f32 %v742, %v743
    %v745 = vtanh.pop %v744
    %v746 = vmul.f32 %v741, %v745
    %v747 = vsub.f32 %v746, %v391
    %749 = vset.pattern.permute.xlu0 0
    %750 = vperm.xlu0 %749, %v582
    %v751 = vpop.permute.xlu0 %750
    %v753 = vmul.f32 %v751, %v747
    %v754 = vadd.f32 %v391, %v753
    %v755 = vsub.f32 %v744, %v394
    %v756 = vmul.f32 %v751, %v755
    %v757 = vadd.f32 %v394, %v756
    %758 = vmatprep.subr.mxu0 %v135
    %759 = vmatpush1.msra.mxu0 %v134
    %760 = vmatprep.subr.mxu0 %v139
    %761 = vmatpush1.msra.mxu0 %v138
    %762 = vmatprep.subr.mxu0 %v143
    %763 = vmatpush1.msra.mxu0 %v142
    %764 = vmatprep.subr.mxu0 %v147
    %765 = vmatpush1.msra.mxu0 %v146
    %766 = vmatprep.subr.mxu0 %v151
    %767 = vmatpush1.msra.mxu0 %v150
    %768 = vmatprep.subr.mxu0 %v155
    %769 = vmatpush1.msra.mxu0 %v154
    %770 = vmatprep.subr.mxu0 %v159
    %771 = vmatpush1.msra.mxu0 %v158
    %772 = vmatprep.subr.mxu0 %v163
    %773 = vmatpush1.msra.mxu0 %v162
    %774 = vmatprep.subr.mxu0 %v167
    %775 = vmatpush1.msra.mxu0 %v166
    %776 = vmatprep.subr.mxu0 %v171
    %777 = vmatpush1.msra.mxu0 %v170
    %778 = vmatprep.subr.mxu0 %v175
    %779 = vmatpush1.msra.mxu0 %v174
    %780 = vmatprep.subr.mxu0 %v179
    %781 = vmatpush1.msra.mxu0 %v178
    %782 = vmatprep.subr.mxu0 %v183
    %783 = vmatpush1.msra.mxu0 %v182
    %784 = vmatprep.subr.mxu0 %v187
    %785 = vmatpush1.msra.mxu0 %v186
    %786 = vmatprep.subr.mxu0 %v191
    %787 = vmatpush1.msra.mxu0 %v190
    %788 = vmatprep.subr.mxu0 %v195
    %789 = vmatpush1.msra.mxu0 %v194
    %790 = vmatprep.subr.mxu0 0.0
    %791 = vmatpush1.msra.mxu0 0.0
    %792 = vmatprep.subr.mxu0 0.0
    %793 = vmatpush1.msra.mxu0 0.0
    %794 = vmatprep.subr.mxu0 0.0
    %795 = vmatpush1.msra.mxu0 0.0
    %796 = vmatprep.subr.mxu0 0.0
    %797 = vmatpush1.msra.mxu0 0.0
    %798 = vmatprep.subr.mxu0 0.0
    %799 = vmatpush1.msra.mxu0 0.0
    %800 = vmatprep.subr.mxu0 0.0
    %801 = vmatpush1.msra.mxu0 0.0
    %802 = vmatprep.subr.mxu0 0.0
    %803 = vmatpush1.msra.mxu0 0.0
    %804 = vmatprep.subr.mxu0 0.0
    %805 = vmatpush1.msra.mxu0 0.0
    %806 = vmatprep.subr.mxu0 0.0
    %807 = vmatpush1.msra.mxu0 0.0
    %808 = vmatprep.subr.mxu0 0.0
    %809 = vmatpush1.msra.mxu0 0.0
    %810 = vmatprep.subr.mxu0 0.0
    %811 = vmatpush1.msra.mxu0 0.0
    %812 = vmatprep.subr.mxu0 0.0
    %813 = vmatpush1.msra.mxu0 0.0
    %814 = vmatprep.subr.mxu0 0.0
    %815 = vmatpush1.msra.mxu0 0.0
    %816 = vmatprep.subr.mxu0 0.0
    %817 = vmatpush1.msra.mxu0 0.0
    %818 = vmatprep.subr.mxu0 0.0
    %819 = vmatpush1.msra.mxu0 0.0
    %820 = vmatprep.subr.mxu0 0.0
    %821 = vmatpush1.msra.mxu0 0.0
    %822 = vmatprep.mubr.f32.mxu0 0.0
    %823 = vmatmul.mubr.f32.gmra.mrb[0].mxu0 %v561
    %v824 = vpop.f32.mrb[0].mxu0
    %v825 = vadd.f32 0.0, %v824
    %v826 = vpop.f32.mrb[0].mxu0
    %v827 = vadd.f32 0.0, %v826
    %828 = vdwg.mxu0
    %829 = vmatprep.subr.mxu0 %v137
    %830 = vmatpush1.msra.mxu0 %v136
    %831 = vmatprep.subr.mxu0 %v141
    %832 = vmatpush1.msra.mxu0 %v140
    %833 = vmatprep.subr.mxu0 %v145
    %834 = vmatpush1.msra.mxu0 %v144
    %835 = vmatprep.subr.mxu0 %v149
    %836 = vmatpush1.msra.mxu0 %v148
    %837 = vmatprep.subr.mxu0 %v153
    %838 = vmatpush1.msra.mxu0 %v152
    %839 = vmatprep.subr.mxu0 %v157
    %840 = vmatpush1.msra.mxu0 %v156
    %841 = vmatprep.subr.mxu0 %v161
    %842 = vmatpush1.msra.mxu0 %v160
    %843 = vmatprep.subr.mxu0 %v165
    %844 = vmatpush1.msra.mxu0 %v164
    %845 = vmatprep.subr.mxu0 %v169
    %846 = vmatpush1.msra.mxu0 %v168
    %847 = vmatprep.subr.mxu0 %v173
    %848 = vmatpush1.msra.mxu0 %v172
    %849 = vmatprep.subr.mxu0 %v177
    %850 = vmatpush1.msra.mxu0 %v176
    %851 = vmatprep.subr.mxu0 %v181
    %852 = vmatpush1.msra.mxu0 %v180
    %853 = vmatprep.subr.mxu0 %v185
    %854 = vmatpush1.msra.mxu0 %v184
    %855 = vmatprep.subr.mxu0 %v189
    %856 = vmatpush1.msra.mxu0 %v188
    %857 = vmatprep.subr.mxu0 %v193
    %858 = vmatpush1.msra.mxu0 %v192
    %859 = vmatprep.subr.mxu0 %v197
    %860 = vmatpush1.msra.mxu0 %v196
    %861 = vmatprep.subr.mxu0 0.0
    %862 = vmatpush1.msra.mxu0 0.0
    %863 = vmatprep.subr.mxu0 0.0
    %864 = vmatpush1.msra.mxu0 0.0
    %865 = vmatprep.subr.mxu0 0.0
    %866 = vmatpush1.msra.mxu0 0.0
    %867 = vmatprep.subr.mxu0 0.0
    %868 = vmatpush1.msra.mxu0 0.0
    %869 = vmatprep.subr.mxu0 0.0
    %870 = vmatpush1.msra.mxu0 0.0
    %871 = vmatprep.subr.mxu0 0.0
    %872 = vmatpush1.msra.mxu0 0.0
    %873 = vmatprep.subr.mxu0 0.0
    %874 = vmatpush1.msra.mxu0 0.0
    %875 = vmatprep.subr.mxu0 0.0
    %876 = vmatpush1.msra.mxu0 0.0
    %877 = vmatprep.subr.mxu0 0.0
    %878 = vmatpush1.msra.mxu0 0.0
    %879 = vmatprep.subr.mxu0 0.0
    %880 = vmatpush1.msra.mxu0 0.0
    %881 = vmatprep.subr.mxu0 0.0
    %882 = vmatpush1.msra.mxu0 0.0
    %883 = vmatprep.subr.mxu0 0.0
    %884 = vmatpush1.msra.mxu0 0.0
    %885 = vmatprep.subr.mxu0 0.0
    %886 = vmatpush1.msra.mxu0 0.0
    %887 = vmatprep.subr.mxu0 0.0
    %888 = vmatpush1.msra.mxu0 0.0
    %889 = vmatprep.subr.mxu0 0.0
    %890 = vmatpush1.msra.mxu0 0.0
    %891 = vmatprep.subr.mxu0 0.0
    %892 = vmatpush1.msra.mxu0 0.0
    %893 = vmatprep.mubr.f32.mxu0 0.0
    %894 = vmatmul.mubr.f32.gmra.mrb[0].mxu0 %v561
    %v895 = vpop.f32.mrb[0].mxu0
    %v896 = vadd.f32 0.0, %v895
    %v897 = vpop.f32.mrb[0].mxu0
    %v898 = vadd.f32 0.0, %v897
    %899 = vdwg.mxu0
    %v900 = vadd.f32 %v574, %v825
    %v901 = vadd.f32 %v575, %v827
    %v902 = vadd.f32 %v576, %v896
    %v903 = vadd.f32 %v577, %v898
    %v904 = vmul.f32 %v900, 0.5
    %v905 = vmul.f32 %v901, 0.5
    %v906 = vtanh.pop %v904
    %v907 = vtanh.pop %v905
    %v908 = vmul.f32 %v906, 0.5
    %v909 = vmul.f32 %v907, 0.5
    %v910 = vadd.f32 %v908, 0.5
    %v911 = vadd.f32 %v909, 0.5
    %v912 = vtanh.pop %v902
    %v913 = vmul.f32 %v903, 0.5
    %v914 = vtanh.pop %v913
    %v915 = vmul.f32 %v914, 0.5
    %v916 = vadd.f32 %v915, 0.5
    %v917 = vmul.f32 %v911, %v564
    %v918 = vmul.f32 %v910, %v912
    %v919 = vadd.f32 %v917, %v918
    %v920 = vtanh.pop %v919
    %v921 = vmul.f32 %v916, %v920
    %v922 = vsub.f32 %v921, %v561
    %v923 = vmul.f32 %v751, %v922
    %v924 = vadd.f32 %v561, %v923
    %v925 = vsub.f32 %v919, %v564
    %v926 = vmul.f32 %v751, %v925
    %v927 = vadd.f32 %v564, %v926
    %s928 = scalar_lea.vmem %s50, 64
    %v929 = vld [vmem:[%s928] sm:$0xff]
    %v930 = vld [vmem:[%s928 + $0x8] sm:$0xff]
    %v931 = vld [vmem:[%s928 + $0x10] sm:$0xff]
    %v932 = vld [vmem:[%s928 + $0x18] sm:$0xff]
    %v933 = vunpack.c.l.bf16 %v929
    %v934 = vunpack.c.h.bf16 %v929
    %v935 = vunpack.c.l.bf16 %v930
    %v936 = vunpack.c.h.bf16 %v930
    %v937 = vunpack.c.l.bf16 %v931
    %v938 = vunpack.c.h.bf16 %v931
    %v939 = vunpack.c.l.bf16 %v932
    %v940 = vunpack.c.h.bf16 %v932
    %s941 = sadd.s32 %s199, 2
    %v942 = vstv %s941
    %vm943 = vcmp.lt.s32.totalorder %v942, %v198
    %v944 = vsel %vm943, 1, 0
    %v945 = vcvt.s32.f32 %v944
    %946 = vmatprep.subr.mxu0 %v70
    %947 = vmatpush1.msra.mxu0 %v69
    %948 = vmatprep.subr.mxu0 %v74
    %949 = vmatpush1.msra.mxu0 %v73
    %950 = vmatprep.subr.mxu0 %v78
    %951 = vmatpush1.msra.mxu0 %v77
    %952 = vmatprep.subr.mxu0 %v82
    %953 = vmatpush1.msra.mxu0 %v81
    %954 = vmatprep.subr.mxu0 %v86
    %955 = vmatpush1.msra.mxu0 %v85
    %956 = vmatprep.subr.mxu0 %v90
    %957 = vmatpush1.msra.mxu0 %v89
    %958 = vmatprep.subr.mxu0 %v94
    %959 = vmatpush1.msra.mxu0 %v93
    %960 = vmatprep.subr.mxu0 %v98
    %961 = vmatpush1.msra.mxu0 %v97
    %962 = vmatprep.subr.mxu0 %v102
    %963 = vmatpush1.msra.mxu0 %v101
    %964 = vmatprep.subr.mxu0 %v106
    %965 = vmatpush1.msra.mxu0 %v105
    %966 = vmatprep.subr.mxu0 %v110
    %967 = vmatpush1.msra.mxu0 %v109
    %968 = vmatprep.subr.mxu0 %v114
    %969 = vmatpush1.msra.mxu0 %v113
    %970 = vmatprep.subr.mxu0 %v118
    %971 = vmatpush1.msra.mxu0 %v117
    %972 = vmatprep.subr.mxu0 %v122
    %973 = vmatpush1.msra.mxu0 %v121
    %974 = vmatprep.subr.mxu0 %v126
    %975 = vmatpush1.msra.mxu0 %v125
    %976 = vmatprep.subr.mxu0 %v130
    %977 = vmatpush1.msra.mxu0 %v129
    %978 = vmatprep.subr.mxu0 0.0
    %979 = vmatpush1.msra.mxu0 0.0
    %980 = vmatprep.subr.mxu0 0.0
    %981 = vmatpush1.msra.mxu0 0.0
    %982 = vmatprep.subr.mxu0 0.0
    %983 = vmatpush1.msra.mxu0 0.0
    %984 = vmatprep.subr.mxu0 0.0
    %985 = vmatpush1.msra.mxu0 0.0
    %986 = vmatprep.subr.mxu0 0.0
    %987 = vmatpush1.msra.mxu0 0.0
    %988 = vmatprep.subr.mxu0 0.0
    %989 = vmatpush1.msra.mxu0 0.0
    %990 = vmatprep.subr.mxu0 0.0
    %991 = vmatpush1.msra.mxu0 0.0
    %992 = vmatprep.subr.mxu0 0.0
    %993 = vmatpush1.msra.mxu0 0.0
    %994 = vmatprep.subr.mxu0 0.0
    %995 = vmatpush1.msra.mxu0 0.0
    %996 = vmatprep.subr.mxu0 0.0
    %997 = vmatpush1.msra.mxu0 0.0
    %998 = vmatprep.subr.mxu0 0.0
    %999 = vmatpush1.msra.mxu0 0.0
    %1000 = vmatprep.subr.mxu0 0.0
    %1001 = vmatpush1.msra.mxu0 0.0
    %1002 = vmatprep.subr.mxu0 0.0
    %1003 = vmatpush1.msra.mxu0 0.0
    %1004 = vmatprep.subr.mxu0 0.0
    %1005 = vmatpush1.msra.mxu0 0.0
    %1006 = vmatprep.subr.mxu0 0.0
    %1007 = vmatpush1.msra.mxu0 0.0
    %1008 = vmatprep.subr.mxu0 0.0
    %1009 = vmatpush1.msra.mxu0 0.0
    %1010 = vmatprep.mubr.f32.mxu0 0.0
    %1011 = vmatmul.mubr.f32.gmra.mrb[0].mxu0 %v754
    %v1012 = vpop.f32.mrb[0].mxu0
    %v1013 = vadd.f32 0.0, %v1012
    %v1014 = vpop.f32.mrb[0].mxu0
    %v1015 = vadd.f32 0.0, %v1014
    %1016 = vdwg.mxu0
    %1017 = vmatprep.subr.mxu0 %v72
    %1018 = vmatpush1.msra.mxu0 %v71
    %1019 = vmatprep.subr.mxu0 %v76
    %1020 = vmatpush1.msra.mxu0 %v75
    %1021 = vmatprep.subr.mxu0 %v80
    %1022 = vmatpush1.msra.mxu0 %v79
    %1023 = vmatprep.subr.mxu0 %v84
    %1024 = vmatpush1.msra.mxu0 %v83
    %1025 = vmatprep.subr.mxu0 %v88
    %1026 = vmatpush1.msra.mxu0 %v87
    %1027 = vmatprep.subr.mxu0 %v92
    %1028 = vmatpush1.msra.mxu0 %v91
    %1029 = vmatprep.subr.mxu0 %v96
    %1030 = vmatpush1.msra.mxu0 %v95
    %1031 = vmatprep.subr.mxu0 %v100
    %1032 = vmatpush1.msra.mxu0 %v99
    %1033 = vmatprep.subr.mxu0 %v104
    %1034 = vmatpush1.msra.mxu0 %v103
    %1035 = vmatprep.subr.mxu0 %v108
    %1036 = vmatpush1.msra.mxu0 %v107
    %1037 = vmatprep.subr.mxu0 %v112
    %1038 = vmatpush1.msra.mxu0 %v111
    %1039 = vmatprep.subr.mxu0 %v116
    %1040 = vmatpush1.msra.mxu0 %v115
    %1041 = vmatprep.subr.mxu0 %v120
    %1042 = vmatpush1.msra.mxu0 %v119
    %1043 = vmatprep.subr.mxu0 %v124
    %1044 = vmatpush1.msra.mxu0 %v123
    %1045 = vmatprep.subr.mxu0 %v128
    %1046 = vmatpush1.msra.mxu0 %v127
    %1047 = vmatprep.subr.mxu0 %v132
    %1048 = vmatpush1.msra.mxu0 %v131
    %1049 = vmatprep.subr.mxu0 0.0
    %1050 = vmatpush1.msra.mxu0 0.0
    %1051 = vmatprep.subr.mxu0 0.0
    %1052 = vmatpush1.msra.mxu0 0.0
    %1053 = vmatprep.subr.mxu0 0.0
    %1054 = vmatpush1.msra.mxu0 0.0
    %1055 = vmatprep.subr.mxu0 0.0
    %1056 = vmatpush1.msra.mxu0 0.0
    %1057 = vmatprep.subr.mxu0 0.0
    %1058 = vmatpush1.msra.mxu0 0.0
    %1059 = vmatprep.subr.mxu0 0.0
    %1060 = vmatpush1.msra.mxu0 0.0
    %1061 = vmatprep.subr.mxu0 0.0
    %1062 = vmatpush1.msra.mxu0 0.0
    %1063 = vmatprep.subr.mxu0 0.0
    %1064 = vmatpush1.msra.mxu0 0.0
    %1065 = vmatprep.subr.mxu0 0.0
    %1066 = vmatpush1.msra.mxu0 0.0
    %1067 = vmatprep.subr.mxu0 0.0
    %1068 = vmatpush1.msra.mxu0 0.0
    %1069 = vmatprep.subr.mxu0 0.0
    %1070 = vmatpush1.msra.mxu0 0.0
    %1071 = vmatprep.subr.mxu0 0.0
    %1072 = vmatpush1.msra.mxu0 0.0
    %1073 = vmatprep.subr.mxu0 0.0
    %1074 = vmatpush1.msra.mxu0 0.0
    %1075 = vmatprep.subr.mxu0 0.0
    %1076 = vmatpush1.msra.mxu0 0.0
    %1077 = vmatprep.subr.mxu0 0.0
    %1078 = vmatpush1.msra.mxu0 0.0
    %1079 = vmatprep.subr.mxu0 0.0
    %1080 = vmatpush1.msra.mxu0 0.0
    %1081 = vmatprep.mubr.f32.mxu0 0.0
    %1082 = vmatmul.mubr.f32.gmra.mrb[0].mxu0 %v754
    %v1083 = vpop.f32.mrb[0].mxu0
    %v1084 = vadd.f32 0.0, %v1083
    %v1085 = vpop.f32.mrb[0].mxu0
    %v1086 = vadd.f32 0.0, %v1085
    %1087 = vdwg.mxu0
    %v1088 = vadd.f32 %v933, %v1013
    %v1089 = vadd.f32 %v934, %v1015
    %v1090 = vadd.f32 %v935, %v1084
    %v1091 = vadd.f32 %v936, %v1086
    %v1092 = vmul.f32 %v1088, 0.5
    %v1093 = vmul.f32 %v1089, 0.5
    %v1094 = vtanh.pop %v1092
    %v1095 = vtanh.pop %v1093
    %v1096 = vmul.f32 %v1094, 0.5
    %v1097 = vmul.f32 %v1095, 0.5
    %v1098 = vadd.f32 %v1096, 0.5
    %v1099 = vadd.f32 %v1097, 0.5
    %v1100 = vtanh.pop %v1090
    %v1101 = vmul.f32 %v1091, 0.5
    %v1102 = vtanh.pop %v1101
    %v1103 = vmul.f32 %v1102, 0.5
    %v1104 = vadd.f32 %v1103, 0.5
    %v1105 = vmul.f32 %v1099, %v757
    %v1106 = vmul.f32 %v1098, %v1100
    %v1107 = vadd.f32 %v1105, %v1106
    %v1108 = vtanh.pop %v1107
    %v1109 = vmul.f32 %v1104, %v1108
    %v1110 = vsub.f32 %v1109, %v754
    %1112 = vset.pattern.permute.xlu0 0
    %1113 = vperm.xlu0 %1112, %v945
    %v1114 = vpop.permute.xlu0 %1113
    %v1116 = vmul.f32 %v1114, %v1110
    %v1117 = vadd.f32 %v754, %v1116
    %v1118 = vsub.f32 %v1107, %v757
    %v1119 = vmul.f32 %v1114, %v1118
    %v1120 = vadd.f32 %v757, %v1119
    %1121 = vmatprep.subr.mxu0 %v135
    %1122 = vmatpush1.msra.mxu0 %v134
    %1123 = vmatprep.subr.mxu0 %v139
    %1124 = vmatpush1.msra.mxu0 %v138
    %1125 = vmatprep.subr.mxu0 %v143
    %1126 = vmatpush1.msra.mxu0 %v142
    %1127 = vmatprep.subr.mxu0 %v147
    %1128 = vmatpush1.msra.mxu0 %v146
    %1129 = vmatprep.subr.mxu0 %v151
    %1130 = vmatpush1.msra.mxu0 %v150
    %1131 = vmatprep.subr.mxu0 %v155
    %1132 = vmatpush1.msra.mxu0 %v154
    %1133 = vmatprep.subr.mxu0 %v159
    %1134 = vmatpush1.msra.mxu0 %v158
    %1135 = vmatprep.subr.mxu0 %v163
    %1136 = vmatpush1.msra.mxu0 %v162
    %1137 = vmatprep.subr.mxu0 %v167
    %1138 = vmatpush1.msra.mxu0 %v166
    %1139 = vmatprep.subr.mxu0 %v171
    %1140 = vmatpush1.msra.mxu0 %v170
    %1141 = vmatprep.subr.mxu0 %v175
    %1142 = vmatpush1.msra.mxu0 %v174
    %1143 = vmatprep.subr.mxu0 %v179
    %1144 = vmatpush1.msra.mxu0 %v178
    %1145 = vmatprep.subr.mxu0 %v183
    %1146 = vmatpush1.msra.mxu0 %v182
    %1147 = vmatprep.subr.mxu0 %v187
    %1148 = vmatpush1.msra.mxu0 %v186
    %1149 = vmatprep.subr.mxu0 %v191
    %1150 = vmatpush1.msra.mxu0 %v190
    %1151 = vmatprep.subr.mxu0 %v195
    %1152 = vmatpush1.msra.mxu0 %v194
    %1153 = vmatprep.subr.mxu0 0.0
    %1154 = vmatpush1.msra.mxu0 0.0
    %1155 = vmatprep.subr.mxu0 0.0
    %1156 = vmatpush1.msra.mxu0 0.0
    %1157 = vmatprep.subr.mxu0 0.0
    %1158 = vmatpush1.msra.mxu0 0.0
    %1159 = vmatprep.subr.mxu0 0.0
    %1160 = vmatpush1.msra.mxu0 0.0
    %1161 = vmatprep.subr.mxu0 0.0
    %1162 = vmatpush1.msra.mxu0 0.0
    %1163 = vmatprep.subr.mxu0 0.0
    %1164 = vmatpush1.msra.mxu0 0.0
    %1165 = vmatprep.subr.mxu0 0.0
    %1166 = vmatpush1.msra.mxu0 0.0
    %1167 = vmatprep.subr.mxu0 0.0
    %1168 = vmatpush1.msra.mxu0 0.0
    %1169 = vmatprep.subr.mxu0 0.0
    %1170 = vmatpush1.msra.mxu0 0.0
    %1171 = vmatprep.subr.mxu0 0.0
    %1172 = vmatpush1.msra.mxu0 0.0
    %1173 = vmatprep.subr.mxu0 0.0
    %1174 = vmatpush1.msra.mxu0 0.0
    %1175 = vmatprep.subr.mxu0 0.0
    %1176 = vmatpush1.msra.mxu0 0.0
    %1177 = vmatprep.subr.mxu0 0.0
    %1178 = vmatpush1.msra.mxu0 0.0
    %1179 = vmatprep.subr.mxu0 0.0
    %1180 = vmatpush1.msra.mxu0 0.0
    %1181 = vmatprep.subr.mxu0 0.0
    %1182 = vmatpush1.msra.mxu0 0.0
    %1183 = vmatprep.subr.mxu0 0.0
    %1184 = vmatpush1.msra.mxu0 0.0
    %1185 = vmatprep.mubr.f32.mxu0 0.0
    %1186 = vmatmul.mubr.f32.gmra.mrb[0].mxu0 %v924
    %v1187 = vpop.f32.mrb[0].mxu0
    %v1188 = vadd.f32 0.0, %v1187
    %v1189 = vpop.f32.mrb[0].mxu0
    %v1190 = vadd.f32 0.0, %v1189
    %1191 = vdwg.mxu0
    %1192 = vmatprep.subr.mxu0 %v137
    %1193 = vmatpush1.msra.mxu0 %v136
    %1194 = vmatprep.subr.mxu0 %v141
    %1195 = vmatpush1.msra.mxu0 %v140
    %1196 = vmatprep.subr.mxu0 %v145
    %1197 = vmatpush1.msra.mxu0 %v144
    %1198 = vmatprep.subr.mxu0 %v149
    %1199 = vmatpush1.msra.mxu0 %v148
    %1200 = vmatprep.subr.mxu0 %v153
    %1201 = vmatpush1.msra.mxu0 %v152
    %1202 = vmatprep.subr.mxu0 %v157
    %1203 = vmatpush1.msra.mxu0 %v156
    %1204 = vmatprep.subr.mxu0 %v161
    %1205 = vmatpush1.msra.mxu0 %v160
    %1206 = vmatprep.subr.mxu0 %v165
    %1207 = vmatpush1.msra.mxu0 %v164
    %1208 = vmatprep.subr.mxu0 %v169
    %1209 = vmatpush1.msra.mxu0 %v168
    %1210 = vmatprep.subr.mxu0 %v173
    %1211 = vmatpush1.msra.mxu0 %v172
    %1212 = vmatprep.subr.mxu0 %v177
    %1213 = vmatpush1.msra.mxu0 %v176
    %1214 = vmatprep.subr.mxu0 %v181
    %1215 = vmatpush1.msra.mxu0 %v180
    %1216 = vmatprep.subr.mxu0 %v185
    %1217 = vmatpush1.msra.mxu0 %v184
    %1218 = vmatprep.subr.mxu0 %v189
    %1219 = vmatpush1.msra.mxu0 %v188
    %1220 = vmatprep.subr.mxu0 %v193
    %1221 = vmatpush1.msra.mxu0 %v192
    %1222 = vmatprep.subr.mxu0 %v197
    %1223 = vmatpush1.msra.mxu0 %v196
    %1224 = vmatprep.subr.mxu0 0.0
    %1225 = vmatpush1.msra.mxu0 0.0
    %1226 = vmatprep.subr.mxu0 0.0
    %1227 = vmatpush1.msra.mxu0 0.0
    %1228 = vmatprep.subr.mxu0 0.0
    %1229 = vmatpush1.msra.mxu0 0.0
    %1230 = vmatprep.subr.mxu0 0.0
    %1231 = vmatpush1.msra.mxu0 0.0
    %1232 = vmatprep.subr.mxu0 0.0
    %1233 = vmatpush1.msra.mxu0 0.0
    %1234 = vmatprep.subr.mxu0 0.0
    %1235 = vmatpush1.msra.mxu0 0.0
    %1236 = vmatprep.subr.mxu0 0.0
    %1237 = vmatpush1.msra.mxu0 0.0
    %1238 = vmatprep.subr.mxu0 0.0
    %1239 = vmatpush1.msra.mxu0 0.0
    %1240 = vmatprep.subr.mxu0 0.0
    %1241 = vmatpush1.msra.mxu0 0.0
    %1242 = vmatprep.subr.mxu0 0.0
    %1243 = vmatpush1.msra.mxu0 0.0
    %1244 = vmatprep.subr.mxu0 0.0
    %1245 = vmatpush1.msra.mxu0 0.0
    %1246 = vmatprep.subr.mxu0 0.0
    %1247 = vmatpush1.msra.mxu0 0.0
    %1248 = vmatprep.subr.mxu0 0.0
    %1249 = vmatpush1.msra.mxu0 0.0
    %1250 = vmatprep.subr.mxu0 0.0
    %1251 = vmatpush1.msra.mxu0 0.0
    %1252 = vmatprep.subr.mxu0 0.0
    %1253 = vmatpush1.msra.mxu0 0.0
    %1254 = vmatprep.subr.mxu0 0.0
    %1255 = vmatpush1.msra.mxu0 0.0
    %1256 = vmatprep.mubr.f32.mxu0 0.0
    %1257 = vmatmul.mubr.f32.gmra.mrb[0].mxu0 %v924
    %v1258 = vpop.f32.mrb[0].mxu0
    %v1259 = vadd.f32 0.0, %v1258
    %v1260 = vpop.f32.mrb[0].mxu0
    %v1261 = vadd.f32 0.0, %v1260
    %1262 = vdwg.mxu0
    %v1263 = vadd.f32 %v937, %v1188
    %v1264 = vadd.f32 %v938, %v1190
    %v1265 = vadd.f32 %v939, %v1259
    %v1266 = vadd.f32 %v940, %v1261
    %v1267 = vmul.f32 %v1263, 0.5
    %v1268 = vmul.f32 %v1264, 0.5
    %v1269 = vtanh.pop %v1267
    %v1270 = vtanh.pop %v1268
    %v1271 = vmul.f32 %v1269, 0.5
    %v1272 = vmul.f32 %v1270, 0.5
    %v1273 = vadd.f32 %v1271, 0.5
    %v1274 = vadd.f32 %v1272, 0.5
    %v1275 = vtanh.pop %v1265
    %v1276 = vmul.f32 %v1266, 0.5
    %v1277 = vtanh.pop %v1276
    %v1278 = vmul.f32 %v1277, 0.5
    %v1279 = vadd.f32 %v1278, 0.5
    %v1280 = vmul.f32 %v1274, %v927
    %v1281 = vmul.f32 %v1273, %v1275
    %v1282 = vadd.f32 %v1280, %v1281
    %v1283 = vtanh.pop %v1282
    %v1284 = vmul.f32 %v1279, %v1283
    %v1285 = vsub.f32 %v1284, %v924
    %v1286 = vmul.f32 %v1114, %v1285
    %v1287 = vadd.f32 %v924, %v1286
    %v1288 = vsub.f32 %v1282, %v927
    %v1289 = vmul.f32 %v1114, %v1288
    %v1290 = vadd.f32 %v927, %v1289
    %s1291 = scalar_lea.vmem %s50, 96
    %v1292 = vld [vmem:[%s1291] sm:$0xff]
    %v1293 = vld [vmem:[%s1291 + $0x8] sm:$0xff]
    %v1294 = vld [vmem:[%s1291 + $0x10] sm:$0xff]
    %v1295 = vld [vmem:[%s1291 + $0x18] sm:$0xff]
    %v1296 = vunpack.c.l.bf16 %v1292
    %v1297 = vunpack.c.h.bf16 %v1292
    %v1298 = vunpack.c.l.bf16 %v1293
    %v1299 = vunpack.c.h.bf16 %v1293
    %v1300 = vunpack.c.l.bf16 %v1294
    %v1301 = vunpack.c.h.bf16 %v1294
    %v1302 = vunpack.c.l.bf16 %v1295
    %v1303 = vunpack.c.h.bf16 %v1295
    %s1304 = sadd.s32 %s199, 3
    %v1305 = vstv %s1304
    %vm1306 = vcmp.lt.s32.totalorder %v1305, %v198
    %v1307 = vsel %vm1306, 1, 0
    %v1308 = vcvt.s32.f32 %v1307
    %1309 = vmatprep.subr.mxu0 %v70
    %1310 = vmatpush1.msra.mxu0 %v69
    %1311 = vmatprep.subr.mxu0 %v74
    %1312 = vmatpush1.msra.mxu0 %v73
    %1313 = vmatprep.subr.mxu0 %v78
    %1314 = vmatpush1.msra.mxu0 %v77
    %1315 = vmatprep.subr.mxu0 %v82
    %1316 = vmatpush1.msra.mxu0 %v81
    %1317 = vmatprep.subr.mxu0 %v86
    %1318 = vmatpush1.msra.mxu0 %v85
    %1319 = vmatprep.subr.mxu0 %v90
    %1320 = vmatpush1.msra.mxu0 %v89
    %1321 = vmatprep.subr.mxu0 %v94
    %1322 = vmatpush1.msra.mxu0 %v93
    %1323 = vmatprep.subr.mxu0 %v98
    %1324 = vmatpush1.msra.mxu0 %v97
    %1325 = vmatprep.subr.mxu0 %v102
    %1326 = vmatpush1.msra.mxu0 %v101
    %1327 = vmatprep.subr.mxu0 %v106
    %1328 = vmatpush1.msra.mxu0 %v105
    %1329 = vmatprep.subr.mxu0 %v110
    %1330 = vmatpush1.msra.mxu0 %v109
    %1331 = vmatprep.subr.mxu0 %v114
    %1332 = vmatpush1.msra.mxu0 %v113
    %1333 = vmatprep.subr.mxu0 %v118
    %1334 = vmatpush1.msra.mxu0 %v117
    %1335 = vmatprep.subr.mxu0 %v122
    %1336 = vmatpush1.msra.mxu0 %v121
    %1337 = vmatprep.subr.mxu0 %v126
    %1338 = vmatpush1.msra.mxu0 %v125
    %1339 = vmatprep.subr.mxu0 %v130
    %1340 = vmatpush1.msra.mxu0 %v129
    %1341 = vmatprep.subr.mxu0 0.0
    %1342 = vmatpush1.msra.mxu0 0.0
    %1343 = vmatprep.subr.mxu0 0.0
    %1344 = vmatpush1.msra.mxu0 0.0
    %1345 = vmatprep.subr.mxu0 0.0
    %1346 = vmatpush1.msra.mxu0 0.0
    %1347 = vmatprep.subr.mxu0 0.0
    %1348 = vmatpush1.msra.mxu0 0.0
    %1349 = vmatprep.subr.mxu0 0.0
    %1350 = vmatpush1.msra.mxu0 0.0
    %1351 = vmatprep.subr.mxu0 0.0
    %1352 = vmatpush1.msra.mxu0 0.0
    %1353 = vmatprep.subr.mxu0 0.0
    %1354 = vmatpush1.msra.mxu0 0.0
    %1355 = vmatprep.subr.mxu0 0.0
    %1356 = vmatpush1.msra.mxu0 0.0
    %1357 = vmatprep.subr.mxu0 0.0
    %1358 = vmatpush1.msra.mxu0 0.0
    %1359 = vmatprep.subr.mxu0 0.0
    %1360 = vmatpush1.msra.mxu0 0.0
    %1361 = vmatprep.subr.mxu0 0.0
    %1362 = vmatpush1.msra.mxu0 0.0
    %1363 = vmatprep.subr.mxu0 0.0
    %1364 = vmatpush1.msra.mxu0 0.0
    %1365 = vmatprep.subr.mxu0 0.0
    %1366 = vmatpush1.msra.mxu0 0.0
    %1367 = vmatprep.subr.mxu0 0.0
    %1368 = vmatpush1.msra.mxu0 0.0
    %1369 = vmatprep.subr.mxu0 0.0
    %1370 = vmatpush1.msra.mxu0 0.0
    %1371 = vmatprep.subr.mxu0 0.0
    %1372 = vmatpush1.msra.mxu0 0.0
    %1373 = vmatprep.mubr.f32.mxu0 0.0
    %1374 = vmatmul.mubr.f32.gmra.mrb[0].mxu0 %v1117
    %v1375 = vpop.f32.mrb[0].mxu0
    %v1376 = vadd.f32 0.0, %v1375
    %v1377 = vpop.f32.mrb[0].mxu0
    %v1378 = vadd.f32 0.0, %v1377
    %1379 = vdwg.mxu0
    %1380 = vmatprep.subr.mxu0 %v72
    %1381 = vmatpush1.msra.mxu0 %v71
    %1382 = vmatprep.subr.mxu0 %v76
    %1383 = vmatpush1.msra.mxu0 %v75
    %1384 = vmatprep.subr.mxu0 %v80
    %1385 = vmatpush1.msra.mxu0 %v79
    %1386 = vmatprep.subr.mxu0 %v84
    %1387 = vmatpush1.msra.mxu0 %v83
    %1388 = vmatprep.subr.mxu0 %v88
    %1389 = vmatpush1.msra.mxu0 %v87
    %1390 = vmatprep.subr.mxu0 %v92
    %1391 = vmatpush1.msra.mxu0 %v91
    %1392 = vmatprep.subr.mxu0 %v96
    %1393 = vmatpush1.msra.mxu0 %v95
    %1394 = vmatprep.subr.mxu0 %v100
    %1395 = vmatpush1.msra.mxu0 %v99
    %1396 = vmatprep.subr.mxu0 %v104
    %1397 = vmatpush1.msra.mxu0 %v103
    %1398 = vmatprep.subr.mxu0 %v108
    %1399 = vmatpush1.msra.mxu0 %v107
    %1400 = vmatprep.subr.mxu0 %v112
    %1401 = vmatpush1.msra.mxu0 %v111
    %1402 = vmatprep.subr.mxu0 %v116
    %1403 = vmatpush1.msra.mxu0 %v115
    %1404 = vmatprep.subr.mxu0 %v120
    %1405 = vmatpush1.msra.mxu0 %v119
    %1406 = vmatprep.subr.mxu0 %v124
    %1407 = vmatpush1.msra.mxu0 %v123
    %1408 = vmatprep.subr.mxu0 %v128
    %1409 = vmatpush1.msra.mxu0 %v127
    %1410 = vmatprep.subr.mxu0 %v132
    %1411 = vmatpush1.msra.mxu0 %v131
    %1412 = vmatprep.subr.mxu0 0.0
    %1413 = vmatpush1.msra.mxu0 0.0
    %1414 = vmatprep.subr.mxu0 0.0
    %1415 = vmatpush1.msra.mxu0 0.0
    %1416 = vmatprep.subr.mxu0 0.0
    %1417 = vmatpush1.msra.mxu0 0.0
    %1418 = vmatprep.subr.mxu0 0.0
    %1419 = vmatpush1.msra.mxu0 0.0
    %1420 = vmatprep.subr.mxu0 0.0
    %1421 = vmatpush1.msra.mxu0 0.0
    %1422 = vmatprep.subr.mxu0 0.0
    %1423 = vmatpush1.msra.mxu0 0.0
    %1424 = vmatprep.subr.mxu0 0.0
    %1425 = vmatpush1.msra.mxu0 0.0
    %1426 = vmatprep.subr.mxu0 0.0
    %1427 = vmatpush1.msra.mxu0 0.0
    %1428 = vmatprep.subr.mxu0 0.0
    %1429 = vmatpush1.msra.mxu0 0.0
    %1430 = vmatprep.subr.mxu0 0.0
    %1431 = vmatpush1.msra.mxu0 0.0
    %1432 = vmatprep.subr.mxu0 0.0
    %1433 = vmatpush1.msra.mxu0 0.0
    %1434 = vmatprep.subr.mxu0 0.0
    %1435 = vmatpush1.msra.mxu0 0.0
    %1436 = vmatprep.subr.mxu0 0.0
    %1437 = vmatpush1.msra.mxu0 0.0
    %1438 = vmatprep.subr.mxu0 0.0
    %1439 = vmatpush1.msra.mxu0 0.0
    %1440 = vmatprep.subr.mxu0 0.0
    %1441 = vmatpush1.msra.mxu0 0.0
    %1442 = vmatprep.subr.mxu0 0.0
    %1443 = vmatpush1.msra.mxu0 0.0
    %1444 = vmatprep.mubr.f32.mxu0 0.0
    %1445 = vmatmul.mubr.f32.gmra.mrb[0].mxu0 %v1117
    %v1446 = vpop.f32.mrb[0].mxu0
    %v1447 = vadd.f32 0.0, %v1446
    %v1448 = vpop.f32.mrb[0].mxu0
    %v1449 = vadd.f32 0.0, %v1448
    %1450 = vdwg.mxu0
    %v1451 = vadd.f32 %v1296, %v1376
    %v1452 = vadd.f32 %v1297, %v1378
    %v1453 = vadd.f32 %v1298, %v1447
    %v1454 = vadd.f32 %v1299, %v1449
    %v1455 = vmul.f32 %v1451, 0.5
    %v1456 = vmul.f32 %v1452, 0.5
    %v1457 = vtanh.pop %v1455
    %v1458 = vtanh.pop %v1456
    %v1459 = vmul.f32 %v1457, 0.5
    %v1460 = vmul.f32 %v1458, 0.5
    %v1461 = vadd.f32 %v1459, 0.5
    %v1462 = vadd.f32 %v1460, 0.5
    %v1463 = vtanh.pop %v1453
    %v1464 = vmul.f32 %v1454, 0.5
    %v1465 = vtanh.pop %v1464
    %v1466 = vmul.f32 %v1465, 0.5
    %v1467 = vadd.f32 %v1466, 0.5
    %v1468 = vmul.f32 %v1462, %v1120
    %v1469 = vmul.f32 %v1461, %v1463
    %v1470 = vadd.f32 %v1468, %v1469
    %v1471 = vtanh.pop %v1470
    %v1472 = vmul.f32 %v1467, %v1471
    %v1473 = vsub.f32 %v1472, %v1117
    %1475 = vset.pattern.permute.xlu0 0
    %1476 = vperm.xlu0 %1475, %v1308
    %v1477 = vpop.permute.xlu0 %1476
    %v1479 = vmul.f32 %v1477, %v1473
    %v1480 = vadd.f32 %v1117, %v1479
    %v1481 = vsub.f32 %v1470, %v1120
    %v1482 = vmul.f32 %v1477, %v1481
    %v1483 = vadd.f32 %v1120, %v1482
    %1484 = vmatprep.subr.mxu0 %v135
    %1485 = vmatpush1.msra.mxu0 %v134
    %1486 = vmatprep.subr.mxu0 %v139
    %1487 = vmatpush1.msra.mxu0 %v138
    %1488 = vmatprep.subr.mxu0 %v143
    %1489 = vmatpush1.msra.mxu0 %v142
    %1490 = vmatprep.subr.mxu0 %v147
    %1491 = vmatpush1.msra.mxu0 %v146
    %1492 = vmatprep.subr.mxu0 %v151
    %1493 = vmatpush1.msra.mxu0 %v150
    %1494 = vmatprep.subr.mxu0 %v155
    %1495 = vmatpush1.msra.mxu0 %v154
    %1496 = vmatprep.subr.mxu0 %v159
    %1497 = vmatpush1.msra.mxu0 %v158
    %1498 = vmatprep.subr.mxu0 %v163
    %1499 = vmatpush1.msra.mxu0 %v162
    %1500 = vmatprep.subr.mxu0 %v167
    %1501 = vmatpush1.msra.mxu0 %v166
    %1502 = vmatprep.subr.mxu0 %v171
    %1503 = vmatpush1.msra.mxu0 %v170
    %1504 = vmatprep.subr.mxu0 %v175
    %1505 = vmatpush1.msra.mxu0 %v174
    %1506 = vmatprep.subr.mxu0 %v179
    %1507 = vmatpush1.msra.mxu0 %v178
    %1508 = vmatprep.subr.mxu0 %v183
    %1509 = vmatpush1.msra.mxu0 %v182
    %1510 = vmatprep.subr.mxu0 %v187
    %1511 = vmatpush1.msra.mxu0 %v186
    %1512 = vmatprep.subr.mxu0 %v191
    %1513 = vmatpush1.msra.mxu0 %v190
    %1514 = vmatprep.subr.mxu0 %v195
    %1515 = vmatpush1.msra.mxu0 %v194
    %1516 = vmatprep.subr.mxu0 0.0
    %1517 = vmatpush1.msra.mxu0 0.0
    %1518 = vmatprep.subr.mxu0 0.0
    %1519 = vmatpush1.msra.mxu0 0.0
    %1520 = vmatprep.subr.mxu0 0.0
    %1521 = vmatpush1.msra.mxu0 0.0
    %1522 = vmatprep.subr.mxu0 0.0
    %1523 = vmatpush1.msra.mxu0 0.0
    %1524 = vmatprep.subr.mxu0 0.0
    %1525 = vmatpush1.msra.mxu0 0.0
    %1526 = vmatprep.subr.mxu0 0.0
    %1527 = vmatpush1.msra.mxu0 0.0
    %1528 = vmatprep.subr.mxu0 0.0
    %1529 = vmatpush1.msra.mxu0 0.0
    %1530 = vmatprep.subr.mxu0 0.0
    %1531 = vmatpush1.msra.mxu0 0.0
    %1532 = vmatprep.subr.mxu0 0.0
    %1533 = vmatpush1.msra.mxu0 0.0
    %1534 = vmatprep.subr.mxu0 0.0
    %1535 = vmatpush1.msra.mxu0 0.0
    %1536 = vmatprep.subr.mxu0 0.0
    %1537 = vmatpush1.msra.mxu0 0.0
    %1538 = vmatprep.subr.mxu0 0.0
    %1539 = vmatpush1.msra.mxu0 0.0
    %1540 = vmatprep.subr.mxu0 0.0
    %1541 = vmatpush1.msra.mxu0 0.0
    %1542 = vmatprep.subr.mxu0 0.0
    %1543 = vmatpush1.msra.mxu0 0.0
    %1544 = vmatprep.subr.mxu0 0.0
    %1545 = vmatpush1.msra.mxu0 0.0
    %1546 = vmatprep.subr.mxu0 0.0
    %1547 = vmatpush1.msra.mxu0 0.0
    %1548 = vmatprep.mubr.f32.mxu0 0.0
    %1549 = vmatmul.mubr.f32.gmra.mrb[0].mxu0 %v1287
    %v1550 = vpop.f32.mrb[0].mxu0
    %v1551 = vadd.f32 0.0, %v1550
    %v1552 = vpop.f32.mrb[0].mxu0
    %v1553 = vadd.f32 0.0, %v1552
    %1554 = vdwg.mxu0
    %1555 = vmatprep.subr.mxu0 %v137
    %1556 = vmatpush1.msra.mxu0 %v136
    %1557 = vmatprep.subr.mxu0 %v141
    %1558 = vmatpush1.msra.mxu0 %v140
    %1559 = vmatprep.subr.mxu0 %v145
    %1560 = vmatpush1.msra.mxu0 %v144
    %1561 = vmatprep.subr.mxu0 %v149
    %1562 = vmatpush1.msra.mxu0 %v148
    %1563 = vmatprep.subr.mxu0 %v153
    %1564 = vmatpush1.msra.mxu0 %v152
    %1565 = vmatprep.subr.mxu0 %v157
    %1566 = vmatpush1.msra.mxu0 %v156
    %1567 = vmatprep.subr.mxu0 %v161
    %1568 = vmatpush1.msra.mxu0 %v160
    %1569 = vmatprep.subr.mxu0 %v165
    %1570 = vmatpush1.msra.mxu0 %v164
    %1571 = vmatprep.subr.mxu0 %v169
    %1572 = vmatpush1.msra.mxu0 %v168
    %1573 = vmatprep.subr.mxu0 %v173
    %1574 = vmatpush1.msra.mxu0 %v172
    %1575 = vmatprep.subr.mxu0 %v177
    %1576 = vmatpush1.msra.mxu0 %v176
    %1577 = vmatprep.subr.mxu0 %v181
    %1578 = vmatpush1.msra.mxu0 %v180
    %1579 = vmatprep.subr.mxu0 %v185
    %1580 = vmatpush1.msra.mxu0 %v184
    %1581 = vmatprep.subr.mxu0 %v189
    %1582 = vmatpush1.msra.mxu0 %v188
    %1583 = vmatprep.subr.mxu0 %v193
    %1584 = vmatpush1.msra.mxu0 %v192
    %1585 = vmatprep.subr.mxu0 %v197
    %1586 = vmatpush1.msra.mxu0 %v196
    %1587 = vmatprep.subr.mxu0 0.0
    %1588 = vmatpush1.msra.mxu0 0.0
    %1589 = vmatprep.subr.mxu0 0.0
    %1590 = vmatpush1.msra.mxu0 0.0
    %1591 = vmatprep.subr.mxu0 0.0
    %1592 = vmatpush1.msra.mxu0 0.0
    %1593 = vmatprep.subr.mxu0 0.0
    %1594 = vmatpush1.msra.mxu0 0.0
    %1595 = vmatprep.subr.mxu0 0.0
    %1596 = vmatpush1.msra.mxu0 0.0
    %1597 = vmatprep.subr.mxu0 0.0
    %1598 = vmatpush1.msra.mxu0 0.0
    %1599 = vmatprep.subr.mxu0 0.0
    %1600 = vmatpush1.msra.mxu0 0.0
    %1601 = vmatprep.subr.mxu0 0.0
    %1602 = vmatpush1.msra.mxu0 0.0
    %1603 = vmatprep.subr.mxu0 0.0
    %1604 = vmatpush1.msra.mxu0 0.0
    %1605 = vmatprep.subr.mxu0 0.0
    %1606 = vmatpush1.msra.mxu0 0.0
    %1607 = vmatprep.subr.mxu0 0.0
    %1608 = vmatpush1.msra.mxu0 0.0
    %1609 = vmatprep.subr.mxu0 0.0
    %1610 = vmatpush1.msra.mxu0 0.0
    %1611 = vmatprep.subr.mxu0 0.0
    %1612 = vmatpush1.msra.mxu0 0.0
    %1613 = vmatprep.subr.mxu0 0.0
    %1614 = vmatpush1.msra.mxu0 0.0
    %1615 = vmatprep.subr.mxu0 0.0
    %1616 = vmatpush1.msra.mxu0 0.0
    %1617 = vmatprep.subr.mxu0 0.0
    %1618 = vmatpush1.msra.mxu0 0.0
    %1619 = vmatprep.mubr.f32.mxu0 0.0
    %1620 = vmatmul.mubr.f32.gmra.mrb[0].mxu0 %v1287
    %v1621 = vpop.f32.mrb[0].mxu0
    %v1622 = vadd.f32 0.0, %v1621
    %v1623 = vpop.f32.mrb[0].mxu0
    %v1624 = vadd.f32 0.0, %v1623
    %1625 = vdwg.mxu0
    %v1626 = vadd.f32 %v1300, %v1551
    %v1627 = vadd.f32 %v1301, %v1553
    %v1628 = vadd.f32 %v1302, %v1622
    %v1629 = vadd.f32 %v1303, %v1624
    %v1630 = vmul.f32 %v1626, 0.5
    %v1631 = vmul.f32 %v1627, 0.5
    %v1632 = vtanh.pop %v1630
    %v1633 = vtanh.pop %v1631
    %v1634 = vmul.f32 %v1632, 0.5
    %v1635 = vmul.f32 %v1633, 0.5
    %v1636 = vadd.f32 %v1634, 0.5
    %v1637 = vadd.f32 %v1635, 0.5
    %v1638 = vtanh.pop %v1628
    %v1639 = vmul.f32 %v1629, 0.5
    %v1640 = vtanh.pop %v1639
    %v1641 = vmul.f32 %v1640, 0.5
    %v1642 = vadd.f32 %v1641, 0.5
    %v1643 = vmul.f32 %v1637, %v1290
    %v1644 = vmul.f32 %v1636, %v1638
    %v1645 = vadd.f32 %v1643, %v1644
    %v1646 = vtanh.pop %v1645
    %v1647 = vmul.f32 %v1642, %v1646
    %v1648 = vsub.f32 %v1647, %v1287
    %v1649 = vmul.f32 %v1477, %v1648
    %v1650 = vadd.f32 %v1287, %v1649
    %v1651 = vsub.f32 %v1645, %v1290
    %v1652 = vmul.f32 %v1477, %v1651
    %v1653 = vadd.f32 %v1290, %v1652
    %s1654 = scalar_lea.vmem %s50, 128
    %v1655 = vld [vmem:[%s1654] sm:$0xff]
    %v1656 = vld [vmem:[%s1654 + $0x8] sm:$0xff]
    %v1657 = vld [vmem:[%s1654 + $0x10] sm:$0xff]
    %v1658 = vld [vmem:[%s1654 + $0x18] sm:$0xff]
    %v1659 = vunpack.c.l.bf16 %v1655
    %v1660 = vunpack.c.h.bf16 %v1655
    %v1661 = vunpack.c.l.bf16 %v1656
    %v1662 = vunpack.c.h.bf16 %v1656
    %v1663 = vunpack.c.l.bf16 %v1657
    %v1664 = vunpack.c.h.bf16 %v1657
    %v1665 = vunpack.c.l.bf16 %v1658
    %v1666 = vunpack.c.h.bf16 %v1658
    %s1667 = sadd.s32 %s199, 4
    %v1668 = vstv %s1667
    %vm1669 = vcmp.lt.s32.totalorder %v1668, %v198
    %v1670 = vsel %vm1669, 1, 0
    %v1671 = vcvt.s32.f32 %v1670
    %1672 = vmatprep.subr.mxu0 %v70
    %1673 = vmatpush1.msra.mxu0 %v69
    %1674 = vmatprep.subr.mxu0 %v74
    %1675 = vmatpush1.msra.mxu0 %v73
    %1676 = vmatprep.subr.mxu0 %v78
    %1677 = vmatpush1.msra.mxu0 %v77
    %1678 = vmatprep.subr.mxu0 %v82
    %1679 = vmatpush1.msra.mxu0 %v81
    %1680 = vmatprep.subr.mxu0 %v86
    %1681 = vmatpush1.msra.mxu0 %v85
    %1682 = vmatprep.subr.mxu0 %v90
    %1683 = vmatpush1.msra.mxu0 %v89
    %1684 = vmatprep.subr.mxu0 %v94
    %1685 = vmatpush1.msra.mxu0 %v93
    %1686 = vmatprep.subr.mxu0 %v98
    %1687 = vmatpush1.msra.mxu0 %v97
    %1688 = vmatprep.subr.mxu0 %v102
    %1689 = vmatpush1.msra.mxu0 %v101
    %1690 = vmatprep.subr.mxu0 %v106
    %1691 = vmatpush1.msra.mxu0 %v105
    %1692 = vmatprep.subr.mxu0 %v110
    %1693 = vmatpush1.msra.mxu0 %v109
    %1694 = vmatprep.subr.mxu0 %v114
    %1695 = vmatpush1.msra.mxu0 %v113
    %1696 = vmatprep.subr.mxu0 %v118
    %1697 = vmatpush1.msra.mxu0 %v117
    %1698 = vmatprep.subr.mxu0 %v122
    %1699 = vmatpush1.msra.mxu0 %v121
    %1700 = vmatprep.subr.mxu0 %v126
    %1701 = vmatpush1.msra.mxu0 %v125
    %1702 = vmatprep.subr.mxu0 %v130
    %1703 = vmatpush1.msra.mxu0 %v129
    %1704 = vmatprep.subr.mxu0 0.0
    %1705 = vmatpush1.msra.mxu0 0.0
    %1706 = vmatprep.subr.mxu0 0.0
    %1707 = vmatpush1.msra.mxu0 0.0
    %1708 = vmatprep.subr.mxu0 0.0
    %1709 = vmatpush1.msra.mxu0 0.0
    %1710 = vmatprep.subr.mxu0 0.0
    %1711 = vmatpush1.msra.mxu0 0.0
    %1712 = vmatprep.subr.mxu0 0.0
    %1713 = vmatpush1.msra.mxu0 0.0
    %1714 = vmatprep.subr.mxu0 0.0
    %1715 = vmatpush1.msra.mxu0 0.0
    %1716 = vmatprep.subr.mxu0 0.0
    %1717 = vmatpush1.msra.mxu0 0.0
    %1718 = vmatprep.subr.mxu0 0.0
    %1719 = vmatpush1.msra.mxu0 0.0
    %1720 = vmatprep.subr.mxu0 0.0
    %1721 = vmatpush1.msra.mxu0 0.0
    %1722 = vmatprep.subr.mxu0 0.0
    %1723 = vmatpush1.msra.mxu0 0.0
    %1724 = vmatprep.subr.mxu0 0.0
    %1725 = vmatpush1.msra.mxu0 0.0
    %1726 = vmatprep.subr.mxu0 0.0
    %1727 = vmatpush1.msra.mxu0 0.0
    %1728 = vmatprep.subr.mxu0 0.0
    %1729 = vmatpush1.msra.mxu0 0.0
    %1730 = vmatprep.subr.mxu0 0.0
    %1731 = vmatpush1.msra.mxu0 0.0
    %1732 = vmatprep.subr.mxu0 0.0
    %1733 = vmatpush1.msra.mxu0 0.0
    %1734 = vmatprep.subr.mxu0 0.0
    %1735 = vmatpush1.msra.mxu0 0.0
    %1736 = vmatprep.mubr.f32.mxu0 0.0
    %1737 = vmatmul.mubr.f32.gmra.mrb[0].mxu0 %v1480
    %v1738 = vpop.f32.mrb[0].mxu0
    %v1739 = vadd.f32 0.0, %v1738
    %v1740 = vpop.f32.mrb[0].mxu0
    %v1741 = vadd.f32 0.0, %v1740
    %1742 = vdwg.mxu0
    %1743 = vmatprep.subr.mxu0 %v72
    %1744 = vmatpush1.msra.mxu0 %v71
    %1745 = vmatprep.subr.mxu0 %v76
    %1746 = vmatpush1.msra.mxu0 %v75
    %1747 = vmatprep.subr.mxu0 %v80
    %1748 = vmatpush1.msra.mxu0 %v79
    %1749 = vmatprep.subr.mxu0 %v84
    %1750 = vmatpush1.msra.mxu0 %v83
    %1751 = vmatprep.subr.mxu0 %v88
    %1752 = vmatpush1.msra.mxu0 %v87
    %1753 = vmatprep.subr.mxu0 %v92
    %1754 = vmatpush1.msra.mxu0 %v91
    %1755 = vmatprep.subr.mxu0 %v96
    %1756 = vmatpush1.msra.mxu0 %v95
    %1757 = vmatprep.subr.mxu0 %v100
    %1758 = vmatpush1.msra.mxu0 %v99
    %1759 = vmatprep.subr.mxu0 %v104
    %1760 = vmatpush1.msra.mxu0 %v103
    %1761 = vmatprep.subr.mxu0 %v108
    %1762 = vmatpush1.msra.mxu0 %v107
    %1763 = vmatprep.subr.mxu0 %v112
    %1764 = vmatpush1.msra.mxu0 %v111
    %1765 = vmatprep.subr.mxu0 %v116
    %1766 = vmatpush1.msra.mxu0 %v115
    %1767 = vmatprep.subr.mxu0 %v120
    %1768 = vmatpush1.msra.mxu0 %v119
    %1769 = vmatprep.subr.mxu0 %v124
    %1770 = vmatpush1.msra.mxu0 %v123
    %1771 = vmatprep.subr.mxu0 %v128
    %1772 = vmatpush1.msra.mxu0 %v127
    %1773 = vmatprep.subr.mxu0 %v132
    %1774 = vmatpush1.msra.mxu0 %v131
    %1775 = vmatprep.subr.mxu0 0.0
    %1776 = vmatpush1.msra.mxu0 0.0
    %1777 = vmatprep.subr.mxu0 0.0
    %1778 = vmatpush1.msra.mxu0 0.0
    %1779 = vmatprep.subr.mxu0 0.0
    %1780 = vmatpush1.msra.mxu0 0.0
    %1781 = vmatprep.subr.mxu0 0.0
    %1782 = vmatpush1.msra.mxu0 0.0
    %1783 = vmatprep.subr.mxu0 0.0
    %1784 = vmatpush1.msra.mxu0 0.0
    %1785 = vmatprep.subr.mxu0 0.0
    %1786 = vmatpush1.msra.mxu0 0.0
    %1787 = vmatprep.subr.mxu0 0.0
    %1788 = vmatpush1.msra.mxu0 0.0
    %1789 = vmatprep.subr.mxu0 0.0
    %1790 = vmatpush1.msra.mxu0 0.0
    %1791 = vmatprep.subr.mxu0 0.0
    %1792 = vmatpush1.msra.mxu0 0.0
    %1793 = vmatprep.subr.mxu0 0.0
    %1794 = vmatpush1.msra.mxu0 0.0
    %1795 = vmatprep.subr.mxu0 0.0
    %1796 = vmatpush1.msra.mxu0 0.0
    %1797 = vmatprep.subr.mxu0 0.0
    %1798 = vmatpush1.msra.mxu0 0.0
    %1799 = vmatprep.subr.mxu0 0.0
    %1800 = vmatpush1.msra.mxu0 0.0
    %1801 = vmatprep.subr.mxu0 0.0
    %1802 = vmatpush1.msra.mxu0 0.0
    %1803 = vmatprep.subr.mxu0 0.0
    %1804 = vmatpush1.msra.mxu0 0.0
    %1805 = vmatprep.subr.mxu0 0.0
    %1806 = vmatpush1.msra.mxu0 0.0
    %1807 = vmatprep.mubr.f32.mxu0 0.0
    %1808 = vmatmul.mubr.f32.gmra.mrb[0].mxu0 %v1480
    %v1809 = vpop.f32.mrb[0].mxu0
    %v1810 = vadd.f32 0.0, %v1809
    %v1811 = vpop.f32.mrb[0].mxu0
    %v1812 = vadd.f32 0.0, %v1811
    %1813 = vdwg.mxu0
    %v1814 = vadd.f32 %v1659, %v1739
    %v1815 = vadd.f32 %v1660, %v1741
    %v1816 = vadd.f32 %v1661, %v1810
    %v1817 = vadd.f32 %v1662, %v1812
    %v1818 = vmul.f32 %v1814, 0.5
    %v1819 = vmul.f32 %v1815, 0.5
    %v1820 = vtanh.pop %v1818
    %v1821 = vtanh.pop %v1819
    %v1822 = vmul.f32 %v1820, 0.5
    %v1823 = vmul.f32 %v1821, 0.5
    %v1824 = vadd.f32 %v1822, 0.5
    %v1825 = vadd.f32 %v1823, 0.5
    %v1826 = vtanh.pop %v1816
    %v1827 = vmul.f32 %v1817, 0.5
    %v1828 = vtanh.pop %v1827
    %v1829 = vmul.f32 %v1828, 0.5
    %v1830 = vadd.f32 %v1829, 0.5
    %v1831 = vmul.f32 %v1825, %v1483
    %v1832 = vmul.f32 %v1824, %v1826
    %v1833 = vadd.f32 %v1831, %v1832
    %v1834 = vtanh.pop %v1833
    %v1835 = vmul.f32 %v1830, %v1834
    %v1836 = vsub.f32 %v1835, %v1480
    %1838 = vset.pattern.permute.xlu0 0
    %1839 = vperm.xlu0 %1838, %v1671
    %v1840 = vpop.permute.xlu0 %1839
    %v1842 = vmul.f32 %v1840, %v1836
    %v1843 = vadd.f32 %v1480, %v1842
    %v1844 = vsub.f32 %v1833, %v1483
    %v1845 = vmul.f32 %v1840, %v1844
    %v1846 = vadd.f32 %v1483, %v1845
    %1847 = vmatprep.subr.mxu0 %v135
    %1848 = vmatpush1.msra.mxu0 %v134
    %1849 = vmatprep.subr.mxu0 %v139
    %1850 = vmatpush1.msra.mxu0 %v138
    %1851 = vmatprep.subr.mxu0 %v143
    %1852 = vmatpush1.msra.mxu0 %v142
    %1853 = vmatprep.subr.mxu0 %v147
    %1854 = vmatpush1.msra.mxu0 %v146
    %1855 = vmatprep.subr.mxu0 %v151
    %1856 = vmatpush1.msra.mxu0 %v150
    %1857 = vmatprep.subr.mxu0 %v155
    %1858 = vmatpush1.msra.mxu0 %v154
    %1859 = vmatprep.subr.mxu0 %v159
    %1860 = vmatpush1.msra.mxu0 %v158
    %1861 = vmatprep.subr.mxu0 %v163
    %1862 = vmatpush1.msra.mxu0 %v162
    %1863 = vmatprep.subr.mxu0 %v167
    %1864 = vmatpush1.msra.mxu0 %v166
    %1865 = vmatprep.subr.mxu0 %v171
    %1866 = vmatpush1.msra.mxu0 %v170
    %1867 = vmatprep.subr.mxu0 %v175
    %1868 = vmatpush1.msra.mxu0 %v174
    %1869 = vmatprep.subr.mxu0 %v179
    %1870 = vmatpush1.msra.mxu0 %v178
    %1871 = vmatprep.subr.mxu0 %v183
    %1872 = vmatpush1.msra.mxu0 %v182
    %1873 = vmatprep.subr.mxu0 %v187
    %1874 = vmatpush1.msra.mxu0 %v186
    %1875 = vmatprep.subr.mxu0 %v191
    %1876 = vmatpush1.msra.mxu0 %v190
    %1877 = vmatprep.subr.mxu0 %v195
    %1878 = vmatpush1.msra.mxu0 %v194
    %1879 = vmatprep.subr.mxu0 0.0
    %1880 = vmatpush1.msra.mxu0 0.0
    %1881 = vmatprep.subr.mxu0 0.0
    %1882 = vmatpush1.msra.mxu0 0.0
    %1883 = vmatprep.subr.mxu0 0.0
    %1884 = vmatpush1.msra.mxu0 0.0
    %1885 = vmatprep.subr.mxu0 0.0
    %1886 = vmatpush1.msra.mxu0 0.0
    %1887 = vmatprep.subr.mxu0 0.0
    %1888 = vmatpush1.msra.mxu0 0.0
    %1889 = vmatprep.subr.mxu0 0.0
    %1890 = vmatpush1.msra.mxu0 0.0
    %1891 = vmatprep.subr.mxu0 0.0
    %1892 = vmatpush1.msra.mxu0 0.0
    %1893 = vmatprep.subr.mxu0 0.0
    %1894 = vmatpush1.msra.mxu0 0.0
    %1895 = vmatprep.subr.mxu0 0.0
    %1896 = vmatpush1.msra.mxu0 0.0
    %1897 = vmatprep.subr.mxu0 0.0
    %1898 = vmatpush1.msra.mxu0 0.0
    %1899 = vmatprep.subr.mxu0 0.0
    %1900 = vmatpush1.msra.mxu0 0.0
    %1901 = vmatprep.subr.mxu0 0.0
    %1902 = vmatpush1.msra.mxu0 0.0
    %1903 = vmatprep.subr.mxu0 0.0
    %1904 = vmatpush1.msra.mxu0 0.0
    %1905 = vmatprep.subr.mxu0 0.0
    %1906 = vmatpush1.msra.mxu0 0.0
    %1907 = vmatprep.subr.mxu0 0.0
    %1908 = vmatpush1.msra.mxu0 0.0
    %1909 = vmatprep.subr.mxu0 0.0
    %1910 = vmatpush1.msra.mxu0 0.0
    %1911 = vmatprep.mubr.f32.mxu0 0.0
    %1912 = vmatmul.mubr.f32.gmra.mrb[0].mxu0 %v1650
    %v1913 = vpop.f32.mrb[0].mxu0
    %v1914 = vadd.f32 0.0, %v1913
    %v1915 = vpop.f32.mrb[0].mxu0
    %v1916 = vadd.f32 0.0, %v1915
    %1917 = vdwg.mxu0
    %1918 = vmatprep.subr.mxu0 %v137
    %1919 = vmatpush1.msra.mxu0 %v136
    %1920 = vmatprep.subr.mxu0 %v141
    %1921 = vmatpush1.msra.mxu0 %v140
    %1922 = vmatprep.subr.mxu0 %v145
    %1923 = vmatpush1.msra.mxu0 %v144
    %1924 = vmatprep.subr.mxu0 %v149
    %1925 = vmatpush1.msra.mxu0 %v148
    %1926 = vmatprep.subr.mxu0 %v153
    %1927 = vmatpush1.msra.mxu0 %v152
    %1928 = vmatprep.subr.mxu0 %v157
    %1929 = vmatpush1.msra.mxu0 %v156
    %1930 = vmatprep.subr.mxu0 %v161
    %1931 = vmatpush1.msra.mxu0 %v160
    %1932 = vmatprep.subr.mxu0 %v165
    %1933 = vmatpush1.msra.mxu0 %v164
    %1934 = vmatprep.subr.mxu0 %v169
    %1935 = vmatpush1.msra.mxu0 %v168
    %1936 = vmatprep.subr.mxu0 %v173
    %1937 = vmatpush1.msra.mxu0 %v172
    %1938 = vmatprep.subr.mxu0 %v177
    %1939 = vmatpush1.msra.mxu0 %v176
    %1940 = vmatprep.subr.mxu0 %v181
    %1941 = vmatpush1.msra.mxu0 %v180
    %1942 = vmatprep.subr.mxu0 %v185
    %1943 = vmatpush1.msra.mxu0 %v184
    %1944 = vmatprep.subr.mxu0 %v189
    %1945 = vmatpush1.msra.mxu0 %v188
    %1946 = vmatprep.subr.mxu0 %v193
    %1947 = vmatpush1.msra.mxu0 %v192
    %1948 = vmatprep.subr.mxu0 %v197
    %1949 = vmatpush1.msra.mxu0 %v196
    %1950 = vmatprep.subr.mxu0 0.0
    %1951 = vmatpush1.msra.mxu0 0.0
    %1952 = vmatprep.subr.mxu0 0.0
    %1953 = vmatpush1.msra.mxu0 0.0
    %1954 = vmatprep.subr.mxu0 0.0
    %1955 = vmatpush1.msra.mxu0 0.0
    %1956 = vmatprep.subr.mxu0 0.0
    %1957 = vmatpush1.msra.mxu0 0.0
    %1958 = vmatprep.subr.mxu0 0.0
    %1959 = vmatpush1.msra.mxu0 0.0
    %1960 = vmatprep.subr.mxu0 0.0
    %1961 = vmatpush1.msra.mxu0 0.0
    %1962 = vmatprep.subr.mxu0 0.0
    %1963 = vmatpush1.msra.mxu0 0.0
    %1964 = vmatprep.subr.mxu0 0.0
    %1965 = vmatpush1.msra.mxu0 0.0
    %1966 = vmatprep.subr.mxu0 0.0
    %1967 = vmatpush1.msra.mxu0 0.0
    %1968 = vmatprep.subr.mxu0 0.0
    %1969 = vmatpush1.msra.mxu0 0.0
    %1970 = vmatprep.subr.mxu0 0.0
    %1971 = vmatpush1.msra.mxu0 0.0
    %1972 = vmatprep.subr.mxu0 0.0
    %1973 = vmatpush1.msra.mxu0 0.0
    %1974 = vmatprep.subr.mxu0 0.0
    %1975 = vmatpush1.msra.mxu0 0.0
    %1976 = vmatprep.subr.mxu0 0.0
    %1977 = vmatpush1.msra.mxu0 0.0
    %1978 = vmatprep.subr.mxu0 0.0
    %1979 = vmatpush1.msra.mxu0 0.0
    %1980 = vmatprep.subr.mxu0 0.0
    %1981 = vmatpush1.msra.mxu0 0.0
    %1982 = vmatprep.mubr.f32.mxu0 0.0
    %1983 = vmatmul.mubr.f32.gmra.mrb[0].mxu0 %v1650
    %v1984 = vpop.f32.mrb[0].mxu0
    %v1985 = vadd.f32 0.0, %v1984
    %v1986 = vpop.f32.mrb[0].mxu0
    %v1987 = vadd.f32 0.0, %v1986
    %1988 = vdwg.mxu0
    %v1989 = vadd.f32 %v1663, %v1914
    %v1990 = vadd.f32 %v1664, %v1916
    %v1991 = vadd.f32 %v1665, %v1985
    %v1992 = vadd.f32 %v1666, %v1987
    %v1993 = vmul.f32 %v1989, 0.5
    %v1994 = vmul.f32 %v1990, 0.5
    %v1995 = vtanh.pop %v1993
    %v1996 = vtanh.pop %v1994
    %v1997 = vmul.f32 %v1995, 0.5
    %v1998 = vmul.f32 %v1996, 0.5
    %v1999 = vadd.f32 %v1997, 0.5
    %v2000 = vadd.f32 %v1998, 0.5
    %v2001 = vtanh.pop %v1991
    %v2002 = vmul.f32 %v1992, 0.5
    %v2003 = vtanh.pop %v2002
    %v2004 = vmul.f32 %v2003, 0.5
    %v2005 = vadd.f32 %v2004, 0.5
    %v2006 = vmul.f32 %v2000, %v1653
    %v2007 = vmul.f32 %v1999, %v2001
    %v2008 = vadd.f32 %v2006, %v2007
    %v2009 = vtanh.pop %v2008
    %v2010 = vmul.f32 %v2005, %v2009
    %v2011 = vsub.f32 %v2010, %v1650
    %v2012 = vmul.f32 %v1840, %v2011
    %v2013 = vadd.f32 %v1650, %v2012
    %v2014 = vsub.f32 %v2008, %v1653
    %v2015 = vmul.f32 %v1840, %v2014
    %v2016 = vadd.f32 %v1653, %v2015
    %s2017 = scalar_lea.vmem %s50, 160
    %v2018 = vld [vmem:[%s2017] sm:$0xff]
    %v2019 = vld [vmem:[%s2017 + $0x8] sm:$0xff]
    %v2020 = vld [vmem:[%s2017 + $0x10] sm:$0xff]
    %v2021 = vld [vmem:[%s2017 + $0x18] sm:$0xff]
    %v2022 = vunpack.c.l.bf16 %v2018
    %v2023 = vunpack.c.h.bf16 %v2018
    %v2024 = vunpack.c.l.bf16 %v2019
    %v2025 = vunpack.c.h.bf16 %v2019
    %v2026 = vunpack.c.l.bf16 %v2020
    %v2027 = vunpack.c.h.bf16 %v2020
    %v2028 = vunpack.c.l.bf16 %v2021
    %v2029 = vunpack.c.h.bf16 %v2021
    %s2030 = sadd.s32 %s199, 5
    %v2031 = vstv %s2030
    %vm2032 = vcmp.lt.s32.totalorder %v2031, %v198
    %v2033 = vsel %vm2032, 1, 0
    %v2034 = vcvt.s32.f32 %v2033
    %2035 = vmatprep.subr.mxu0 %v70
    %2036 = vmatpush1.msra.mxu0 %v69
    %2037 = vmatprep.subr.mxu0 %v74
    %2038 = vmatpush1.msra.mxu0 %v73
    %2039 = vmatprep.subr.mxu0 %v78
    %2040 = vmatpush1.msra.mxu0 %v77
    %2041 = vmatprep.subr.mxu0 %v82
    %2042 = vmatpush1.msra.mxu0 %v81
    %2043 = vmatprep.subr.mxu0 %v86
    %2044 = vmatpush1.msra.mxu0 %v85
    %2045 = vmatprep.subr.mxu0 %v90
    %2046 = vmatpush1.msra.mxu0 %v89
    %2047 = vmatprep.subr.mxu0 %v94
    %2048 = vmatpush1.msra.mxu0 %v93
    %2049 = vmatprep.subr.mxu0 %v98
    %2050 = vmatpush1.msra.mxu0 %v97
    %2051 = vmatprep.subr.mxu0 %v102
    %2052 = vmatpush1.msra.mxu0 %v101
    %2053 = vmatprep.subr.mxu0 %v106
    %2054 = vmatpush1.msra.mxu0 %v105
    %2055 = vmatprep.subr.mxu0 %v110
    %2056 = vmatpush1.msra.mxu0 %v109
    %2057 = vmatprep.subr.mxu0 %v114
    %2058 = vmatpush1.msra.mxu0 %v113
    %2059 = vmatprep.subr.mxu0 %v118
    %2060 = vmatpush1.msra.mxu0 %v117
    %2061 = vmatprep.subr.mxu0 %v122
    %2062 = vmatpush1.msra.mxu0 %v121
    %2063 = vmatprep.subr.mxu0 %v126
    %2064 = vmatpush1.msra.mxu0 %v125
    %2065 = vmatprep.subr.mxu0 %v130
    %2066 = vmatpush1.msra.mxu0 %v129
    %2067 = vmatprep.subr.mxu0 0.0
    %2068 = vmatpush1.msra.mxu0 0.0
    %2069 = vmatprep.subr.mxu0 0.0
    %2070 = vmatpush1.msra.mxu0 0.0
    %2071 = vmatprep.subr.mxu0 0.0
    %2072 = vmatpush1.msra.mxu0 0.0
    %2073 = vmatprep.subr.mxu0 0.0
    %2074 = vmatpush1.msra.mxu0 0.0
    %2075 = vmatprep.subr.mxu0 0.0
    %2076 = vmatpush1.msra.mxu0 0.0
    %2077 = vmatprep.subr.mxu0 0.0
    %2078 = vmatpush1.msra.mxu0 0.0
    %2079 = vmatprep.subr.mxu0 0.0
    %2080 = vmatpush1.msra.mxu0 0.0
    %2081 = vmatprep.subr.mxu0 0.0
    %2082 = vmatpush1.msra.mxu0 0.0
    %2083 = vmatprep.subr.mxu0 0.0
    %2084 = vmatpush1.msra.mxu0 0.0
    %2085 = vmatprep.subr.mxu0 0.0
    %2086 = vmatpush1.msra.mxu0 0.0
    %2087 = vmatprep.subr.mxu0 0.0
    %2088 = vmatpush1.msra.mxu0 0.0
    %2089 = vmatprep.subr.mxu0 0.0
    %2090 = vmatpush1.msra.mxu0 0.0
    %2091 = vmatprep.subr.mxu0 0.0
    %2092 = vmatpush1.msra.mxu0 0.0
    %2093 = vmatprep.subr.mxu0 0.0
    %2094 = vmatpush1.msra.mxu0 0.0
    %2095 = vmatprep.subr.mxu0 0.0
    %2096 = vmatpush1.msra.mxu0 0.0
    %2097 = vmatprep.subr.mxu0 0.0
    %2098 = vmatpush1.msra.mxu0 0.0
    %2099 = vmatprep.mubr.f32.mxu0 0.0
    %2100 = vmatmul.mubr.f32.gmra.mrb[0].mxu0 %v1843
    %v2101 = vpop.f32.mrb[0].mxu0
    %v2102 = vadd.f32 0.0, %v2101
    %v2103 = vpop.f32.mrb[0].mxu0
    %v2104 = vadd.f32 0.0, %v2103
    %2105 = vdwg.mxu0
    %2106 = vmatprep.subr.mxu0 %v72
    %2107 = vmatpush1.msra.mxu0 %v71
    %2108 = vmatprep.subr.mxu0 %v76
    %2109 = vmatpush1.msra.mxu0 %v75
    %2110 = vmatprep.subr.mxu0 %v80
    %2111 = vmatpush1.msra.mxu0 %v79
    %2112 = vmatprep.subr.mxu0 %v84
    %2113 = vmatpush1.msra.mxu0 %v83
    %2114 = vmatprep.subr.mxu0 %v88
    %2115 = vmatpush1.msra.mxu0 %v87
    %2116 = vmatprep.subr.mxu0 %v92
    %2117 = vmatpush1.msra.mxu0 %v91
    %2118 = vmatprep.subr.mxu0 %v96
    %2119 = vmatpush1.msra.mxu0 %v95
    %2120 = vmatprep.subr.mxu0 %v100
    %2121 = vmatpush1.msra.mxu0 %v99
    %2122 = vmatprep.subr.mxu0 %v104
    %2123 = vmatpush1.msra.mxu0 %v103
    %2124 = vmatprep.subr.mxu0 %v108
    %2125 = vmatpush1.msra.mxu0 %v107
    %2126 = vmatprep.subr.mxu0 %v112
    %2127 = vmatpush1.msra.mxu0 %v111
    %2128 = vmatprep.subr.mxu0 %v116
    %2129 = vmatpush1.msra.mxu0 %v115
    %2130 = vmatprep.subr.mxu0 %v120
    %2131 = vmatpush1.msra.mxu0 %v119
    %2132 = vmatprep.subr.mxu0 %v124
    %2133 = vmatpush1.msra.mxu0 %v123
    %2134 = vmatprep.subr.mxu0 %v128
    %2135 = vmatpush1.msra.mxu0 %v127
    %2136 = vmatprep.subr.mxu0 %v132
    %2137 = vmatpush1.msra.mxu0 %v131
    %2138 = vmatprep.subr.mxu0 0.0
    %2139 = vmatpush1.msra.mxu0 0.0
    %2140 = vmatprep.subr.mxu0 0.0
    %2141 = vmatpush1.msra.mxu0 0.0
    %2142 = vmatprep.subr.mxu0 0.0
    %2143 = vmatpush1.msra.mxu0 0.0
    %2144 = vmatprep.subr.mxu0 0.0
    %2145 = vmatpush1.msra.mxu0 0.0
    %2146 = vmatprep.subr.mxu0 0.0
    %2147 = vmatpush1.msra.mxu0 0.0
    %2148 = vmatprep.subr.mxu0 0.0
    %2149 = vmatpush1.msra.mxu0 0.0
    %2150 = vmatprep.subr.mxu0 0.0
    %2151 = vmatpush1.msra.mxu0 0.0
    %2152 = vmatprep.subr.mxu0 0.0
    %2153 = vmatpush1.msra.mxu0 0.0
    %2154 = vmatprep.subr.mxu0 0.0
    %2155 = vmatpush1.msra.mxu0 0.0
    %2156 = vmatprep.subr.mxu0 0.0
    %2157 = vmatpush1.msra.mxu0 0.0
    %2158 = vmatprep.subr.mxu0 0.0
    %2159 = vmatpush1.msra.mxu0 0.0
    %2160 = vmatprep.subr.mxu0 0.0
    %2161 = vmatpush1.msra.mxu0 0.0
    %2162 = vmatprep.subr.mxu0 0.0
    %2163 = vmatpush1.msra.mxu0 0.0
    %2164 = vmatprep.subr.mxu0 0.0
    %2165 = vmatpush1.msra.mxu0 0.0
    %2166 = vmatprep.subr.mxu0 0.0
    %2167 = vmatpush1.msra.mxu0 0.0
    %2168 = vmatprep.subr.mxu0 0.0
    %2169 = vmatpush1.msra.mxu0 0.0
    %2170 = vmatprep.mubr.f32.mxu0 0.0
    %2171 = vmatmul.mubr.f32.gmra.mrb[0].mxu0 %v1843
    %v2172 = vpop.f32.mrb[0].mxu0
    %v2173 = vadd.f32 0.0, %v2172
    %v2174 = vpop.f32.mrb[0].mxu0
    %v2175 = vadd.f32 0.0, %v2174
    %2176 = vdwg.mxu0
    %v2177 = vadd.f32 %v2022, %v2102
    %v2178 = vadd.f32 %v2023, %v2104
    %v2179 = vadd.f32 %v2024, %v2173
    %v2180 = vadd.f32 %v2025, %v2175
    %v2181 = vmul.f32 %v2177, 0.5
    %v2182 = vmul.f32 %v2178, 0.5
    %v2183 = vtanh.pop %v2181
    %v2184 = vtanh.pop %v2182
    %v2185 = vmul.f32 %v2183, 0.5
    %v2186 = vmul.f32 %v2184, 0.5
    %v2187 = vadd.f32 %v2185, 0.5
    %v2188 = vadd.f32 %v2186, 0.5
    %v2189 = vtanh.pop %v2179
    %v2190 = vmul.f32 %v2180, 0.5
    %v2191 = vtanh.pop %v2190
    %v2192 = vmul.f32 %v2191, 0.5
    %v2193 = vadd.f32 %v2192, 0.5
    %v2194 = vmul.f32 %v2188, %v1846
    %v2195 = vmul.f32 %v2187, %v2189
    %v2196 = vadd.f32 %v2194, %v2195
    %v2197 = vtanh.pop %v2196
    %v2198 = vmul.f32 %v2193, %v2197
    %v2199 = vsub.f32 %v2198, %v1843
    %2201 = vset.pattern.permute.xlu0 0
    %2202 = vperm.xlu0 %2201, %v2034
    %v2203 = vpop.permute.xlu0 %2202
    %v2205 = vmul.f32 %v2203, %v2199
    %v2206 = vadd.f32 %v1843, %v2205
    %v2207 = vsub.f32 %v2196, %v1846
    %v2208 = vmul.f32 %v2203, %v2207
    %v2209 = vadd.f32 %v1846, %v2208
    %2210 = vmatprep.subr.mxu0 %v135
    %2211 = vmatpush1.msra.mxu0 %v134
    %2212 = vmatprep.subr.mxu0 %v139
    %2213 = vmatpush1.msra.mxu0 %v138
    %2214 = vmatprep.subr.mxu0 %v143
    %2215 = vmatpush1.msra.mxu0 %v142
    %2216 = vmatprep.subr.mxu0 %v147
    %2217 = vmatpush1.msra.mxu0 %v146
    %2218 = vmatprep.subr.mxu0 %v151
    %2219 = vmatpush1.msra.mxu0 %v150
    %2220 = vmatprep.subr.mxu0 %v155
    %2221 = vmatpush1.msra.mxu0 %v154
    %2222 = vmatprep.subr.mxu0 %v159
    %2223 = vmatpush1.msra.mxu0 %v158
    %2224 = vmatprep.subr.mxu0 %v163
    %2225 = vmatpush1.msra.mxu0 %v162
    %2226 = vmatprep.subr.mxu0 %v167
    %2227 = vmatpush1.msra.mxu0 %v166
    %2228 = vmatprep.subr.mxu0 %v171
    %2229 = vmatpush1.msra.mxu0 %v170
    %2230 = vmatprep.subr.mxu0 %v175
    %2231 = vmatpush1.msra.mxu0 %v174
    %2232 = vmatprep.subr.mxu0 %v179
    %2233 = vmatpush1.msra.mxu0 %v178
    %2234 = vmatprep.subr.mxu0 %v183
    %2235 = vmatpush1.msra.mxu0 %v182
    %2236 = vmatprep.subr.mxu0 %v187
    %2237 = vmatpush1.msra.mxu0 %v186
    %2238 = vmatprep.subr.mxu0 %v191
    %2239 = vmatpush1.msra.mxu0 %v190
    %2240 = vmatprep.subr.mxu0 %v195
    %2241 = vmatpush1.msra.mxu0 %v194
    %2242 = vmatprep.subr.mxu0 0.0
    %2243 = vmatpush1.msra.mxu0 0.0
    %2244 = vmatprep.subr.mxu0 0.0
    %2245 = vmatpush1.msra.mxu0 0.0
    %2246 = vmatprep.subr.mxu0 0.0
    %2247 = vmatpush1.msra.mxu0 0.0
    %2248 = vmatprep.subr.mxu0 0.0
    %2249 = vmatpush1.msra.mxu0 0.0
    %2250 = vmatprep.subr.mxu0 0.0
    %2251 = vmatpush1.msra.mxu0 0.0
    %2252 = vmatprep.subr.mxu0 0.0
    %2253 = vmatpush1.msra.mxu0 0.0
    %2254 = vmatprep.subr.mxu0 0.0
    %2255 = vmatpush1.msra.mxu0 0.0
    %2256 = vmatprep.subr.mxu0 0.0
    %2257 = vmatpush1.msra.mxu0 0.0
    %2258 = vmatprep.subr.mxu0 0.0
    %2259 = vmatpush1.msra.mxu0 0.0
    %2260 = vmatprep.subr.mxu0 0.0
    %2261 = vmatpush1.msra.mxu0 0.0
    %2262 = vmatprep.subr.mxu0 0.0
    %2263 = vmatpush1.msra.mxu0 0.0
    %2264 = vmatprep.subr.mxu0 0.0
    %2265 = vmatpush1.msra.mxu0 0.0
    %2266 = vmatprep.subr.mxu0 0.0
    %2267 = vmatpush1.msra.mxu0 0.0
    %2268 = vmatprep.subr.mxu0 0.0
    %2269 = vmatpush1.msra.mxu0 0.0
    %2270 = vmatprep.subr.mxu0 0.0
    %2271 = vmatpush1.msra.mxu0 0.0
    %2272 = vmatprep.subr.mxu0 0.0
    %2273 = vmatpush1.msra.mxu0 0.0
    %2274 = vmatprep.mubr.f32.mxu0 0.0
    %2275 = vmatmul.mubr.f32.gmra.mrb[0].mxu0 %v2013
    %v2276 = vpop.f32.mrb[0].mxu0
    %v2277 = vadd.f32 0.0, %v2276
    %v2278 = vpop.f32.mrb[0].mxu0
    %v2279 = vadd.f32 0.0, %v2278
    %2280 = vdwg.mxu0
    %2281 = vmatprep.subr.mxu0 %v137
    %2282 = vmatpush1.msra.mxu0 %v136
    %2283 = vmatprep.subr.mxu0 %v141
    %2284 = vmatpush1.msra.mxu0 %v140
    %2285 = vmatprep.subr.mxu0 %v145
    %2286 = vmatpush1.msra.mxu0 %v144
    %2287 = vmatprep.subr.mxu0 %v149
    %2288 = vmatpush1.msra.mxu0 %v148
    %2289 = vmatprep.subr.mxu0 %v153
    %2290 = vmatpush1.msra.mxu0 %v152
    %2291 = vmatprep.subr.mxu0 %v157
    %2292 = vmatpush1.msra.mxu0 %v156
    %2293 = vmatprep.subr.mxu0 %v161
    %2294 = vmatpush1.msra.mxu0 %v160
    %2295 = vmatprep.subr.mxu0 %v165
    %2296 = vmatpush1.msra.mxu0 %v164
    %2297 = vmatprep.subr.mxu0 %v169
    %2298 = vmatpush1.msra.mxu0 %v168
    %2299 = vmatprep.subr.mxu0 %v173
    %2300 = vmatpush1.msra.mxu0 %v172
    %2301 = vmatprep.subr.mxu0 %v177
    %2302 = vmatpush1.msra.mxu0 %v176
    %2303 = vmatprep.subr.mxu0 %v181
    %2304 = vmatpush1.msra.mxu0 %v180
    %2305 = vmatprep.subr.mxu0 %v185
    %2306 = vmatpush1.msra.mxu0 %v184
    %2307 = vmatprep.subr.mxu0 %v189
    %2308 = vmatpush1.msra.mxu0 %v188
    %2309 = vmatprep.subr.mxu0 %v193
    %2310 = vmatpush1.msra.mxu0 %v192
    %2311 = vmatprep.subr.mxu0 %v197
    %2312 = vmatpush1.msra.mxu0 %v196
    %2313 = vmatprep.subr.mxu0 0.0
    %2314 = vmatpush1.msra.mxu0 0.0
    %2315 = vmatprep.subr.mxu0 0.0
    %2316 = vmatpush1.msra.mxu0 0.0
    %2317 = vmatprep.subr.mxu0 0.0
    %2318 = vmatpush1.msra.mxu0 0.0
    %2319 = vmatprep.subr.mxu0 0.0
    %2320 = vmatpush1.msra.mxu0 0.0
    %2321 = vmatprep.subr.mxu0 0.0
    %2322 = vmatpush1.msra.mxu0 0.0
    %2323 = vmatprep.subr.mxu0 0.0
    %2324 = vmatpush1.msra.mxu0 0.0
    %2325 = vmatprep.subr.mxu0 0.0
    %2326 = vmatpush1.msra.mxu0 0.0
    %2327 = vmatprep.subr.mxu0 0.0
    %2328 = vmatpush1.msra.mxu0 0.0
    %2329 = vmatprep.subr.mxu0 0.0
    %2330 = vmatpush1.msra.mxu0 0.0
    %2331 = vmatprep.subr.mxu0 0.0
    %2332 = vmatpush1.msra.mxu0 0.0
    %2333 = vmatprep.subr.mxu0 0.0
    %2334 = vmatpush1.msra.mxu0 0.0
    %2335 = vmatprep.subr.mxu0 0.0
    %2336 = vmatpush1.msra.mxu0 0.0
    %2337 = vmatprep.subr.mxu0 0.0
    %2338 = vmatpush1.msra.mxu0 0.0
    %2339 = vmatprep.subr.mxu0 0.0
    %2340 = vmatpush1.msra.mxu0 0.0
    %2341 = vmatprep.subr.mxu0 0.0
    %2342 = vmatpush1.msra.mxu0 0.0
    %2343 = vmatprep.subr.mxu0 0.0
    %2344 = vmatpush1.msra.mxu0 0.0
    %2345 = vmatprep.mubr.f32.mxu0 0.0
    %2346 = vmatmul.mubr.f32.gmra.mrb[0].mxu0 %v2013
    %v2347 = vpop.f32.mrb[0].mxu0
    %v2348 = vadd.f32 0.0, %v2347
    %v2349 = vpop.f32.mrb[0].mxu0
    %v2350 = vadd.f32 0.0, %v2349
    %2351 = vdwg.mxu0
    %v2352 = vadd.f32 %v2026, %v2277
    %v2353 = vadd.f32 %v2027, %v2279
    %v2354 = vadd.f32 %v2028, %v2348
    %v2355 = vadd.f32 %v2029, %v2350
    %v2356 = vmul.f32 %v2352, 0.5
    %v2357 = vmul.f32 %v2353, 0.5
    %v2358 = vtanh.pop %v2356
    %v2359 = vtanh.pop %v2357
    %v2360 = vmul.f32 %v2358, 0.5
    %v2361 = vmul.f32 %v2359, 0.5
    %v2362 = vadd.f32 %v2360, 0.5
    %v2363 = vadd.f32 %v2361, 0.5
    %v2364 = vtanh.pop %v2354
    %v2365 = vmul.f32 %v2355, 0.5
    %v2366 = vtanh.pop %v2365
    %v2367 = vmul.f32 %v2366, 0.5
    %v2368 = vadd.f32 %v2367, 0.5
    %v2369 = vmul.f32 %v2363, %v2016
    %v2370 = vmul.f32 %v2362, %v2364
    %v2371 = vadd.f32 %v2369, %v2370
    %v2372 = vtanh.pop %v2371
    %v2373 = vmul.f32 %v2368, %v2372
    %v2374 = vsub.f32 %v2373, %v2013
    %v2375 = vmul.f32 %v2203, %v2374
    %v2376 = vadd.f32 %v2013, %v2375
    %v2377 = vsub.f32 %v2371, %v2016
    %v2378 = vmul.f32 %v2203, %v2377
    %v2379 = vadd.f32 %v2016, %v2378
    %s2380 = scalar_lea.vmem %s50, 192
    %v2381 = vld [vmem:[%s2380] sm:$0xff]
    %v2382 = vld [vmem:[%s2380 + $0x8] sm:$0xff]
    %v2383 = vld [vmem:[%s2380 + $0x10] sm:$0xff]
    %v2384 = vld [vmem:[%s2380 + $0x18] sm:$0xff]
    %v2385 = vunpack.c.l.bf16 %v2381
    %v2386 = vunpack.c.h.bf16 %v2381
    %v2387 = vunpack.c.l.bf16 %v2382
    %v2388 = vunpack.c.h.bf16 %v2382
    %v2389 = vunpack.c.l.bf16 %v2383
    %v2390 = vunpack.c.h.bf16 %v2383
    %v2391 = vunpack.c.l.bf16 %v2384
    %v2392 = vunpack.c.h.bf16 %v2384
    %s2393 = sadd.s32 %s199, 6
    %v2394 = vstv %s2393
    %vm2395 = vcmp.lt.s32.totalorder %v2394, %v198
    %v2396 = vsel %vm2395, 1, 0
    %v2397 = vcvt.s32.f32 %v2396
    %2398 = vmatprep.subr.mxu0 %v70
    %2399 = vmatpush1.msra.mxu0 %v69
    %2400 = vmatprep.subr.mxu0 %v74
    %2401 = vmatpush1.msra.mxu0 %v73
    %2402 = vmatprep.subr.mxu0 %v78
    %2403 = vmatpush1.msra.mxu0 %v77
    %2404 = vmatprep.subr.mxu0 %v82
    %2405 = vmatpush1.msra.mxu0 %v81
    %2406 = vmatprep.subr.mxu0 %v86
    %2407 = vmatpush1.msra.mxu0 %v85
    %2408 = vmatprep.subr.mxu0 %v90
    %2409 = vmatpush1.msra.mxu0 %v89
    %2410 = vmatprep.subr.mxu0 %v94
    %2411 = vmatpush1.msra.mxu0 %v93
    %2412 = vmatprep.subr.mxu0 %v98
    %2413 = vmatpush1.msra.mxu0 %v97
    %2414 = vmatprep.subr.mxu0 %v102
    %2415 = vmatpush1.msra.mxu0 %v101
    %2416 = vmatprep.subr.mxu0 %v106
    %2417 = vmatpush1.msra.mxu0 %v105
    %2418 = vmatprep.subr.mxu0 %v110
    %2419 = vmatpush1.msra.mxu0 %v109
    %2420 = vmatprep.subr.mxu0 %v114
    %2421 = vmatpush1.msra.mxu0 %v113
    %2422 = vmatprep.subr.mxu0 %v118
    %2423 = vmatpush1.msra.mxu0 %v117
    %2424 = vmatprep.subr.mxu0 %v122
    %2425 = vmatpush1.msra.mxu0 %v121
    %2426 = vmatprep.subr.mxu0 %v126
    %2427 = vmatpush1.msra.mxu0 %v125
    %2428 = vmatprep.subr.mxu0 %v130
    %2429 = vmatpush1.msra.mxu0 %v129
    %2430 = vmatprep.subr.mxu0 0.0
    %2431 = vmatpush1.msra.mxu0 0.0
    %2432 = vmatprep.subr.mxu0 0.0
    %2433 = vmatpush1.msra.mxu0 0.0
    %2434 = vmatprep.subr.mxu0 0.0
    %2435 = vmatpush1.msra.mxu0 0.0
    %2436 = vmatprep.subr.mxu0 0.0
    %2437 = vmatpush1.msra.mxu0 0.0
    %2438 = vmatprep.subr.mxu0 0.0
    %2439 = vmatpush1.msra.mxu0 0.0
    %2440 = vmatprep.subr.mxu0 0.0
    %2441 = vmatpush1.msra.mxu0 0.0
    %2442 = vmatprep.subr.mxu0 0.0
    %2443 = vmatpush1.msra.mxu0 0.0
    %2444 = vmatprep.subr.mxu0 0.0
    %2445 = vmatpush1.msra.mxu0 0.0
    %2446 = vmatprep.subr.mxu0 0.0
    %2447 = vmatpush1.msra.mxu0 0.0
    %2448 = vmatprep.subr.mxu0 0.0
    %2449 = vmatpush1.msra.mxu0 0.0
    %2450 = vmatprep.subr.mxu0 0.0
    %2451 = vmatpush1.msra.mxu0 0.0
    %2452 = vmatprep.subr.mxu0 0.0
    %2453 = vmatpush1.msra.mxu0 0.0
    %2454 = vmatprep.subr.mxu0 0.0
    %2455 = vmatpush1.msra.mxu0 0.0
    %2456 = vmatprep.subr.mxu0 0.0
    %2457 = vmatpush1.msra.mxu0 0.0
    %2458 = vmatprep.subr.mxu0 0.0
    %2459 = vmatpush1.msra.mxu0 0.0
    %2460 = vmatprep.subr.mxu0 0.0
    %2461 = vmatpush1.msra.mxu0 0.0
    %2462 = vmatprep.mubr.f32.mxu0 0.0
    %2463 = vmatmul.mubr.f32.gmra.mrb[0].mxu0 %v2206
    %v2464 = vpop.f32.mrb[0].mxu0
    %v2465 = vadd.f32 0.0, %v2464
    %v2466 = vpop.f32.mrb[0].mxu0
    %v2467 = vadd.f32 0.0, %v2466
    %2468 = vdwg.mxu0
    %2469 = vmatprep.subr.mxu0 %v72
    %2470 = vmatpush1.msra.mxu0 %v71
    %2471 = vmatprep.subr.mxu0 %v76
    %2472 = vmatpush1.msra.mxu0 %v75
    %2473 = vmatprep.subr.mxu0 %v80
    %2474 = vmatpush1.msra.mxu0 %v79
    %2475 = vmatprep.subr.mxu0 %v84
    %2476 = vmatpush1.msra.mxu0 %v83
    %2477 = vmatprep.subr.mxu0 %v88
    %2478 = vmatpush1.msra.mxu0 %v87
    %2479 = vmatprep.subr.mxu0 %v92
    %2480 = vmatpush1.msra.mxu0 %v91
    %2481 = vmatprep.subr.mxu0 %v96
    %2482 = vmatpush1.msra.mxu0 %v95
    %2483 = vmatprep.subr.mxu0 %v100
    %2484 = vmatpush1.msra.mxu0 %v99
    %2485 = vmatprep.subr.mxu0 %v104
    %2486 = vmatpush1.msra.mxu0 %v103
    %2487 = vmatprep.subr.mxu0 %v108
    %2488 = vmatpush1.msra.mxu0 %v107
    %2489 = vmatprep.subr.mxu0 %v112
    %2490 = vmatpush1.msra.mxu0 %v111
    %2491 = vmatprep.subr.mxu0 %v116
    %2492 = vmatpush1.msra.mxu0 %v115
    %2493 = vmatprep.subr.mxu0 %v120
    %2494 = vmatpush1.msra.mxu0 %v119
    %2495 = vmatprep.subr.mxu0 %v124
    %2496 = vmatpush1.msra.mxu0 %v123
    %2497 = vmatprep.subr.mxu0 %v128
    %2498 = vmatpush1.msra.mxu0 %v127
    %2499 = vmatprep.subr.mxu0 %v132
    %2500 = vmatpush1.msra.mxu0 %v131
    %2501 = vmatprep.subr.mxu0 0.0
    %2502 = vmatpush1.msra.mxu0 0.0
    %2503 = vmatprep.subr.mxu0 0.0
    %2504 = vmatpush1.msra.mxu0 0.0
    %2505 = vmatprep.subr.mxu0 0.0
    %2506 = vmatpush1.msra.mxu0 0.0
    %2507 = vmatprep.subr.mxu0 0.0
    %2508 = vmatpush1.msra.mxu0 0.0
    %2509 = vmatprep.subr.mxu0 0.0
    %2510 = vmatpush1.msra.mxu0 0.0
    %2511 = vmatprep.subr.mxu0 0.0
    %2512 = vmatpush1.msra.mxu0 0.0
    %2513 = vmatprep.subr.mxu0 0.0
    %2514 = vmatpush1.msra.mxu0 0.0
    %2515 = vmatprep.subr.mxu0 0.0
    %2516 = vmatpush1.msra.mxu0 0.0
    %2517 = vmatprep.subr.mxu0 0.0
    %2518 = vmatpush1.msra.mxu0 0.0
    %2519 = vmatprep.subr.mxu0 0.0
    %2520 = vmatpush1.msra.mxu0 0.0
    %2521 = vmatprep.subr.mxu0 0.0
    %2522 = vmatpush1.msra.mxu0 0.0
    %2523 = vmatprep.subr.mxu0 0.0
    %2524 = vmatpush1.msra.mxu0 0.0
    %2525 = vmatprep.subr.mxu0 0.0
    %2526 = vmatpush1.msra.mxu0 0.0
    %2527 = vmatprep.subr.mxu0 0.0
    %2528 = vmatpush1.msra.mxu0 0.0
    %2529 = vmatprep.subr.mxu0 0.0
    %2530 = vmatpush1.msra.mxu0 0.0
    %2531 = vmatprep.subr.mxu0 0.0
    %2532 = vmatpush1.msra.mxu0 0.0
    %2533 = vmatprep.mubr.f32.mxu0 0.0
    %2534 = vmatmul.mubr.f32.gmra.mrb[0].mxu0 %v2206
    %v2535 = vpop.f32.mrb[0].mxu0
    %v2536 = vadd.f32 0.0, %v2535
    %v2537 = vpop.f32.mrb[0].mxu0
    %v2538 = vadd.f32 0.0, %v2537
    %2539 = vdwg.mxu0
    %v2540 = vadd.f32 %v2385, %v2465
    %v2541 = vadd.f32 %v2386, %v2467
    %v2542 = vadd.f32 %v2387, %v2536
    %v2543 = vadd.f32 %v2388, %v2538
    %v2544 = vmul.f32 %v2540, 0.5
    %v2545 = vmul.f32 %v2541, 0.5
    %v2546 = vtanh.pop %v2544
    %v2547 = vtanh.pop %v2545
    %v2548 = vmul.f32 %v2546, 0.5
    %v2549 = vmul.f32 %v2547, 0.5
    %v2550 = vadd.f32 %v2548, 0.5
    %v2551 = vadd.f32 %v2549, 0.5
    %v2552 = vtanh.pop %v2542
    %v2553 = vmul.f32 %v2543, 0.5
    %v2554 = vtanh.pop %v2553
    %v2555 = vmul.f32 %v2554, 0.5
    %v2556 = vadd.f32 %v2555, 0.5
    %v2557 = vmul.f32 %v2551, %v2209
    %v2558 = vmul.f32 %v2550, %v2552
    %v2559 = vadd.f32 %v2557, %v2558
    %v2560 = vtanh.pop %v2559
    %v2561 = vmul.f32 %v2556, %v2560
    %v2562 = vsub.f32 %v2561, %v2206
    %2564 = vset.pattern.permute.xlu0 0
    %2565 = vperm.xlu0 %2564, %v2397
    %v2566 = vpop.permute.xlu0 %2565
    %v2568 = vmul.f32 %v2566, %v2562
    %v2569 = vadd.f32 %v2206, %v2568
    %v2570 = vsub.f32 %v2559, %v2209
    %v2571 = vmul.f32 %v2566, %v2570
    %v2572 = vadd.f32 %v2209, %v2571
    %2573 = vmatprep.subr.mxu0 %v135
    %2574 = vmatpush1.msra.mxu0 %v134
    %2575 = vmatprep.subr.mxu0 %v139
    %2576 = vmatpush1.msra.mxu0 %v138
    %2577 = vmatprep.subr.mxu0 %v143
    %2578 = vmatpush1.msra.mxu0 %v142
    %2579 = vmatprep.subr.mxu0 %v147
    %2580 = vmatpush1.msra.mxu0 %v146
    %2581 = vmatprep.subr.mxu0 %v151
    %2582 = vmatpush1.msra.mxu0 %v150
    %2583 = vmatprep.subr.mxu0 %v155
    %2584 = vmatpush1.msra.mxu0 %v154
    %2585 = vmatprep.subr.mxu0 %v159
    %2586 = vmatpush1.msra.mxu0 %v158
    %2587 = vmatprep.subr.mxu0 %v163
    %2588 = vmatpush1.msra.mxu0 %v162
    %2589 = vmatprep.subr.mxu0 %v167
    %2590 = vmatpush1.msra.mxu0 %v166
    %2591 = vmatprep.subr.mxu0 %v171
    %2592 = vmatpush1.msra.mxu0 %v170
    %2593 = vmatprep.subr.mxu0 %v175
    %2594 = vmatpush1.msra.mxu0 %v174
    %2595 = vmatprep.subr.mxu0 %v179
    %2596 = vmatpush1.msra.mxu0 %v178
    %2597 = vmatprep.subr.mxu0 %v183
    %2598 = vmatpush1.msra.mxu0 %v182
    %2599 = vmatprep.subr.mxu0 %v187
    %2600 = vmatpush1.msra.mxu0 %v186
    %2601 = vmatprep.subr.mxu0 %v191
    %2602 = vmatpush1.msra.mxu0 %v190
    %2603 = vmatprep.subr.mxu0 %v195
    %2604 = vmatpush1.msra.mxu0 %v194
    %2605 = vmatprep.subr.mxu0 0.0
    %2606 = vmatpush1.msra.mxu0 0.0
    %2607 = vmatprep.subr.mxu0 0.0
    %2608 = vmatpush1.msra.mxu0 0.0
    %2609 = vmatprep.subr.mxu0 0.0
    %2610 = vmatpush1.msra.mxu0 0.0
    %2611 = vmatprep.subr.mxu0 0.0
    %2612 = vmatpush1.msra.mxu0 0.0
    %2613 = vmatprep.subr.mxu0 0.0
    %2614 = vmatpush1.msra.mxu0 0.0
    %2615 = vmatprep.subr.mxu0 0.0
    %2616 = vmatpush1.msra.mxu0 0.0
    %2617 = vmatprep.subr.mxu0 0.0
    %2618 = vmatpush1.msra.mxu0 0.0
    %2619 = vmatprep.subr.mxu0 0.0
    %2620 = vmatpush1.msra.mxu0 0.0
    %2621 = vmatprep.subr.mxu0 0.0
    %2622 = vmatpush1.msra.mxu0 0.0
    %2623 = vmatprep.subr.mxu0 0.0
    %2624 = vmatpush1.msra.mxu0 0.0
    %2625 = vmatprep.subr.mxu0 0.0
    %2626 = vmatpush1.msra.mxu0 0.0
    %2627 = vmatprep.subr.mxu0 0.0
    %2628 = vmatpush1.msra.mxu0 0.0
    %2629 = vmatprep.subr.mxu0 0.0
    %2630 = vmatpush1.msra.mxu0 0.0
    %2631 = vmatprep.subr.mxu0 0.0
    %2632 = vmatpush1.msra.mxu0 0.0
    %2633 = vmatprep.subr.mxu0 0.0
    %2634 = vmatpush1.msra.mxu0 0.0
    %2635 = vmatprep.subr.mxu0 0.0
    %2636 = vmatpush1.msra.mxu0 0.0
    %2637 = vmatprep.mubr.f32.mxu0 0.0
    %2638 = vmatmul.mubr.f32.gmra.mrb[0].mxu0 %v2376
    %v2639 = vpop.f32.mrb[0].mxu0
    %v2640 = vadd.f32 0.0, %v2639
    %v2641 = vpop.f32.mrb[0].mxu0
    %v2642 = vadd.f32 0.0, %v2641
    %2643 = vdwg.mxu0
    %2644 = vmatprep.subr.mxu0 %v137
    %2645 = vmatpush1.msra.mxu0 %v136
    %2646 = vmatprep.subr.mxu0 %v141
    %2647 = vmatpush1.msra.mxu0 %v140
    %2648 = vmatprep.subr.mxu0 %v145
    %2649 = vmatpush1.msra.mxu0 %v144
    %2650 = vmatprep.subr.mxu0 %v149
    %2651 = vmatpush1.msra.mxu0 %v148
    %2652 = vmatprep.subr.mxu0 %v153
    %2653 = vmatpush1.msra.mxu0 %v152
    %2654 = vmatprep.subr.mxu0 %v157
    %2655 = vmatpush1.msra.mxu0 %v156
    %2656 = vmatprep.subr.mxu0 %v161
    %2657 = vmatpush1.msra.mxu0 %v160
    %2658 = vmatprep.subr.mxu0 %v165
    %2659 = vmatpush1.msra.mxu0 %v164
    %2660 = vmatprep.subr.mxu0 %v169
    %2661 = vmatpush1.msra.mxu0 %v168
    %2662 = vmatprep.subr.mxu0 %v173
    %2663 = vmatpush1.msra.mxu0 %v172
    %2664 = vmatprep.subr.mxu0 %v177
    %2665 = vmatpush1.msra.mxu0 %v176
    %2666 = vmatprep.subr.mxu0 %v181
    %2667 = vmatpush1.msra.mxu0 %v180
    %2668 = vmatprep.subr.mxu0 %v185
    %2669 = vmatpush1.msra.mxu0 %v184
    %2670 = vmatprep.subr.mxu0 %v189
    %2671 = vmatpush1.msra.mxu0 %v188
    %2672 = vmatprep.subr.mxu0 %v193
    %2673 = vmatpush1.msra.mxu0 %v192
    %2674 = vmatprep.subr.mxu0 %v197
    %2675 = vmatpush1.msra.mxu0 %v196
    %2676 = vmatprep.subr.mxu0 0.0
    %2677 = vmatpush1.msra.mxu0 0.0
    %2678 = vmatprep.subr.mxu0 0.0
    %2679 = vmatpush1.msra.mxu0 0.0
    %2680 = vmatprep.subr.mxu0 0.0
    %2681 = vmatpush1.msra.mxu0 0.0
    %2682 = vmatprep.subr.mxu0 0.0
    %2683 = vmatpush1.msra.mxu0 0.0
    %2684 = vmatprep.subr.mxu0 0.0
    %2685 = vmatpush1.msra.mxu0 0.0
    %2686 = vmatprep.subr.mxu0 0.0
    %2687 = vmatpush1.msra.mxu0 0.0
    %2688 = vmatprep.subr.mxu0 0.0
    %2689 = vmatpush1.msra.mxu0 0.0
    %2690 = vmatprep.subr.mxu0 0.0
    %2691 = vmatpush1.msra.mxu0 0.0
    %2692 = vmatprep.subr.mxu0 0.0
    %2693 = vmatpush1.msra.mxu0 0.0
    %2694 = vmatprep.subr.mxu0 0.0
    %2695 = vmatpush1.msra.mxu0 0.0
    %2696 = vmatprep.subr.mxu0 0.0
    %2697 = vmatpush1.msra.mxu0 0.0
    %2698 = vmatprep.subr.mxu0 0.0
    %2699 = vmatpush1.msra.mxu0 0.0
    %2700 = vmatprep.subr.mxu0 0.0
    %2701 = vmatpush1.msra.mxu0 0.0
    %2702 = vmatprep.subr.mxu0 0.0
    %2703 = vmatpush1.msra.mxu0 0.0
    %2704 = vmatprep.subr.mxu0 0.0
    %2705 = vmatpush1.msra.mxu0 0.0
    %2706 = vmatprep.subr.mxu0 0.0
    %2707 = vmatpush1.msra.mxu0 0.0
    %2708 = vmatprep.mubr.f32.mxu0 0.0
    %2709 = vmatmul.mubr.f32.gmra.mrb[0].mxu0 %v2376
    %v2710 = vpop.f32.mrb[0].mxu0
    %v2711 = vadd.f32 0.0, %v2710
    %v2712 = vpop.f32.mrb[0].mxu0
    %v2713 = vadd.f32 0.0, %v2712
    %2714 = vdwg.mxu0
    %v2715 = vadd.f32 %v2389, %v2640
    %v2716 = vadd.f32 %v2390, %v2642
    %v2717 = vadd.f32 %v2391, %v2711
    %v2718 = vadd.f32 %v2392, %v2713
    %v2719 = vmul.f32 %v2715, 0.5
    %v2720 = vmul.f32 %v2716, 0.5
    %v2721 = vtanh.pop %v2719
    %v2722 = vtanh.pop %v2720
    %v2723 = vmul.f32 %v2721, 0.5
    %v2724 = vmul.f32 %v2722, 0.5
    %v2725 = vadd.f32 %v2723, 0.5
    %v2726 = vadd.f32 %v2724, 0.5
    %v2727 = vtanh.pop %v2717
    %v2728 = vmul.f32 %v2718, 0.5
    %v2729 = vtanh.pop %v2728
    %v2730 = vmul.f32 %v2729, 0.5
    %v2731 = vadd.f32 %v2730, 0.5
    %v2732 = vmul.f32 %v2726, %v2379
    %v2733 = vmul.f32 %v2725, %v2727
    %v2734 = vadd.f32 %v2732, %v2733
    %v2735 = vtanh.pop %v2734
    %v2736 = vmul.f32 %v2731, %v2735
    %v2737 = vsub.f32 %v2736, %v2376
    %v2738 = vmul.f32 %v2566, %v2737
    %v2739 = vadd.f32 %v2376, %v2738
    %v2740 = vsub.f32 %v2734, %v2379
    %v2741 = vmul.f32 %v2566, %v2740
    %v2742 = vadd.f32 %v2379, %v2741
    %s2743 = scalar_lea.vmem %s50, 224
    %v2744 = vld [vmem:[%s2743] sm:$0xff]
    %v2745 = vld [vmem:[%s2743 + $0x8] sm:$0xff]
    %v2746 = vld [vmem:[%s2743 + $0x10] sm:$0xff]
    %v2747 = vld [vmem:[%s2743 + $0x18] sm:$0xff]
    %v2748 = vunpack.c.l.bf16 %v2744
    %v2749 = vunpack.c.h.bf16 %v2744
    %v2750 = vunpack.c.l.bf16 %v2745
    %v2751 = vunpack.c.h.bf16 %v2745
    %v2752 = vunpack.c.l.bf16 %v2746
    %v2753 = vunpack.c.h.bf16 %v2746
    %v2754 = vunpack.c.l.bf16 %v2747
    %v2755 = vunpack.c.h.bf16 %v2747
    %s2756 = sadd.s32 %s199, 7
    %v2757 = vstv %s2756
    %vm2758 = vcmp.lt.s32.totalorder %v2757, %v198
    %v2759 = vsel %vm2758, 1, 0
    %v2760 = vcvt.s32.f32 %v2759
    %2761 = vmatprep.subr.mxu0 %v70
    %2762 = vmatpush1.msra.mxu0 %v69
    %2763 = vmatprep.subr.mxu0 %v74
    %2764 = vmatpush1.msra.mxu0 %v73
    %2765 = vmatprep.subr.mxu0 %v78
    %2766 = vmatpush1.msra.mxu0 %v77
    %2767 = vmatprep.subr.mxu0 %v82
    %2768 = vmatpush1.msra.mxu0 %v81
    %2769 = vmatprep.subr.mxu0 %v86
    %2770 = vmatpush1.msra.mxu0 %v85
    %2771 = vmatprep.subr.mxu0 %v90
    %2772 = vmatpush1.msra.mxu0 %v89
    %2773 = vmatprep.subr.mxu0 %v94
    %2774 = vmatpush1.msra.mxu0 %v93
    %2775 = vmatprep.subr.mxu0 %v98
    %2776 = vmatpush1.msra.mxu0 %v97
    %2777 = vmatprep.subr.mxu0 %v102
    %2778 = vmatpush1.msra.mxu0 %v101
    %2779 = vmatprep.subr.mxu0 %v106
    %2780 = vmatpush1.msra.mxu0 %v105
    %2781 = vmatprep.subr.mxu0 %v110
    %2782 = vmatpush1.msra.mxu0 %v109
    %2783 = vmatprep.subr.mxu0 %v114
    %2784 = vmatpush1.msra.mxu0 %v113
    %2785 = vmatprep.subr.mxu0 %v118
    %2786 = vmatpush1.msra.mxu0 %v117
    %2787 = vmatprep.subr.mxu0 %v122
    %2788 = vmatpush1.msra.mxu0 %v121
    %2789 = vmatprep.subr.mxu0 %v126
    %2790 = vmatpush1.msra.mxu0 %v125
    %2791 = vmatprep.subr.mxu0 %v130
    %2792 = vmatpush1.msra.mxu0 %v129
    %2793 = vmatprep.subr.mxu0 0.0
    %2794 = vmatpush1.msra.mxu0 0.0
    %2795 = vmatprep.subr.mxu0 0.0
    %2796 = vmatpush1.msra.mxu0 0.0
    %2797 = vmatprep.subr.mxu0 0.0
    %2798 = vmatpush1.msra.mxu0 0.0
    %2799 = vmatprep.subr.mxu0 0.0
    %2800 = vmatpush1.msra.mxu0 0.0
    %2801 = vmatprep.subr.mxu0 0.0
    %2802 = vmatpush1.msra.mxu0 0.0
    %2803 = vmatprep.subr.mxu0 0.0
    %2804 = vmatpush1.msra.mxu0 0.0
    %2805 = vmatprep.subr.mxu0 0.0
    %2806 = vmatpush1.msra.mxu0 0.0
    %2807 = vmatprep.subr.mxu0 0.0
    %2808 = vmatpush1.msra.mxu0 0.0
    %2809 = vmatprep.subr.mxu0 0.0
    %2810 = vmatpush1.msra.mxu0 0.0
    %2811 = vmatprep.subr.mxu0 0.0
    %2812 = vmatpush1.msra.mxu0 0.0
    %2813 = vmatprep.subr.mxu0 0.0
    %2814 = vmatpush1.msra.mxu0 0.0
    %2815 = vmatprep.subr.mxu0 0.0
    %2816 = vmatpush1.msra.mxu0 0.0
    %2817 = vmatprep.subr.mxu0 0.0
    %2818 = vmatpush1.msra.mxu0 0.0
    %2819 = vmatprep.subr.mxu0 0.0
    %2820 = vmatpush1.msra.mxu0 0.0
    %2821 = vmatprep.subr.mxu0 0.0
    %2822 = vmatpush1.msra.mxu0 0.0
    %2823 = vmatprep.subr.mxu0 0.0
    %2824 = vmatpush1.msra.mxu0 0.0
    %2825 = vmatprep.mubr.f32.mxu0 0.0
    %2826 = vmatmul.mubr.f32.gmra.mrb[0].mxu0 %v2569
    %v2827 = vpop.f32.mrb[0].mxu0
    %v2828 = vadd.f32 0.0, %v2827
    %v2829 = vpop.f32.mrb[0].mxu0
    %v2830 = vadd.f32 0.0, %v2829
    %2831 = vdwg.mxu0
    %2832 = vmatprep.subr.mxu0 %v72
    %2833 = vmatpush1.msra.mxu0 %v71
    %2834 = vmatprep.subr.mxu0 %v76
    %2835 = vmatpush1.msra.mxu0 %v75
    %2836 = vmatprep.subr.mxu0 %v80
    %2837 = vmatpush1.msra.mxu0 %v79
    %2838 = vmatprep.subr.mxu0 %v84
    %2839 = vmatpush1.msra.mxu0 %v83
    %2840 = vmatprep.subr.mxu0 %v88
    %2841 = vmatpush1.msra.mxu0 %v87
    %2842 = vmatprep.subr.mxu0 %v92
    %2843 = vmatpush1.msra.mxu0 %v91
    %2844 = vmatprep.subr.mxu0 %v96
    %2845 = vmatpush1.msra.mxu0 %v95
    %2846 = vmatprep.subr.mxu0 %v100
    %2847 = vmatpush1.msra.mxu0 %v99
    %2848 = vmatprep.subr.mxu0 %v104
    %2849 = vmatpush1.msra.mxu0 %v103
    %2850 = vmatprep.subr.mxu0 %v108
    %2851 = vmatpush1.msra.mxu0 %v107
    %2852 = vmatprep.subr.mxu0 %v112
    %2853 = vmatpush1.msra.mxu0 %v111
    %2854 = vmatprep.subr.mxu0 %v116
    %2855 = vmatpush1.msra.mxu0 %v115
    %2856 = vmatprep.subr.mxu0 %v120
    %2857 = vmatpush1.msra.mxu0 %v119
    %2858 = vmatprep.subr.mxu0 %v124
    %2859 = vmatpush1.msra.mxu0 %v123
    %2860 = vmatprep.subr.mxu0 %v128
    %2861 = vmatpush1.msra.mxu0 %v127
    %2862 = vmatprep.subr.mxu0 %v132
    %2863 = vmatpush1.msra.mxu0 %v131
    %2864 = vmatprep.subr.mxu0 0.0
    %2865 = vmatpush1.msra.mxu0 0.0
    %2866 = vmatprep.subr.mxu0 0.0
    %2867 = vmatpush1.msra.mxu0 0.0
    %2868 = vmatprep.subr.mxu0 0.0
    %2869 = vmatpush1.msra.mxu0 0.0
    %2870 = vmatprep.subr.mxu0 0.0
    %2871 = vmatpush1.msra.mxu0 0.0
    %2872 = vmatprep.subr.mxu0 0.0
    %2873 = vmatpush1.msra.mxu0 0.0
    %2874 = vmatprep.subr.mxu0 0.0
    %2875 = vmatpush1.msra.mxu0 0.0
    %2876 = vmatprep.subr.mxu0 0.0
    %2877 = vmatpush1.msra.mxu0 0.0
    %2878 = vmatprep.subr.mxu0 0.0
    %2879 = vmatpush1.msra.mxu0 0.0
    %2880 = vmatprep.subr.mxu0 0.0
    %2881 = vmatpush1.msra.mxu0 0.0
    %2882 = vmatprep.subr.mxu0 0.0
    %2883 = vmatpush1.msra.mxu0 0.0
    %2884 = vmatprep.subr.mxu0 0.0
    %2885 = vmatpush1.msra.mxu0 0.0
    %2886 = vmatprep.subr.mxu0 0.0
    %2887 = vmatpush1.msra.mxu0 0.0
    %2888 = vmatprep.subr.mxu0 0.0
    %2889 = vmatpush1.msra.mxu0 0.0
    %2890 = vmatprep.subr.mxu0 0.0
    %2891 = vmatpush1.msra.mxu0 0.0
    %2892 = vmatprep.subr.mxu0 0.0
    %2893 = vmatpush1.msra.mxu0 0.0
    %2894 = vmatprep.subr.mxu0 0.0
    %2895 = vmatpush1.msra.mxu0 0.0
    %2896 = vmatprep.mubr.f32.mxu0 0.0
    %2897 = vmatmul.mubr.f32.gmra.mrb[0].mxu0 %v2569
    %v2898 = vpop.f32.mrb[0].mxu0
    %v2899 = vadd.f32 0.0, %v2898
    %v2900 = vpop.f32.mrb[0].mxu0
    %v2901 = vadd.f32 0.0, %v2900
    %2902 = vdwg.mxu0
    %v2903 = vadd.f32 %v2748, %v2828
    %v2904 = vadd.f32 %v2749, %v2830
    %v2905 = vadd.f32 %v2750, %v2899
    %v2906 = vadd.f32 %v2751, %v2901
    %v2907 = vmul.f32 %v2903, 0.5
    %v2908 = vmul.f32 %v2904, 0.5
    %v2909 = vtanh.pop %v2907
    %v2910 = vtanh.pop %v2908
    %v2911 = vmul.f32 %v2909, 0.5
    %v2912 = vmul.f32 %v2910, 0.5
    %v2913 = vadd.f32 %v2911, 0.5
    %v2914 = vadd.f32 %v2912, 0.5
    %v2915 = vtanh.pop %v2905
    %v2916 = vmul.f32 %v2906, 0.5
    %v2917 = vtanh.pop %v2916
    %v2918 = vmul.f32 %v2917, 0.5
    %v2919 = vadd.f32 %v2918, 0.5
    %v2920 = vmul.f32 %v2914, %v2572
    %v2921 = vmul.f32 %v2913, %v2915
    %v2922 = vadd.f32 %v2920, %v2921
    %v2923 = vtanh.pop %v2922
    %v2924 = vmul.f32 %v2919, %v2923
    %v2925 = vsub.f32 %v2924, %v2569
    %2927 = vset.pattern.permute.xlu0 0
    %2928 = vperm.xlu0 %2927, %v2760
    %v2929 = vpop.permute.xlu0 %2928
    %v2931 = vmul.f32 %v2929, %v2925
    %v2932 = vadd.f32 %v2569, %v2931
    %v2933 = vsub.f32 %v2922, %v2572
    %v2934 = vmul.f32 %v2929, %v2933
    %v2935 = vadd.f32 %v2572, %v2934
    %2936 = vmatprep.subr.mxu0 %v135
    %2937 = vmatpush1.msra.mxu0 %v134
    %2938 = vmatprep.subr.mxu0 %v139
    %2939 = vmatpush1.msra.mxu0 %v138
    %2940 = vmatprep.subr.mxu0 %v143
    %2941 = vmatpush1.msra.mxu0 %v142
    %2942 = vmatprep.subr.mxu0 %v147
    %2943 = vmatpush1.msra.mxu0 %v146
    %2944 = vmatprep.subr.mxu0 %v151
    %2945 = vmatpush1.msra.mxu0 %v150
    %2946 = vmatprep.subr.mxu0 %v155
    %2947 = vmatpush1.msra.mxu0 %v154
    %2948 = vmatprep.subr.mxu0 %v159
    %2949 = vmatpush1.msra.mxu0 %v158
    %2950 = vmatprep.subr.mxu0 %v163
    %2951 = vmatpush1.msra.mxu0 %v162
    %2952 = vmatprep.subr.mxu0 %v167
    %2953 = vmatpush1.msra.mxu0 %v166
    %2954 = vmatprep.subr.mxu0 %v171
    %2955 = vmatpush1.msra.mxu0 %v170
    %2956 = vmatprep.subr.mxu0 %v175
    %2957 = vmatpush1.msra.mxu0 %v174
    %2958 = vmatprep.subr.mxu0 %v179
    %2959 = vmatpush1.msra.mxu0 %v178
    %2960 = vmatprep.subr.mxu0 %v183
    %2961 = vmatpush1.msra.mxu0 %v182
    %2962 = vmatprep.subr.mxu0 %v187
    %2963 = vmatpush1.msra.mxu0 %v186
    %2964 = vmatprep.subr.mxu0 %v191
    %2965 = vmatpush1.msra.mxu0 %v190
    %2966 = vmatprep.subr.mxu0 %v195
    %2967 = vmatpush1.msra.mxu0 %v194
    %2968 = vmatprep.subr.mxu0 0.0
    %2969 = vmatpush1.msra.mxu0 0.0
    %2970 = vmatprep.subr.mxu0 0.0
    %2971 = vmatpush1.msra.mxu0 0.0
    %2972 = vmatprep.subr.mxu0 0.0
    %2973 = vmatpush1.msra.mxu0 0.0
    %2974 = vmatprep.subr.mxu0 0.0
    %2975 = vmatpush1.msra.mxu0 0.0
    %2976 = vmatprep.subr.mxu0 0.0
    %2977 = vmatpush1.msra.mxu0 0.0
    %2978 = vmatprep.subr.mxu0 0.0
    %2979 = vmatpush1.msra.mxu0 0.0
    %2980 = vmatprep.subr.mxu0 0.0
    %2981 = vmatpush1.msra.mxu0 0.0
    %2982 = vmatprep.subr.mxu0 0.0
    %2983 = vmatpush1.msra.mxu0 0.0
    %2984 = vmatprep.subr.mxu0 0.0
    %2985 = vmatpush1.msra.mxu0 0.0
    %2986 = vmatprep.subr.mxu0 0.0
    %2987 = vmatpush1.msra.mxu0 0.0
    %2988 = vmatprep.subr.mxu0 0.0
    %2989 = vmatpush1.msra.mxu0 0.0
    %2990 = vmatprep.subr.mxu0 0.0
    %2991 = vmatpush1.msra.mxu0 0.0
    %2992 = vmatprep.subr.mxu0 0.0
    %2993 = vmatpush1.msra.mxu0 0.0
    %2994 = vmatprep.subr.mxu0 0.0
    %2995 = vmatpush1.msra.mxu0 0.0
    %2996 = vmatprep.subr.mxu0 0.0
    %2997 = vmatpush1.msra.mxu0 0.0
    %2998 = vmatprep.subr.mxu0 0.0
    %2999 = vmatpush1.msra.mxu0 0.0
    %3000 = vmatprep.mubr.f32.mxu0 0.0
    %3001 = vmatmul.mubr.f32.gmra.mrb[0].mxu0 %v2739
    %v3002 = vpop.f32.mrb[0].mxu0
    %v3003 = vadd.f32 0.0, %v3002
    %v3004 = vpop.f32.mrb[0].mxu0
    %v3005 = vadd.f32 0.0, %v3004
    %3006 = vdwg.mxu0
    %3007 = vmatprep.subr.mxu0 %v137
    %3008 = vmatpush1.msra.mxu0 %v136
    %3009 = vmatprep.subr.mxu0 %v141
    %3010 = vmatpush1.msra.mxu0 %v140
    %3011 = vmatprep.subr.mxu0 %v145
    %3012 = vmatpush1.msra.mxu0 %v144
    %3013 = vmatprep.subr.mxu0 %v149
    %3014 = vmatpush1.msra.mxu0 %v148
    %3015 = vmatprep.subr.mxu0 %v153
    %3016 = vmatpush1.msra.mxu0 %v152
    %3017 = vmatprep.subr.mxu0 %v157
    %3018 = vmatpush1.msra.mxu0 %v156
    %3019 = vmatprep.subr.mxu0 %v161
    %3020 = vmatpush1.msra.mxu0 %v160
    %3021 = vmatprep.subr.mxu0 %v165
    %3022 = vmatpush1.msra.mxu0 %v164
    %3023 = vmatprep.subr.mxu0 %v169
    %3024 = vmatpush1.msra.mxu0 %v168
    %3025 = vmatprep.subr.mxu0 %v173
    %3026 = vmatpush1.msra.mxu0 %v172
    %3027 = vmatprep.subr.mxu0 %v177
    %3028 = vmatpush1.msra.mxu0 %v176
    %3029 = vmatprep.subr.mxu0 %v181
    %3030 = vmatpush1.msra.mxu0 %v180
    %3031 = vmatprep.subr.mxu0 %v185
    %3032 = vmatpush1.msra.mxu0 %v184
    %3033 = vmatprep.subr.mxu0 %v189
    %3034 = vmatpush1.msra.mxu0 %v188
    %3035 = vmatprep.subr.mxu0 %v193
    %3036 = vmatpush1.msra.mxu0 %v192
    %3037 = vmatprep.subr.mxu0 %v197
    %3038 = vmatpush1.msra.mxu0 %v196
    %3039 = vmatprep.subr.mxu0 0.0
    %3040 = vmatpush1.msra.mxu0 0.0
    %3041 = vmatprep.subr.mxu0 0.0
    %3042 = vmatpush1.msra.mxu0 0.0
    %3043 = vmatprep.subr.mxu0 0.0
    %3044 = vmatpush1.msra.mxu0 0.0
    %3045 = vmatprep.subr.mxu0 0.0
    %3046 = vmatpush1.msra.mxu0 0.0
    %3047 = vmatprep.subr.mxu0 0.0
    %3048 = vmatpush1.msra.mxu0 0.0
    %3049 = vmatprep.subr.mxu0 0.0
    %3050 = vmatpush1.msra.mxu0 0.0
    %3051 = vmatprep.subr.mxu0 0.0
    %3052 = vmatpush1.msra.mxu0 0.0
    %3053 = vmatprep.subr.mxu0 0.0
    %3054 = vmatpush1.msra.mxu0 0.0
    %3055 = vmatprep.subr.mxu0 0.0
    %3056 = vmatpush1.msra.mxu0 0.0
    %3057 = vmatprep.subr.mxu0 0.0
    %3058 = vmatpush1.msra.mxu0 0.0
    %3059 = vmatprep.subr.mxu0 0.0
    %3060 = vmatpush1.msra.mxu0 0.0
    %3061 = vmatprep.subr.mxu0 0.0
    %3062 = vmatpush1.msra.mxu0 0.0
    %3063 = vmatprep.subr.mxu0 0.0
    %3064 = vmatpush1.msra.mxu0 0.0
    %3065 = vmatprep.subr.mxu0 0.0
    %3066 = vmatpush1.msra.mxu0 0.0
    %3067 = vmatprep.subr.mxu0 0.0
    %3068 = vmatpush1.msra.mxu0 0.0
    %3069 = vmatprep.subr.mxu0 0.0
    %3070 = vmatpush1.msra.mxu0 0.0
    %3071 = vmatprep.mubr.f32.mxu0 0.0
    %3072 = vmatmul.mubr.f32.gmra.mrb[0].mxu0 %v2739
    %v3073 = vpop.f32.mrb[0].mxu0
    %v3074 = vadd.f32 0.0, %v3073
    %v3075 = vpop.f32.mrb[0].mxu0
    %v3076 = vadd.f32 0.0, %v3075
    %3077 = vdwg.mxu0
    %v3078 = vadd.f32 %v2752, %v3003
    %v3079 = vadd.f32 %v2753, %v3005
    %v3080 = vadd.f32 %v2754, %v3074
    %v3081 = vadd.f32 %v2755, %v3076
    %v3082 = vmul.f32 %v3078, 0.5
    %v3083 = vmul.f32 %v3079, 0.5
    %v3084 = vtanh.pop %v3082
    %v3085 = vtanh.pop %v3083
    %v3086 = vmul.f32 %v3084, 0.5
    %v3087 = vmul.f32 %v3085, 0.5
    %v3088 = vadd.f32 %v3086, 0.5
    %v3089 = vadd.f32 %v3087, 0.5
    %v3090 = vtanh.pop %v3080
    %v3091 = vmul.f32 %v3081, 0.5
    %v3092 = vtanh.pop %v3091
    %v3093 = vmul.f32 %v3092, 0.5
    %v3094 = vadd.f32 %v3093, 0.5
    %v3095 = vmul.f32 %v3089, %v2742
    %v3096 = vmul.f32 %v3088, %v3090
    %v3097 = vadd.f32 %v3095, %v3096
    %v3098 = vtanh.pop %v3097
    %v3099 = vmul.f32 %v3094, %v3098
    %v3100 = vsub.f32 %v3099, %v2739
    %v3101 = vmul.f32 %v2929, %v3100
    %v3102 = vadd.f32 %v2739, %v3101
    %v3103 = vsub.f32 %v3097, %v2742
    %v3104 = vmul.f32 %v2929, %v3103
    %v3105 = vadd.f32 %v2742, %v3104
    %3106 = vst [vmem:[#allocation2] sm:$0xff] %v2932
    %3107 = vst [vmem:[#allocation3] sm:$0xff] %v2935
    %3108 = vst [vmem:[#allocation4] sm:$0xff] %v3102
    %3109 = vst [vmem:[#allocation5] sm:$0xff] %v3105
  $region21: #{lstm_forward.1} parent=0 // pred_fallthru
    _
  // Predicated region
  $region22: #{lstm_forward.1} parent=0 // pred_check
    %p3110 = pneg %p56
  $region23: #{lstm_forward.1} parent=0 // pred_check_branch
    %3112 = sbr.rel (%p3110) target = $region25
  $region24: #{lstm_forward.1} parent=0 // pred_region
    %v3113 = vld [vmem:[#allocation2] sm:$0xff]
    %3114 = vst [vmem:[%s4] sm:$0xff] %v3113
    %v3115 = vld [vmem:[#allocation4] sm:$0xff]
    %s3116 = scalar_lea.vmem %s4, 8
    %3117 = vst [vmem:[%s3116] sm:$0xff] %v3115
  $region25: #{lstm_forward.1} parent=0 // pred_fallthru
    _
  // Predicated region
  $region26: #{lstm_forward.1} parent=0 // pred_check
    _
  $region27: #{lstm_forward.1} parent=0 // pred_check_branch
    %3119 = sbr.rel (0) target = $region29
  $region28: #{lstm_forward.1} parent=0 // pred_region
    _
  $region29: #{lstm_forward.1} parent=0 // pred_fallthru
    _
  // Predicated region
  $region30: #{lstm_forward.1} parent=0 // pred_check
    _
  $region31: #{lstm_forward.1} parent=0 // pred_check_branch
    %3121 = sbr.rel (0) target = $region33
  $region32: #{lstm_forward.1} parent=0 // pred_region
    _
  $region33: #{lstm_forward.1} parent=0 // pred_fallthru
    _

</llo_original>
